<compile_context>
chip_gen: v5e
topology: v5e:2x2
jax: 0.10.0
libtpu: 0.0.40
codegen_flags: <defaults>
</compile_context>

<pallas_src>
import numpy as np
import jax
import jax.numpy as jnp
from jax.experimental import pallas as pl
from jax.experimental.pallas import tpu as pltpu  # noqa: F401  (TPU backend assumed)

H = 64        # total hidden width of every hierarchical level (= down_ch // 2)
DOWN = 128    # self.down_ch


def _sigmoid(v):
    return 1.0 / (1.0 + jnp.exp(-v))


# ---------------------------------------------------------------------------
# The fused forward kernel (no grid: everything fits in VMEM with huge margin)
# ---------------------------------------------------------------------------
def _spectral_kernel(spec_ref, pre_wT_ref, pre_b_ref,
                     fw_wih_ref, fw_whh_ref, fw_b_ref, fw_cv_ref,
                     bw_wih_ref, bw_whh_ref, bw_b_ref, bw_cv_ref,
                     segs_ref,
                     att_a_ref, att_c_ref, att_w1_ref, att_ln_ref,
                     l_wih_ref, l_whh_ref, l_b_ref,
                     fc_wT_ref, fc_b_ref,
                     out_ref):
    def dot(a, b):
        return jnp.dot(a, b, preferred_element_type=jnp.float32)

    def lstm_level(xv, hv, cv, wih, whh, bias):
        # packed gate layout: [i | f | g | o], each H=64 wide, step-major inside each gate block
        g = dot(xv, wih) + dot(hv, whh) + bias
        i = _sigmoid(g[:, 0 * H:1 * H])
        f = _sigmoid(g[:, 1 * H:2 * H])
        gg = jnp.tanh(g[:, 2 * H:3 * H])
        o = _sigmoid(g[:, 3 * H:4 * H])
        c_new = f * cv + i * gg
        return o * jnp.tanh(c_new), c_new

    def trans(v, conv_mat, seg_mat):
        # 3-tap conv (+ duplication / pairing) baked into conv_mat; segmented softmax:
        # global row max is constant inside every segment, per-segment sums via one matmul.
        t = dot(v, conv_mat)
        t = t - jnp.max(t, axis=-1, keepdims=True)
        e = jnp.exp(t)
        return e / dot(e, seg_mat)

    def view_attention(v):
        # View_Attention(channel=1, dim=64); conv1/conv2 scalars folded into att_a/att_c/att_w1
        s = att_a_ref[...][None, :, :] * v[:, None, :] + att_c_ref[...][None, :, :]
        s = s - jnp.max(s, axis=-1, keepdims=True)
        e = jnp.exp(s)
        attn = e / jnp.sum(e, axis=-1, keepdims=True)
        z = jnp.sum(att_w1_ref[...][None, :, :] * attn, axis=1)      # (B, 64)
        mu = jnp.mean(z, axis=-1, keepdims=True)                     # LayerNorm([1, 64])
        var = jnp.mean(jnp.square(z - mu), axis=-1, keepdims=True)
        ln = (z - mu) * jax.lax.rsqrt(var + 1e-5) * att_ln_ref[0:1, :] + att_ln_ref[1:2, :]
        return jnp.maximum(ln, 0.0)                                  # ReLU

    x = dot(spec_ref[...], pre_wT_ref[...]) + pre_b_ref[...]         # self.pre -> (B, 128)
    batch = x.shape[0]
    zeros = jnp.zeros((batch, H), jnp.float32)

    # ---- fwd_LSTM ("recent"): levels 1..4, trans seg widths 32,16,8 -> segs idx 2,1,0 ----
    h, c = lstm_level(x, zeros, zeros, fw_wih_ref[0], fw_whh_ref[0], fw_b_ref[0:1, :])
    for step, seg in zip((1, 2, 3), (2, 1, 0)):
        hi = trans(h, fw_cv_ref[2 * (step - 1)], segs_ref[seg])
        ci = trans(c, fw_cv_ref[2 * (step - 1) + 1], segs_ref[seg])
        h, c = lstm_level(x, hi, ci, fw_wih_ref[step], fw_whh_ref[step],
                          fw_b_ref[step:step + 1, :])
    hx = h                                                           # torch.cat(out4, -1)

    # ---- bwd_LSTM ("longterm"): levels 4..1, trans seg widths 16,32,64 -> segs idx 1,2,3 ----
    h, c = lstm_level(x, zeros, zeros, bw_wih_ref[0], bw_whh_ref[0], bw_b_ref[0:1, :])
    for step, seg in zip((1, 2, 3), (1, 2, 3)):
        hi = trans(h, bw_cv_ref[2 * (step - 1)], segs_ref[seg])
        ci = trans(c, bw_cv_ref[2 * (step - 1) + 1], segs_ref[seg])
        h, c = lstm_level(x, hi, ci, bw_wih_ref[step], bw_whh_ref[step],
                          bw_b_ref[step:step + 1, :])
    cx = c                                                           # torch.cat(out1, -1) == cx1

    # ---- shared View_Attention (reference applies Attention_hx to BOTH hx and cx) ----
    hx_a = view_attention(hx)
    cx_a = view_attention(cx)

    # ---- final nn.LSTM single step with (h0, c0) = (cx_attn, hx_attn), then self.fc ----
    h_out, _ = lstm_level(x, cx_a, hx_a, l_wih_ref[...], l_whh_ref[...], l_b_ref[...])
    out_ref[...] = (dot(h_out, fc_wT_ref[...]) + fc_b_ref[...]).astype(out_ref.dtype)


@jax.jit
def spectral_forward(spec, packed):
    classes = packed[-1].shape[-1]
    return pl.pallas_call(
        _spectral_kernel,
        out_shape=jax.ShapeDtypeStruct((spec.shape[0], classes), jnp.float32),
    )(spec, *packed)


# ---------------------------------------------------------------------------
# One-time host-side weight packing (runs once, outside the traced forward)
# ---------------------------------------------------------------------------
def pack_inputs(p):
    f = lambda a: np.asarray(a, np.float32)

    def band(w3, w_in, stride):
        # (w_in, w_out) matrix equivalent to Conv1d(1,1,3,stride,pad=1,bias=False)
        w3 = f(w3)
        w_out = (w_in - 1) // stride + 1
        M = np.zeros((w_in, w_out), np.float32)
        for j in range(w_out):
            for k in range(3):
                t = stride * j + k - 1
                if 0 <= t < w_in:
                    M[t, j] = w3[k]
        return M

    def fwd_conv(w3, n):
        # stride-2 conv per step, output duplicated so it directly seeds the 2n next-level steps
        hs = H // n
        w = hs // 2
        M = band(w3, hs, 2)
        C = np.zeros((H, H), np.float32)
        for i in range(n):
            C[i * hs:(i + 1) * hs, (2 * i) * w:(2 * i + 1) * w] = M
            C[i * hs:(i + 1) * hs, (2 * i + 1) * w:(2 * i + 2) * w] = M
        return C

    def bwd_conv(w3, pair_w):
        # stride-1 conv on every concatenated (hx_{2k}, hx_{2k+1}) pair (block-diagonal)
        M = band(w3, pair_w, 1)
        C = np.zeros((H, H), np.float32)
        for k in range(H // pair_w):
            C[k * pair_w:(k + 1) * pair_w, k * pair_w:(k + 1) * pair_w] = M
        return C

    def pack_cell(wih, whh, bih, bhh, n):
        # block-diagonal, gate-major packing: gates come out [i|f|g|o] each 64 wide,
        # step-major inside each gate block (matching the concatenated h/c layout)
        wih, whh, b = f(wih), f(whh), f(bih) + f(bhh)
        in_d, hs = wih.shape[1], whh.shape[1]
        W1 = np.zeros((DOWN, 4 * H), np.float32)
        W2 = np.zeros((H, 4 * H), np.float32)
        bb = np.zeros((4 * H,), np.float32)
        for i in range(n):
            for g in range(4):
                c0 = g * H + i * hs
                W1[i * in_d:(i + 1) * in_d, c0:c0 + hs] = wih[g * hs:(g + 1) * hs, :].T
                W2[i * hs:(i + 1) * hs, c0:c0 + hs] = whh[g * hs:(g + 1) * hs, :].T
                bb[c0:c0 + hs] = b[g * hs:(g + 1) * hs]
        return W1, W2, bb

    def cell_stack(prefix, levels, ns):
        W1s, W2s, bs = [], [], []
        for lvl, n in zip(levels, ns):
            W1, W2, bb = pack_cell(p[f"{prefix}_c{lvl}_wih"], p[f"{prefix}_c{lvl}_whh"],
                                   p[f"{prefix}_c{lvl}_bih"], p[f"{prefix}_c{lvl}_bhh"], n)
            W1s.append(W1); W2s.append(W2); bs.append(bb)
        return np.stack(W1s), np.stack(W2s), np.stack(bs)

    fw_wih, fw_whh, fw_b = cell_stack("f", (1, 2, 3, 4), (1, 2, 4, 8))
    bw_wih, bw_whh, bw_b = cell_stack("b", (4, 3, 2, 1), (8, 4, 2, 1))   # computation order

    fw_cv = np.stack([fwd_conv(p["f_t12h_w"], 1), fwd_conv(p["f_t12c_w"], 1),
                      fwd_conv(p["f_t23h_w"], 2), fwd_conv(p["f_t23c_w"], 2),
                      fwd_conv(p["f_t34h_w"], 4), fwd_conv(p["f_t34h_w"], 4)])  # trans3_4h on cx too
    bw_cv = np.stack([bwd_conv(p["b_t43h_w"], 16), bwd_conv(p["b_t43c_w"], 16),
                      bwd_conv(p["b_t32h_w"], 32), bwd_conv(p["b_t32c_w"], 32),
                      bwd_conv(p["b_t21h_w"], 64), bwd_conv(p["b_t21c_w"], 64)])

    idx = np.arange(H)
    segs = np.stack([(idx[:, None] // w == idx[None, :] // w).astype(np.float32)
                     for w in (8, 16, 32, 64)])                       # segment-sum indicator mats

    mid = H // 4
    att_a = (f(p["att_w0"]) * float(p["att_conv1_w"])).reshape(mid, 1)
    att_c = (f(p["att_w0"]) * float(p["att_conv1_b"])).reshape(mid, 1)
    att_w1 = (f(p["att_w1"]) * float(p["att_conv2_w"])).reshape(mid, 1)
    att_ln = np.stack([f(p["att_ln_g"]), f(p["att_ln_b"])])

    l_wih, l_whh, l_b = pack_cell(p["lstm_wih"], p["lstm_whh"], p["lstm_bih"], p["lstm_bhh"], 1)

    packed = [f(p["pre_w"]).T, f(p["pre_b"]).reshape(1, DOWN),
              fw_wih, fw_whh, fw_b, fw_cv,
              bw_wih, bw_whh, bw_b, bw_cv,
              segs,
              att_a, att_c, att_w1, att_ln,
              l_wih, l_whh, l_b.reshape(1, 4 * H),
              f(p["fc_w"]).T, f(p["fc_b"]).reshape(1, -1)]
    return [jnp.asarray(a) for a in packed]


# ---------------------------------------------------------------------------
# Deterministic parameters (torch layouts)
# ---------------------------------------------------------------------------
def make_params(key, bands, class_count, down_ch=128):
    ks = iter(jax.random.split(key, 128))

    def nrm(shape, scale=0.1):
        return scale * jax.random.normal(next(ks), shape, dtype=jnp.float32)

    p = {"pre_w": nrm((down_ch, bands)), "pre_b": nrm((down_ch,))}
    dims = [(down_ch, down_ch // 2), (down_ch // 2, down_ch // 4),
            (down_ch // 4, down_ch // 8), (down_ch // 8, down_ch // 16)]
    for pref in ("f", "b"):
        for lvl, (i_dim, h_dim) in enumerate(dims, start=1):
            s = 1.0 / (h_dim ** 0.5)
            p[f"{pref}_c{lvl}_wih"] = nrm((4 * h_dim, i_dim), s)
            p[f"{pref}_c{lvl}_whh"] = nrm((4 * h_dim, h_dim), s)
            p[f"{pref}_c{lvl}_bih"] = nrm((4 * h_dim,), s)
            p[f"{pref}_c{lvl}_bhh"] = nrm((4 * h_dim,), s)
    for name in ("f_t12h", "f_t12c", "f_t23h", "f_t23c", "f_t34h",
                 "b_t43h", "b_t43c", "b_t32h", "b_t32c", "b_t21h", "b_t21c"):
        p[name + "_w"] = nrm((3,), 0.8)
    hidden = down_ch // 2
    s = 1.0 / (hidden ** 0.5)
    p["lstm_wih"] = nrm((4 * hidden, down_ch), s)
    p["lstm_whh"] = nrm((4 * hidden, hidden), s)
    p["lstm_bih"] = nrm((4 * hidden,), s)
    p["lstm_bhh"] = nrm((4 * hidden,), s)
    mid = hidden // 4
    p["att_conv1_w"] = jnp.float32(1.3)
    p["att_conv1_b"] = jnp.float32(0.2)
    p["att_w0"] = nrm((mid,), 1.0)
    p["att_w1"] = p["att_w0"]                      # linear_1 tied to linear_0 at init
    p["att_conv2_w"] = jnp.float32(0.9)
    p["att_ln_g"] = jnp.ones((hidden,), jnp.float32)
    p["att_ln_b"] = jnp.zeros((hidden,), jnp.float32)
    p["fc_w"] = nrm((class_count, hidden), s)
    p["fc_b"] = nrm((class_count,), 0.1)
    return p


# ---------------------------------------------------------------------------
# Pure-JAX reference (mirrors the PyTorch forward loop-for-loop, raw weights)
# ---------------------------------------------------------------------------
def _ref_linear(x, w, b):
    return x @ w.T + b


def _ref_lstm_cell(x, h, c, w_ih, w_hh, b_ih, b_hh):
    g = x @ w_ih.T + b_ih + h @ w_hh.T + b_hh
    hid = h.shape[-1]
    i = _sigmoid(g[:, :hid])
    f = _sigmoid(g[:, hid:2 * hid])
    gg = jnp.tanh(g[:, 2 * hid:3 * hid])
    o = _sigmoid(g[:, 3 * hid:])
    c2 = f * c + i * gg
    return o * jnp.tanh(c2), c2


def _ref_trans(x, w3, stride):
    xp = jnp.pad(x, ((0, 0), (1, 1)))
    idx = jnp.arange((x.shape[1] - 1) // stride + 1) * stride
    y = w3[0] * xp[:, idx] + w3[1] * xp[:, idx + 1] + w3[2] * xp[:, idx + 2]
    return jax.nn.softmax(y, axis=-1)


def _ref_view_attention(x, p):
    y = p["att_conv1_w"] * x + p["att_conv1_b"]
    s = p["att_w0"][None, :, None] * y[:, None, :]
    attn = jax.nn.softmax(s, axis=-1)
    z = jnp.einsum("m,bmd->bd", p["att_w1"], attn)
    v = p["att_conv2_w"] * z
    mu = v.mean(-1, keepdims=True)
    var = ((v - mu) ** 2).mean(-1, keepdims=True)
    ln = (v - mu) * jax.lax.rsqrt(var + 1e-5) * p["att_ln_g"] + p["att_ln_b"]
    return jnp.maximum(ln, 0.0)


def _ref_fwd(x, p):
    b, d = x.shape
    col = lambda n, i: x[:, i * (d // n):(i + 1) * (d // n)]
    hxb, cxb, out4 = [], [], []
    z = jnp.zeros((b, d // 2), jnp.float32)
    h1, c1 = _ref_lstm_cell(x, z, z, p["f_c1_wih"], p["f_c1_whh"], p["f_c1_bih"], p["f_c1_bhh"])
    hxb.append(_ref_trans(h1, p["f_t12h_w"], 2))
    cxb.append(_ref_trans(c1, p["f_t12c_w"], 2))
    for i in range(2):
        h2, c2 = _ref_lstm_cell(col(2, i), hxb[i // 2], cxb[i // 2],
                                p["f_c2_wih"], p["f_c2_whh"], p["f_c2_bih"], p["f_c2_bhh"])
        hxb.append(_ref_trans(h2, p["f_t23h_w"], 2))
        cxb.append(_ref_trans(c2, p["f_t23c_w"], 2))
    del hxb[:1]; del cxb[:1]
    for i in range(4):
        h3, c3 = _ref_lstm_cell(col(4, i), hxb[i // 2], cxb[i // 2],
                                p["f_c3_wih"], p["f_c3_whh"], p["f_c3_bih"], p["f_c3_bhh"])
        hxb.append(_ref_trans(h3, p["f_t34h_w"], 2))
        cxb.append(_ref_trans(c3, p["f_t34h_w"], 2))   # module uses trans3_4h for cx too
    del hxb[:2]; del cxb[:2]
    for i in range(8):
        h4, _ = _ref_lstm_cell(col(8, i), hxb[i // 2], cxb[i // 2],
                               p["f_c4_wih"], p["f_c4_whh"], p["f_c4_bih"], p["f_c4_bhh"])
        out4.append(h4)
    return jnp.concatenate(out4, axis=-1)


def _ref_bwd(x, p):
    b, d = x.shape
    col = lambda n, i: x[:, i * (d // n):(i + 1) * (d // n)]
    hxb, cxb, th, tc = [], [], [], []
    z = jnp.zeros((b, d // 16), jnp.float32)
    for i in range(8):
        h4, c4 = _ref_lstm_cell(col(8, i), z, z,
                                p["b_c4_wih"], p["b_c4_whh"], p["b_c4_bih"], p["b_c4_bhh"])
        th.append(h4); tc.append(c4)
        if i % 2 == 1:
            hxb.append(_ref_trans(jnp.concatenate(th, -1), p["b_t43h_w"], 1))
            cxb.append(_ref_trans(jnp.concatenate(tc, -1), p["b_t43c_w"], 1))
            th, tc = [], []
    for i in range(4):
        h3, c3 = _ref_lstm_cell(col(4, i), hxb[i], cxb[i],
                                p["b_c3_wih"], p["b_c3_whh"], p["b_c3_bih"], p["b_c3_bhh"])
        th.append(h3); tc.append(c3)
        if i % 2 == 1:
            hxb.append(_ref_trans(jnp.concatenate(th, -1), p["b_t32h_w"], 1))
            cxb.append(_ref_trans(jnp.concatenate(tc, -1), p["b_t32c_w"], 1))
            th, tc = [], []
    del hxb[:4]; del cxb[:4]
    for i in range(2):
        h2, c2 = _ref_lstm_cell(col(2, i), hxb[i], cxb[i],
                                p["b_c2_wih"], p["b_c2_whh"], p["b_c2_bih"], p["b_c2_bhh"])
        th.append(h2); tc.append(c2)
        if i % 2 == 1:
            hxb.append(_ref_trans(jnp.concatenate(th, -1), p["b_t21h_w"], 1))
            cxb.append(_ref_trans(jnp.concatenate(tc, -1), p["b_t21c_w"], 1))
            th, tc = [], []
    del hxb[:2]; del cxb[:2]
    _, c1 = _ref_lstm_cell(x, hxb[0], cxb[0],
                           p["b_c1_wih"], p["b_c1_whh"], p["b_c1_bih"], p["b_c1_bhh"])
    return c1


def _ref_spectral(spec, p):
    x = _ref_linear(spec, p["pre_w"], p["pre_b"])
    hx = _ref_fwd(x, p)
    cx = _ref_bwd(x, p)
    hx_a = _ref_view_attention(hx, p)
    cx_a = _ref_view_attention(cx, p)
    h_out, _ = _ref_lstm_cell(x, cx_a, hx_a,
                              p["lstm_wih"], p["lstm_whh"], p["lstm_bih"], p["lstm_bhh"])
    return _ref_linear(h_out, p["fc_w"], p["fc_b"])


# ---------------------------------------------------------------------------
if __name__ == "__main__":
    BATCH, BANDS, CLASSES = 2, 32, 10          # down_ch is fixed at 128 by the module
    key = jax.random.PRNGKey(0)
    k_spec, k_params = jax.random.split(key)
    spec = jax.random.normal(k_spec, (BATCH, BANDS), dtype=jnp.float32)
    params = make_params(k_params, BANDS, CLASSES)
    packed = pack_inputs(params)               # one-time weight packing (outside jit)

    score = jax.block_until_ready(spectral_forward(spec, packed))
    assert score.shape == (BATCH, CLASSES) and score.dtype == jnp.float32

    ref = _ref_spectral(spec, params)
    err = float(jnp.max(jnp.abs(score - ref)))
    assert err < 1e-2, f"max abs err vs reference: {err}"

    print("KERNEL_OK")
</pallas_src>

<mosaic_0001>
module attributes {stable_mosaic.version = 11 : i64} {
  func.func @_spectral_kernel(%arg0: memref<2x32xf32, #tpu.memory_space<vmem>>, %arg1: memref<32x128xf32, #tpu.memory_space<vmem>>, %arg2: memref<1x128xf32, #tpu.memory_space<vmem>>, %arg3: memref<4x128x256xf32, #tpu.memory_space<vmem>>, %arg4: memref<4x64x256xf32, #tpu.memory_space<vmem>>, %arg5: memref<4x256xf32, #tpu.memory_space<vmem>>, %arg6: memref<6x64x64xf32, #tpu.memory_space<vmem>>, %arg7: memref<4x128x256xf32, #tpu.memory_space<vmem>>, %arg8: memref<4x64x256xf32, #tpu.memory_space<vmem>>, %arg9: memref<4x256xf32, #tpu.memory_space<vmem>>, %arg10: memref<6x64x64xf32, #tpu.memory_space<vmem>>, %arg11: memref<4x64x64xf32, #tpu.memory_space<vmem>>, %arg12: memref<16x1xf32, #tpu.memory_space<vmem>>, %arg13: memref<16x1xf32, #tpu.memory_space<vmem>>, %arg14: memref<16x1xf32, #tpu.memory_space<vmem>>, %arg15: memref<2x64xf32, #tpu.memory_space<vmem>>, %arg16: memref<128x256xf32, #tpu.memory_space<vmem>>, %arg17: memref<64x256xf32, #tpu.memory_space<vmem>>, %arg18: memref<1x256xf32, #tpu.memory_space<vmem>>, %arg19: memref<64x10xf32, #tpu.memory_space<vmem>>, %arg20: memref<1x10xf32, #tpu.memory_space<vmem>>, %arg21: memref<2x10xf32, #tpu.memory_space<vmem>>) attributes {dimension_semantics = [], scalar_prefetch = 0 : i64, scratch_operands = 0 : i64, tpu.core_type = #tpu.core_type<tc>} {
    %c0 = arith.constant 0 : index
    %c0_0 = arith.constant 0 : index
    %0 = vector.load %arg0[%c0, %c0_0] : memref<2x32xf32, #tpu.memory_space<vmem>>, vector<2x32xf32>
    %c0_1 = arith.constant 0 : index
    %c0_2 = arith.constant 0 : index
    %1 = vector.load %arg1[%c0_1, %c0_2] : memref<32x128xf32, #tpu.memory_space<vmem>>, vector<32x128xf32>
    %cst = arith.constant dense<0.000000e+00> : vector<2x128xf32>
    %2 = tpu.matmul %0, %1, %cst {dimension_numbers = #tpu.dot_dimension_numbers<[1], [0], [0], [1], [0, 0, 1, 1], [], []>} : vector<2x32xf32>, vector<32x128xf32>, vector<2x128xf32> -> vector<2x128xf32>
    %c0_3 = arith.constant 0 : index
    %c0_4 = arith.constant 0 : index
    %3 = vector.load %arg2[%c0_3, %c0_4] : memref<1x128xf32, #tpu.memory_space<vmem>>, vector<1x128xf32>
    %4 = vector.broadcast %3 : vector<1x128xf32> to vector<2x128xf32>
    %5 = arith.addf %2, %4 : vector<2x128xf32>
    %cst_5 = arith.constant 0.000000e+00 : f32
    %6 = vector.broadcast %cst_5 : f32 to vector<2x64xf32>
    %c0_6 = arith.constant 0 : index
    %c0_7 = arith.constant 0 : index
    %c0_8 = arith.constant 0 : index
    %7 = vector.load %arg3[%c0_6, %c0_7, %c0_8] : memref<4x128x256xf32, #tpu.memory_space<vmem>>, vector<1x128x256xf32>
    %8 = vector.shape_cast %7 : vector<1x128x256xf32> to vector<128x256xf32>
    %c0_9 = arith.constant 0 : index
    %c0_10 = arith.constant 0 : index
    %c0_11 = arith.constant 0 : index
    %9 = vector.load %arg4[%c0_9, %c0_10, %c0_11] : memref<4x64x256xf32, #tpu.memory_space<vmem>>, vector<1x64x256xf32>
    %10 = vector.shape_cast %9 : vector<1x64x256xf32> to vector<64x256xf32>
    %c0_12 = arith.constant 0 : index
    %c0_13 = arith.constant 0 : index
    %11 = vector.load %arg5[%c0_12, %c0_13] : memref<4x256xf32, #tpu.memory_space<vmem>>, vector<1x256xf32>
    %cst_14 = arith.constant dense<0.000000e+00> : vector<2x256xf32>
    %12 = tpu.matmul %5, %8, %cst_14 {dimension_numbers = #tpu.dot_dimension_numbers<[1], [0], [0], [1], [0, 0, 1, 1], [], []>} : vector<2x128xf32>, vector<128x256xf32>, vector<2x256xf32> -> vector<2x256xf32>
    %cst_15 = arith.constant dense<0.000000e+00> : vector<2x256xf32>
    %13 = tpu.matmul %6, %10, %cst_15 {dimension_numbers = #tpu.dot_dimension_numbers<[1], [0], [0], [1], [0, 0, 1, 1], [], []>} : vector<2x64xf32>, vector<64x256xf32>, vector<2x256xf32> -> vector<2x256xf32>
    %14 = arith.addf %12, %13 : vector<2x256xf32>
    %15 = vector.broadcast %11 : vector<1x256xf32> to vector<2x256xf32>
    %16 = arith.addf %14, %15 : vector<2x256xf32>
    %17 = vector.extract_strided_slice %16 {offsets = [0, 0], sizes = [2, 64], strides = [1, 1]} : vector<2x256xf32> to vector<2x64xf32>
    %cst_16 = arith.constant 0.000000e+00 : f32
    %18 = vector.broadcast %cst_16 : f32 to vector<2x64xf32>
    %19 = arith.subf %18, %17 : vector<2x64xf32>
    %20 = math.exp %19 : vector<2x64xf32>
    %cst_17 = arith.constant 1.000000e+00 : f32
    %21 = vector.broadcast %cst_17 : f32 to vector<2x64xf32>
    %22 = arith.addf %21, %20 : vector<2x64xf32>
    %cst_18 = arith.constant 1.000000e+00 : f32
    %23 = vector.broadcast %cst_18 : f32 to vector<2x64xf32>
    %24 = arith.divf %23, %22 : vector<2x64xf32>
    %25 = vector.extract_strided_slice %16 {offsets = [0, 64], sizes = [2, 64], strides = [1, 1]} : vector<2x256xf32> to vector<2x64xf32>
    %cst_19 = arith.constant 0.000000e+00 : f32
    %26 = vector.broadcast %cst_19 : f32 to vector<2x64xf32>
    %27 = arith.subf %26, %25 : vector<2x64xf32>
    %28 = math.exp %27 : vector<2x64xf32>
    %cst_20 = arith.constant 1.000000e+00 : f32
    %29 = vector.broadcast %cst_20 : f32 to vector<2x64xf32>
    %30 = arith.addf %29, %28 : vector<2x64xf32>
    %cst_21 = arith.constant 1.000000e+00 : f32
    %31 = vector.broadcast %cst_21 : f32 to vector<2x64xf32>
    %32 = arith.divf %31, %30 : vector<2x64xf32>
    %33 = vector.extract_strided_slice %16 {offsets = [0, 128], sizes = [2, 64], strides = [1, 1]} : vector<2x256xf32> to vector<2x64xf32>
    %34 = math.tanh %33 : vector<2x64xf32>
    %35 = vector.extract_strided_slice %16 {offsets = [0, 192], sizes = [2, 64], strides = [1, 1]} : vector<2x256xf32> to vector<2x64xf32>
    %cst_22 = arith.constant 0.000000e+00 : f32
    %36 = vector.broadcast %cst_22 : f32 to vector<2x64xf32>
    %37 = arith.subf %36, %35 : vector<2x64xf32>
    %38 = math.exp %37 : vector<2x64xf32>
    %cst_23 = arith.constant 1.000000e+00 : f32
    %39 = vector.broadcast %cst_23 : f32 to vector<2x64xf32>
    %40 = arith.addf %39, %38 : vector<2x64xf32>
    %cst_24 = arith.constant 1.000000e+00 : f32
    %41 = vector.broadcast %cst_24 : f32 to vector<2x64xf32>
    %42 = arith.divf %41, %40 : vector<2x64xf32>
    %43 = arith.mulf %32, %6 : vector<2x64xf32>
    %44 = arith.mulf %24, %34 : vector<2x64xf32>
    %45 = arith.addf %43, %44 : vector<2x64xf32>
    %46 = math.tanh %45 : vector<2x64xf32>
    %47 = arith.mulf %42, %46 : vector<2x64xf32>
    %c0_25 = arith.constant 0 : index
    %c0_26 = arith.constant 0 : index
    %c0_27 = arith.constant 0 : index
    %48 = vector.load %arg6[%c0_25, %c0_26, %c0_27] : memref<6x64x64xf32, #tpu.memory_space<vmem>>, vector<1x64x64xf32>
    %49 = vector.shape_cast %48 : vector<1x64x64xf32> to vector<64x64xf32>
    %c2 = arith.constant 2 : index
    %c0_28 = arith.constant 0 : index
    %c0_29 = arith.constant 0 : index
    %50 = vector.load %arg11[%c2, %c0_28, %c0_29] : memref<4x64x64xf32, #tpu.memory_space<vmem>>, vector<1x64x64xf32>
    %51 = vector.shape_cast %50 : vector<1x64x64xf32> to vector<64x64xf32>
    %cst_30 = arith.constant dense<0.000000e+00> : vector<2x64xf32>
    %52 = tpu.matmul %47, %49, %cst_30 {dimension_numbers = #tpu.dot_dimension_numbers<[1], [0], [0], [1], [0, 0, 1, 1], [], []>} : vector<2x64xf32>, vector<64x64xf32>, vector<2x64xf32> -> vector<2x64xf32>
    %cst_31 = arith.constant dense<0xFF800000> : vector<2xf32>
    %53 = vector.multi_reduction <maximumf>, %52, %cst_31 [1] : vector<2x64xf32> to vector<2xf32>
    %54 = vector.shape_cast %53 : vector<2xf32> to vector<2x1xf32>
    %55 = vector.broadcast %54 : vector<2x1xf32> to vector<2x64xf32>
    %56 = arith.subf %52, %55 : vector<2x64xf32>
    %57 = math.exp %56 : vector<2x64xf32>
    %cst_32 = arith.constant dense<0.000000e+00> : vector<2x64xf32>
    %58 = tpu.matmul %57, %51, %cst_32 {dimension_numbers = #tpu.dot_dimension_numbers<[1], [0], [0], [1], [0, 0, 1, 1], [], []>} : vector<2x64xf32>, vector<64x64xf32>, vector<2x64xf32> -> vector<2x64xf32>
    %59 = arith.divf %57, %58 : vector<2x64xf32>
    %c1 = arith.constant 1 : index
    %c0_33 = arith.constant 0 : index
    %c0_34 = arith.constant 0 : index
    %60 = vector.load %arg6[%c1, %c0_33, %c0_34] : memref<6x64x64xf32, #tpu.memory_space<vmem>>, vector<1x64x64xf32>
    %61 = vector.shape_cast %60 : vector<1x64x64xf32> to vector<64x64xf32>
    %c2_35 = arith.constant 2 : index
    %c0_36 = arith.constant 0 : index
    %c0_37 = arith.constant 0 : index
    %62 = vector.load %arg11[%c2_35, %c0_36, %c0_37] : memref<4x64x64xf32, #tpu.memory_space<vmem>>, vector<1x64x64xf32>
    %63 = vector.shape_cast %62 : vector<1x64x64xf32> to vector<64x64xf32>
    %cst_38 = arith.constant dense<0.000000e+00> : vector<2x64xf32>
    %64 = tpu.matmul %45, %61, %cst_38 {dimension_numbers = #tpu.dot_dimension_numbers<[1], [0], [0], [1], [0, 0, 1, 1], [], []>} : vector<2x64xf32>, vector<64x64xf32>, vector<2x64xf32> -> vector<2x64xf32>
    %cst_39 = arith.constant dense<0xFF800000> : vector<2xf32>
    %65 = vector.multi_reduction <maximumf>, %64, %cst_39 [1] : vector<2x64xf32> to vector<2xf32>
    %66 = vector.shape_cast %65 : vector<2xf32> to vector<2x1xf32>
    %67 = vector.broadcast %66 : vector<2x1xf32> to vector<2x64xf32>
    %68 = arith.subf %64, %67 : vector<2x64xf32>
    %69 = math.exp %68 : vector<2x64xf32>
    %cst_40 = arith.constant dense<0.000000e+00> : vector<2x64xf32>
    %70 = tpu.matmul %69, %63, %cst_40 {dimension_numbers = #tpu.dot_dimension_numbers<[1], [0], [0], [1], [0, 0, 1, 1], [], []>} : vector<2x64xf32>, vector<64x64xf32>, vector<2x64xf32> -> vector<2x64xf32>
    %71 = arith.divf %69, %70 : vector<2x64xf32>
    %c1_41 = arith.constant 1 : index
    %c0_42 = arith.constant 0 : index
    %c0_43 = arith.constant 0 : index
    %72 = vector.load %arg3[%c1_41, %c0_42, %c0_43] : memref<4x128x256xf32, #tpu.memory_space<vmem>>, vector<1x128x256xf32>
    %73 = vector.shape_cast %72 : vector<1x128x256xf32> to vector<128x256xf32>
    %c1_44 = arith.constant 1 : index
    %c0_45 = arith.constant 0 : index
    %c0_46 = arith.constant 0 : index
    %74 = vector.load %arg4[%c1_44, %c0_45, %c0_46] : memref<4x64x256xf32, #tpu.memory_space<vmem>>, vector<1x64x256xf32>
    %75 = vector.shape_cast %74 : vector<1x64x256xf32> to vector<64x256xf32>
    %c1_47 = arith.constant 1 : index
    %c0_48 = arith.constant 0 : index
    %76 = vector.load %arg5[%c1_47, %c0_48] : memref<4x256xf32, #tpu.memory_space<vmem>>, vector<1x256xf32>
    %cst_49 = arith.constant dense<0.000000e+00> : vector<2x256xf32>
    %77 = tpu.matmul %5, %73, %cst_49 {dimension_numbers = #tpu.dot_dimension_numbers<[1], [0], [0], [1], [0, 0, 1, 1], [], []>} : vector<2x128xf32>, vector<128x256xf32>, vector<2x256xf32> -> vector<2x256xf32>
    %cst_50 = arith.constant dense<0.000000e+00> : vector<2x256xf32>
    %78 = tpu.matmul %59, %75, %cst_50 {dimension_numbers = #tpu.dot_dimension_numbers<[1], [0], [0], [1], [0, 0, 1, 1], [], []>} : vector<2x64xf32>, vector<64x256xf32>, vector<2x256xf32> -> vector<2x256xf32>
    %79 = arith.addf %77, %78 : vector<2x256xf32>
    %80 = vector.broadcast %76 : vector<1x256xf32> to vector<2x256xf32>
    %81 = arith.addf %79, %80 : vector<2x256xf32>
    %82 = vector.extract_strided_slice %81 {offsets = [0, 0], sizes = [2, 64], strides = [1, 1]} : vector<2x256xf32> to vector<2x64xf32>
    %cst_51 = arith.constant 0.000000e+00 : f32
    %83 = vector.broadcast %cst_51 : f32 to vector<2x64xf32>
    %84 = arith.subf %83, %82 : vector<2x64xf32>
    %85 = math.exp %84 : vector<2x64xf32>
    %cst_52 = arith.constant 1.000000e+00 : f32
    %86 = vector.broadcast %cst_52 : f32 to vector<2x64xf32>
    %87 = arith.addf %86, %85 : vector<2x64xf32>
    %cst_53 = arith.constant 1.000000e+00 : f32
    %88 = vector.broadcast %cst_53 : f32 to vector<2x64xf32>
    %89 = arith.divf %88, %87 : vector<2x64xf32>
    %90 = vector.extract_strided_slice %81 {offsets = [0, 64], sizes = [2, 64], strides = [1, 1]} : vector<2x256xf32> to vector<2x64xf32>
    %cst_54 = arith.constant 0.000000e+00 : f32
    %91 = vector.broadcast %cst_54 : f32 to vector<2x64xf32>
    %92 = arith.subf %91, %90 : vector<2x64xf32>
    %93 = math.exp %92 : vector<2x64xf32>
    %cst_55 = arith.constant 1.000000e+00 : f32
    %94 = vector.broadcast %cst_55 : f32 to vector<2x64xf32>
    %95 = arith.addf %94, %93 : vector<2x64xf32>
    %cst_56 = arith.constant 1.000000e+00 : f32
    %96 = vector.broadcast %cst_56 : f32 to vector<2x64xf32>
    %97 = arith.divf %96, %95 : vector<2x64xf32>
    %98 = vector.extract_strided_slice %81 {offsets = [0, 128], sizes = [2, 64], strides = [1, 1]} : vector<2x256xf32> to vector<2x64xf32>
    %99 = math.tanh %98 : vector<2x64xf32>
    %100 = vector.extract_strided_slice %81 {offsets = [0, 192], sizes = [2, 64], strides = [1, 1]} : vector<2x256xf32> to vector<2x64xf32>
    %cst_57 = arith.constant 0.000000e+00 : f32
    %101 = vector.broadcast %cst_57 : f32 to vector<2x64xf32>
    %102 = arith.subf %101, %100 : vector<2x64xf32>
    %103 = math.exp %102 : vector<2x64xf32>
    %cst_58 = arith.constant 1.000000e+00 : f32
    %104 = vector.broadcast %cst_58 : f32 to vector<2x64xf32>
    %105 = arith.addf %104, %103 : vector<2x64xf32>
    %cst_59 = arith.constant 1.000000e+00 : f32
    %106 = vector.broadcast %cst_59 : f32 to vector<2x64xf32>
    %107 = arith.divf %106, %105 : vector<2x64xf32>
    %108 = arith.mulf %97, %71 : vector<2x64xf32>
    %109 = arith.mulf %89, %99 : vector<2x64xf32>
    %110 = arith.addf %108, %109 : vector<2x64xf32>
    %111 = math.tanh %110 : vector<2x64xf32>
    %112 = arith.mulf %107, %111 : vector<2x64xf32>
    %c2_60 = arith.constant 2 : index
    %c0_61 = arith.constant 0 : index
    %c0_62 = arith.constant 0 : index
    %113 = vector.load %arg6[%c2_60, %c0_61, %c0_62] : memref<6x64x64xf32, #tpu.memory_space<vmem>>, vector<1x64x64xf32>
    %114 = vector.shape_cast %113 : vector<1x64x64xf32> to vector<64x64xf32>
    %c1_63 = arith.constant 1 : index
    %c0_64 = arith.constant 0 : index
    %c0_65 = arith.constant 0 : index
    %115 = vector.load %arg11[%c1_63, %c0_64, %c0_65] : memref<4x64x64xf32, #tpu.memory_space<vmem>>, vector<1x64x64xf32>
    %116 = vector.shape_cast %115 : vector<1x64x64xf32> to vector<64x64xf32>
    %cst_66 = arith.constant dense<0.000000e+00> : vector<2x64xf32>
    %117 = tpu.matmul %112, %114, %cst_66 {dimension_numbers = #tpu.dot_dimension_numbers<[1], [0], [0], [1], [0, 0, 1, 1], [], []>} : vector<2x64xf32>, vector<64x64xf32>, vector<2x64xf32> -> vector<2x64xf32>
    %cst_67 = arith.constant dense<0xFF800000> : vector<2xf32>
    %118 = vector.multi_reduction <maximumf>, %117, %cst_67 [1] : vector<2x64xf32> to vector<2xf32>
    %119 = vector.shape_cast %118 : vector<2xf32> to vector<2x1xf32>
    %120 = vector.broadcast %119 : vector<2x1xf32> to vector<2x64xf32>
    %121 = arith.subf %117, %120 : vector<2x64xf32>
    %122 = math.exp %121 : vector<2x64xf32>
    %cst_68 = arith.constant dense<0.000000e+00> : vector<2x64xf32>
    %123 = tpu.matmul %122, %116, %cst_68 {dimension_numbers = #tpu.dot_dimension_numbers<[1], [0], [0], [1], [0, 0, 1, 1], [], []>} : vector<2x64xf32>, vector<64x64xf32>, vector<2x64xf32> -> vector<2x64xf32>
    %124 = arith.divf %122, %123 : vector<2x64xf32>
    %c3 = arith.constant 3 : index
    %c0_69 = arith.constant 0 : index
    %c0_70 = arith.constant 0 : index
    %125 = vector.load %arg6[%c3, %c0_69, %c0_70] : memref<6x64x64xf32, #tpu.memory_space<vmem>>, vector<1x64x64xf32>
    %126 = vector.shape_cast %125 : vector<1x64x64xf32> to vector<64x64xf32>
    %c1_71 = arith.constant 1 : index
    %c0_72 = arith.constant 0 : index
    %c0_73 = arith.constant 0 : index
    %127 = vector.load %arg11[%c1_71, %c0_72, %c0_73] : memref<4x64x64xf32, #tpu.memory_space<vmem>>, vector<1x64x64xf32>
    %128 = vector.shape_cast %127 : vector<1x64x64xf32> to vector<64x64xf32>
    %cst_74 = arith.constant dense<0.000000e+00> : vector<2x64xf32>
    %129 = tpu.matmul %110, %126, %cst_74 {dimension_numbers = #tpu.dot_dimension_numbers<[1], [0], [0], [1], [0, 0, 1, 1], [], []>} : vector<2x64xf32>, vector<64x64xf32>, vector<2x64xf32> -> vector<2x64xf32>
    %cst_75 = arith.constant dense<0xFF800000> : vector<2xf32>
    %130 = vector.multi_reduction <maximumf>, %129, %cst_75 [1] : vector<2x64xf32> to vector<2xf32>
    %131 = vector.shape_cast %130 : vector<2xf32> to vector<2x1xf32>
    %132 = vector.broadcast %131 : vector<2x1xf32> to vector<2x64xf32>
    %133 = arith.subf %129, %132 : vector<2x64xf32>
    %134 = math.exp %133 : vector<2x64xf32>
    %cst_76 = arith.constant dense<0.000000e+00> : vector<2x64xf32>
    %135 = tpu.matmul %134, %128, %cst_76 {dimension_numbers = #tpu.dot_dimension_numbers<[1], [0], [0], [1], [0, 0, 1, 1], [], []>} : vector<2x64xf32>, vector<64x64xf32>, vector<2x64xf32> -> vector<2x64xf32>
    %136 = arith.divf %134, %135 : vector<2x64xf32>
    %c2_77 = arith.constant 2 : index
    %c0_78 = arith.constant 0 : index
    %c0_79 = arith.constant 0 : index
    %137 = vector.load %arg3[%c2_77, %c0_78, %c0_79] : memref<4x128x256xf32, #tpu.memory_space<vmem>>, vector<1x128x256xf32>
    %138 = vector.shape_cast %137 : vector<1x128x256xf32> to vector<128x256xf32>
    %c2_80 = arith.constant 2 : index
    %c0_81 = arith.constant 0 : index
    %c0_82 = arith.constant 0 : index
    %139 = vector.load %arg4[%c2_80, %c0_81, %c0_82] : memref<4x64x256xf32, #tpu.memory_space<vmem>>, vector<1x64x256xf32>
    %140 = vector.shape_cast %139 : vector<1x64x256xf32> to vector<64x256xf32>
    %c2_83 = arith.constant 2 : index
    %c0_84 = arith.constant 0 : index
    %141 = vector.load %arg5[%c2_83, %c0_84] : memref<4x256xf32, #tpu.memory_space<vmem>>, vector<1x256xf32>
    %cst_85 = arith.constant dense<0.000000e+00> : vector<2x256xf32>
    %142 = tpu.matmul %5, %138, %cst_85 {dimension_numbers = #tpu.dot_dimension_numbers<[1], [0], [0], [1], [0, 0, 1, 1], [], []>} : vector<2x128xf32>, vector<128x256xf32>, vector<2x256xf32> -> vector<2x256xf32>
    %cst_86 = arith.constant dense<0.000000e+00> : vector<2x256xf32>
    %143 = tpu.matmul %124, %140, %cst_86 {dimension_numbers = #tpu.dot_dimension_numbers<[1], [0], [0], [1], [0, 0, 1, 1], [], []>} : vector<2x64xf32>, vector<64x256xf32>, vector<2x256xf32> -> vector<2x256xf32>
    %144 = arith.addf %142, %143 : vector<2x256xf32>
    %145 = vector.broadcast %141 : vector<1x256xf32> to vector<2x256xf32>
    %146 = arith.addf %144, %145 : vector<2x256xf32>
    %147 = vector.extract_strided_slice %146 {offsets = [0, 0], sizes = [2, 64], strides = [1, 1]} : vector<2x256xf32> to vector<2x64xf32>
    %cst_87 = arith.constant 0.000000e+00 : f32
    %148 = vector.broadcast %cst_87 : f32 to vector<2x64xf32>
    %149 = arith.subf %148, %147 : vector<2x64xf32>
    %150 = math.exp %149 : vector<2x64xf32>
    %cst_88 = arith.constant 1.000000e+00 : f32
    %151 = vector.broadcast %cst_88 : f32 to vector<2x64xf32>
    %152 = arith.addf %151, %150 : vector<2x64xf32>
    %cst_89 = arith.constant 1.000000e+00 : f32
    %153 = vector.broadcast %cst_89 : f32 to vector<2x64xf32>
    %154 = arith.divf %153, %152 : vector<2x64xf32>
    %155 = vector.extract_strided_slice %146 {offsets = [0, 64], sizes = [2, 64], strides = [1, 1]} : vector<2x256xf32> to vector<2x64xf32>
    %cst_90 = arith.constant 0.000000e+00 : f32
    %156 = vector.broadcast %cst_90 : f32 to vector<2x64xf32>
    %157 = arith.subf %156, %155 : vector<2x64xf32>
    %158 = math.exp %157 : vector<2x64xf32>
    %cst_91 = arith.constant 1.000000e+00 : f32
    %159 = vector.broadcast %cst_91 : f32 to vector<2x64xf32>
    %160 = arith.addf %159, %158 : vector<2x64xf32>
    %cst_92 = arith.constant 1.000000e+00 : f32
    %161 = vector.broadcast %cst_92 : f32 to vector<2x64xf32>
    %162 = arith.divf %161, %160 : vector<2x64xf32>
    %163 = vector.extract_strided_slice %146 {offsets = [0, 128], sizes = [2, 64], strides = [1, 1]} : vector<2x256xf32> to vector<2x64xf32>
    %164 = math.tanh %163 : vector<2x64xf32>
    %165 = vector.extract_strided_slice %146 {offsets = [0, 192], sizes = [2, 64], strides = [1, 1]} : vector<2x256xf32> to vector<2x64xf32>
    %cst_93 = arith.constant 0.000000e+00 : f32
    %166 = vector.broadcast %cst_93 : f32 to vector<2x64xf32>
    %167 = arith.subf %166, %165 : vector<2x64xf32>
    %168 = math.exp %167 : vector<2x64xf32>
    %cst_94 = arith.constant 1.000000e+00 : f32
    %169 = vector.broadcast %cst_94 : f32 to vector<2x64xf32>
    %170 = arith.addf %169, %168 : vector<2x64xf32>
    %cst_95 = arith.constant 1.000000e+00 : f32
    %171 = vector.broadcast %cst_95 : f32 to vector<2x64xf32>
    %172 = arith.divf %171, %170 : vector<2x64xf32>
    %173 = arith.mulf %162, %136 : vector<2x64xf32>
    %174 = arith.mulf %154, %164 : vector<2x64xf32>
    %175 = arith.addf %173, %174 : vector<2x64xf32>
    %176 = math.tanh %175 : vector<2x64xf32>
    %177 = arith.mulf %172, %176 : vector<2x64xf32>
    %c4 = arith.constant 4 : index
    %c0_96 = arith.constant 0 : index
    %c0_97 = arith.constant 0 : index
    %178 = vector.load %arg6[%c4, %c0_96, %c0_97] : memref<6x64x64xf32, #tpu.memory_space<vmem>>, vector<1x64x64xf32>
    %179 = vector.shape_cast %178 : vector<1x64x64xf32> to vector<64x64xf32>
    %c0_98 = arith.constant 0 : index
    %c0_99 = arith.constant 0 : index
    %c0_100 = arith.constant 0 : index
    %180 = vector.load %arg11[%c0_98, %c0_99, %c0_100] : memref<4x64x64xf32, #tpu.memory_space<vmem>>, vector<1x64x64xf32>
    %181 = vector.shape_cast %180 : vector<1x64x64xf32> to vector<64x64xf32>
    %cst_101 = arith.constant dense<0.000000e+00> : vector<2x64xf32>
    %182 = tpu.matmul %177, %179, %cst_101 {dimension_numbers = #tpu.dot_dimension_numbers<[1], [0], [0], [1], [0, 0, 1, 1], [], []>} : vector<2x64xf32>, vector<64x64xf32>, vector<2x64xf32> -> vector<2x64xf32>
    %cst_102 = arith.constant dense<0xFF800000> : vector<2xf32>
    %183 = vector.multi_reduction <maximumf>, %182, %cst_102 [1] : vector<2x64xf32> to vector<2xf32>
    %184 = vector.shape_cast %183 : vector<2xf32> to vector<2x1xf32>
    %185 = vector.broadcast %184 : vector<2x1xf32> to vector<2x64xf32>
    %186 = arith.subf %182, %185 : vector<2x64xf32>
    %187 = math.exp %186 : vector<2x64xf32>
    %cst_103 = arith.constant dense<0.000000e+00> : vector<2x64xf32>
    %188 = tpu.matmul %187, %181, %cst_103 {dimension_numbers = #tpu.dot_dimension_numbers<[1], [0], [0], [1], [0, 0, 1, 1], [], []>} : vector<2x64xf32>, vector<64x64xf32>, vector<2x64xf32> -> vector<2x64xf32>
    %189 = arith.divf %187, %188 : vector<2x64xf32>
    %c5 = arith.constant 5 : index
    %c0_104 = arith.constant 0 : index
    %c0_105 = arith.constant 0 : index
    %190 = vector.load %arg6[%c5, %c0_104, %c0_105] : memref<6x64x64xf32, #tpu.memory_space<vmem>>, vector<1x64x64xf32>
    %191 = vector.shape_cast %190 : vector<1x64x64xf32> to vector<64x64xf32>
    %c0_106 = arith.constant 0 : index
    %c0_107 = arith.constant 0 : index
    %c0_108 = arith.constant 0 : index
    %192 = vector.load %arg11[%c0_106, %c0_107, %c0_108] : memref<4x64x64xf32, #tpu.memory_space<vmem>>, vector<1x64x64xf32>
    %193 = vector.shape_cast %192 : vector<1x64x64xf32> to vector<64x64xf32>
    %cst_109 = arith.constant dense<0.000000e+00> : vector<2x64xf32>
    %194 = tpu.matmul %175, %191, %cst_109 {dimension_numbers = #tpu.dot_dimension_numbers<[1], [0], [0], [1], [0, 0, 1, 1], [], []>} : vector<2x64xf32>, vector<64x64xf32>, vector<2x64xf32> -> vector<2x64xf32>
    %cst_110 = arith.constant dense<0xFF800000> : vector<2xf32>
    %195 = vector.multi_reduction <maximumf>, %194, %cst_110 [1] : vector<2x64xf32> to vector<2xf32>
    %196 = vector.shape_cast %195 : vector<2xf32> to vector<2x1xf32>
    %197 = vector.broadcast %196 : vector<2x1xf32> to vector<2x64xf32>
    %198 = arith.subf %194, %197 : vector<2x64xf32>
    %199 = math.exp %198 : vector<2x64xf32>
    %cst_111 = arith.constant dense<0.000000e+00> : vector<2x64xf32>
    %200 = tpu.matmul %199, %193, %cst_111 {dimension_numbers = #tpu.dot_dimension_numbers<[1], [0], [0], [1], [0, 0, 1, 1], [], []>} : vector<2x64xf32>, vector<64x64xf32>, vector<2x64xf32> -> vector<2x64xf32>
    %201 = arith.divf %199, %200 : vector<2x64xf32>
    %c3_112 = arith.constant 3 : index
    %c0_113 = arith.constant 0 : index
    %c0_114 = arith.constant 0 : index
    %202 = vector.load %arg3[%c3_112, %c0_113, %c0_114] : memref<4x128x256xf32, #tpu.memory_space<vmem>>, vector<1x128x256xf32>
    %203 = vector.shape_cast %202 : vector<1x128x256xf32> to vector<128x256xf32>
    %c3_115 = arith.constant 3 : index
    %c0_116 = arith.constant 0 : index
    %c0_117 = arith.constant 0 : index
    %204 = vector.load %arg4[%c3_115, %c0_116, %c0_117] : memref<4x64x256xf32, #tpu.memory_space<vmem>>, vector<1x64x256xf32>
    %205 = vector.shape_cast %204 : vector<1x64x256xf32> to vector<64x256xf32>
    %c3_118 = arith.constant 3 : index
    %c0_119 = arith.constant 0 : index
    %206 = vector.load %arg5[%c3_118, %c0_119] : memref<4x256xf32, #tpu.memory_space<vmem>>, vector<1x256xf32>
    %cst_120 = arith.constant dense<0.000000e+00> : vector<2x256xf32>
    %207 = tpu.matmul %5, %203, %cst_120 {dimension_numbers = #tpu.dot_dimension_numbers<[1], [0], [0], [1], [0, 0, 1, 1], [], []>} : vector<2x128xf32>, vector<128x256xf32>, vector<2x256xf32> -> vector<2x256xf32>
    %cst_121 = arith.constant dense<0.000000e+00> : vector<2x256xf32>
    %208 = tpu.matmul %189, %205, %cst_121 {dimension_numbers = #tpu.dot_dimension_numbers<[1], [0], [0], [1], [0, 0, 1, 1], [], []>} : vector<2x64xf32>, vector<64x256xf32>, vector<2x256xf32> -> vector<2x256xf32>
    %209 = arith.addf %207, %208 : vector<2x256xf32>
    %210 = vector.broadcast %206 : vector<1x256xf32> to vector<2x256xf32>
    %211 = arith.addf %209, %210 : vector<2x256xf32>
    %212 = vector.extract_strided_slice %211 {offsets = [0, 0], sizes = [2, 64], strides = [1, 1]} : vector<2x256xf32> to vector<2x64xf32>
    %cst_122 = arith.constant 0.000000e+00 : f32
    %213 = vector.broadcast %cst_122 : f32 to vector<2x64xf32>
    %214 = arith.subf %213, %212 : vector<2x64xf32>
    %215 = math.exp %214 : vector<2x64xf32>
    %cst_123 = arith.constant 1.000000e+00 : f32
    %216 = vector.broadcast %cst_123 : f32 to vector<2x64xf32>
    %217 = arith.addf %216, %215 : vector<2x64xf32>
    %cst_124 = arith.constant 1.000000e+00 : f32
    %218 = vector.broadcast %cst_124 : f32 to vector<2x64xf32>
    %219 = arith.divf %218, %217 : vector<2x64xf32>
    %220 = vector.extract_strided_slice %211 {offsets = [0, 64], sizes = [2, 64], strides = [1, 1]} : vector<2x256xf32> to vector<2x64xf32>
    %cst_125 = arith.constant 0.000000e+00 : f32
    %221 = vector.broadcast %cst_125 : f32 to vector<2x64xf32>
    %222 = arith.subf %221, %220 : vector<2x64xf32>
    %223 = math.exp %222 : vector<2x64xf32>
    %cst_126 = arith.constant 1.000000e+00 : f32
    %224 = vector.broadcast %cst_126 : f32 to vector<2x64xf32>
    %225 = arith.addf %224, %223 : vector<2x64xf32>
    %cst_127 = arith.constant 1.000000e+00 : f32
    %226 = vector.broadcast %cst_127 : f32 to vector<2x64xf32>
    %227 = arith.divf %226, %225 : vector<2x64xf32>
    %228 = vector.extract_strided_slice %211 {offsets = [0, 128], sizes = [2, 64], strides = [1, 1]} : vector<2x256xf32> to vector<2x64xf32>
    %229 = math.tanh %228 : vector<2x64xf32>
    %230 = vector.extract_strided_slice %211 {offsets = [0, 192], sizes = [2, 64], strides = [1, 1]} : vector<2x256xf32> to vector<2x64xf32>
    %cst_128 = arith.constant 0.000000e+00 : f32
    %231 = vector.broadcast %cst_128 : f32 to vector<2x64xf32>
    %232 = arith.subf %231, %230 : vector<2x64xf32>
    %233 = math.exp %232 : vector<2x64xf32>
    %cst_129 = arith.constant 1.000000e+00 : f32
    %234 = vector.broadcast %cst_129 : f32 to vector<2x64xf32>
    %235 = arith.addf %234, %233 : vector<2x64xf32>
    %cst_130 = arith.constant 1.000000e+00 : f32
    %236 = vector.broadcast %cst_130 : f32 to vector<2x64xf32>
    %237 = arith.divf %236, %235 : vector<2x64xf32>
    %238 = arith.mulf %227, %201 : vector<2x64xf32>
    %239 = arith.mulf %219, %229 : vector<2x64xf32>
    %240 = arith.addf %238, %239 : vector<2x64xf32>
    %241 = math.tanh %240 : vector<2x64xf32>
    %242 = arith.mulf %237, %241 : vector<2x64xf32>
    %c0_131 = arith.constant 0 : index
    %c0_132 = arith.constant 0 : index
    %c0_133 = arith.constant 0 : index
    %243 = vector.load %arg7[%c0_131, %c0_132, %c0_133] : memref<4x128x256xf32, #tpu.memory_space<vmem>>, vector<1x128x256xf32>
    %244 = vector.shape_cast %243 : vector<1x128x256xf32> to vector<128x256xf32>
    %c0_134 = arith.constant 0 : index
    %c0_135 = arith.constant 0 : index
    %c0_136 = arith.constant 0 : index
    %245 = vector.load %arg8[%c0_134, %c0_135, %c0_136] : memref<4x64x256xf32, #tpu.memory_space<vmem>>, vector<1x64x256xf32>
    %246 = vector.shape_cast %245 : vector<1x64x256xf32> to vector<64x256xf32>
    %c0_137 = arith.constant 0 : index
    %c0_138 = arith.constant 0 : index
    %247 = vector.load %arg9[%c0_137, %c0_138] : memref<4x256xf32, #tpu.memory_space<vmem>>, vector<1x256xf32>
    %cst_139 = arith.constant dense<0.000000e+00> : vector<2x256xf32>
    %248 = tpu.matmul %5, %244, %cst_139 {dimension_numbers = #tpu.dot_dimension_numbers<[1], [0], [0], [1], [0, 0, 1, 1], [], []>} : vector<2x128xf32>, vector<128x256xf32>, vector<2x256xf32> -> vector<2x256xf32>
    %cst_140 = arith.constant dense<0.000000e+00> : vector<2x256xf32>
    %249 = tpu.matmul %6, %246, %cst_140 {dimension_numbers = #tpu.dot_dimension_numbers<[1], [0], [0], [1], [0, 0, 1, 1], [], []>} : vector<2x64xf32>, vector<64x256xf32>, vector<2x256xf32> -> vector<2x256xf32>
    %250 = arith.addf %248, %249 : vector<2x256xf32>
    %251 = vector.broadcast %247 : vector<1x256xf32> to vector<2x256xf32>
    %252 = arith.addf %250, %251 : vector<2x256xf32>
    %253 = vector.extract_strided_slice %252 {offsets = [0, 0], sizes = [2, 64], strides = [1, 1]} : vector<2x256xf32> to vector<2x64xf32>
    %cst_141 = arith.constant 0.000000e+00 : f32
    %254 = vector.broadcast %cst_141 : f32 to vector<2x64xf32>
    %255 = arith.subf %254, %253 : vector<2x64xf32>
    %256 = math.exp %255 : vector<2x64xf32>
    %cst_142 = arith.constant 1.000000e+00 : f32
    %257 = vector.broadcast %cst_142 : f32 to vector<2x64xf32>
    %258 = arith.addf %257, %256 : vector<2x64xf32>
    %cst_143 = arith.constant 1.000000e+00 : f32
    %259 = vector.broadcast %cst_143 : f32 to vector<2x64xf32>
    %260 = arith.divf %259, %258 : vector<2x64xf32>
    %261 = vector.extract_strided_slice %252 {offsets = [0, 64], sizes = [2, 64], strides = [1, 1]} : vector<2x256xf32> to vector<2x64xf32>
    %cst_144 = arith.constant 0.000000e+00 : f32
    %262 = vector.broadcast %cst_144 : f32 to vector<2x64xf32>
    %263 = arith.subf %262, %261 : vector<2x64xf32>
    %264 = math.exp %263 : vector<2x64xf32>
    %cst_145 = arith.constant 1.000000e+00 : f32
    %265 = vector.broadcast %cst_145 : f32 to vector<2x64xf32>
    %266 = arith.addf %265, %264 : vector<2x64xf32>
    %cst_146 = arith.constant 1.000000e+00 : f32
    %267 = vector.broadcast %cst_146 : f32 to vector<2x64xf32>
    %268 = arith.divf %267, %266 : vector<2x64xf32>
    %269 = vector.extract_strided_slice %252 {offsets = [0, 128], sizes = [2, 64], strides = [1, 1]} : vector<2x256xf32> to vector<2x64xf32>
    %270 = math.tanh %269 : vector<2x64xf32>
    %271 = vector.extract_strided_slice %252 {offsets = [0, 192], sizes = [2, 64], strides = [1, 1]} : vector<2x256xf32> to vector<2x64xf32>
    %cst_147 = arith.constant 0.000000e+00 : f32
    %272 = vector.broadcast %cst_147 : f32 to vector<2x64xf32>
    %273 = arith.subf %272, %271 : vector<2x64xf32>
    %274 = math.exp %273 : vector<2x64xf32>
    %cst_148 = arith.constant 1.000000e+00 : f32
    %275 = vector.broadcast %cst_148 : f32 to vector<2x64xf32>
    %276 = arith.addf %275, %274 : vector<2x64xf32>
    %cst_149 = arith.constant 1.000000e+00 : f32
    %277 = vector.broadcast %cst_149 : f32 to vector<2x64xf32>
    %278 = arith.divf %277, %276 : vector<2x64xf32>
    %279 = arith.mulf %268, %6 : vector<2x64xf32>
    %280 = arith.mulf %260, %270 : vector<2x64xf32>
    %281 = arith.addf %279, %280 : vector<2x64xf32>
    %282 = math.tanh %281 : vector<2x64xf32>
    %283 = arith.mulf %278, %282 : vector<2x64xf32>
    %c0_150 = arith.constant 0 : index
    %c0_151 = arith.constant 0 : index
    %c0_152 = arith.constant 0 : index
    %284 = vector.load %arg10[%c0_150, %c0_151, %c0_152] : memref<6x64x64xf32, #tpu.memory_space<vmem>>, vector<1x64x64xf32>
    %285 = vector.shape_cast %284 : vector<1x64x64xf32> to vector<64x64xf32>
    %c1_153 = arith.constant 1 : index
    %c0_154 = arith.constant 0 : index
    %c0_155 = arith.constant 0 : index
    %286 = vector.load %arg11[%c1_153, %c0_154, %c0_155] : memref<4x64x64xf32, #tpu.memory_space<vmem>>, vector<1x64x64xf32>
    %287 = vector.shape_cast %286 : vector<1x64x64xf32> to vector<64x64xf32>
    %cst_156 = arith.constant dense<0.000000e+00> : vector<2x64xf32>
    %288 = tpu.matmul %283, %285, %cst_156 {dimension_numbers = #tpu.dot_dimension_numbers<[1], [0], [0], [1], [0, 0, 1, 1], [], []>} : vector<2x64xf32>, vector<64x64xf32>, vector<2x64xf32> -> vector<2x64xf32>
    %cst_157 = arith.constant dense<0xFF800000> : vector<2xf32>
    %289 = vector.multi_reduction <maximumf>, %288, %cst_157 [1] : vector<2x64xf32> to vector<2xf32>
    %290 = vector.shape_cast %289 : vector<2xf32> to vector<2x1xf32>
    %291 = vector.broadcast %290 : vector<2x1xf32> to vector<2x64xf32>
    %292 = arith.subf %288, %291 : vector<2x64xf32>
    %293 = math.exp %292 : vector<2x64xf32>
    %cst_158 = arith.constant dense<0.000000e+00> : vector<2x64xf32>
    %294 = tpu.matmul %293, %287, %cst_158 {dimension_numbers = #tpu.dot_dimension_numbers<[1], [0], [0], [1], [0, 0, 1, 1], [], []>} : vector<2x64xf32>, vector<64x64xf32>, vector<2x64xf32> -> vector<2x64xf32>
    %295 = arith.divf %293, %294 : vector<2x64xf32>
    %c1_159 = arith.constant 1 : index
    %c0_160 = arith.constant 0 : index
    %c0_161 = arith.constant 0 : index
    %296 = vector.load %arg10[%c1_159, %c0_160, %c0_161] : memref<6x64x64xf32, #tpu.memory_space<vmem>>, vector<1x64x64xf32>
    %297 = vector.shape_cast %296 : vector<1x64x64xf32> to vector<64x64xf32>
    %c1_162 = arith.constant 1 : index
    %c0_163 = arith.constant 0 : index
    %c0_164 = arith.constant 0 : index
    %298 = vector.load %arg11[%c1_162, %c0_163, %c0_164] : memref<4x64x64xf32, #tpu.memory_space<vmem>>, vector<1x64x64xf32>
    %299 = vector.shape_cast %298 : vector<1x64x64xf32> to vector<64x64xf32>
    %cst_165 = arith.constant dense<0.000000e+00> : vector<2x64xf32>
    %300 = tpu.matmul %281, %297, %cst_165 {dimension_numbers = #tpu.dot_dimension_numbers<[1], [0], [0], [1], [0, 0, 1, 1], [], []>} : vector<2x64xf32>, vector<64x64xf32>, vector<2x64xf32> -> vector<2x64xf32>
    %cst_166 = arith.constant dense<0xFF800000> : vector<2xf32>
    %301 = vector.multi_reduction <maximumf>, %300, %cst_166 [1] : vector<2x64xf32> to vector<2xf32>
    %302 = vector.shape_cast %301 : vector<2xf32> to vector<2x1xf32>
    %303 = vector.broadcast %302 : vector<2x1xf32> to vector<2x64xf32>
    %304 = arith.subf %300, %303 : vector<2x64xf32>
    %305 = math.exp %304 : vector<2x64xf32>
    %cst_167 = arith.constant dense<0.000000e+00> : vector<2x64xf32>
    %306 = tpu.matmul %305, %299, %cst_167 {dimension_numbers = #tpu.dot_dimension_numbers<[1], [0], [0], [1], [0, 0, 1, 1], [], []>} : vector<2x64xf32>, vector<64x64xf32>, vector<2x64xf32> -> vector<2x64xf32>
    %307 = arith.divf %305, %306 : vector<2x64xf32>
    %c1_168 = arith.constant 1 : index
    %c0_169 = arith.constant 0 : index
    %c0_170 = arith.constant 0 : index
    %308 = vector.load %arg7[%c1_168, %c0_169, %c0_170] : memref<4x128x256xf32, #tpu.memory_space<vmem>>, vector<1x128x256xf32>
    %309 = vector.shape_cast %308 : vector<1x128x256xf32> to vector<128x256xf32>
    %c1_171 = arith.constant 1 : index
    %c0_172 = arith.constant 0 : index
    %c0_173 = arith.constant 0 : index
    %310 = vector.load %arg8[%c1_171, %c0_172, %c0_173] : memref<4x64x256xf32, #tpu.memory_space<vmem>>, vector<1x64x256xf32>
    %311 = vector.shape_cast %310 : vector<1x64x256xf32> to vector<64x256xf32>
    %c1_174 = arith.constant 1 : index
    %c0_175 = arith.constant 0 : index
    %312 = vector.load %arg9[%c1_174, %c0_175] : memref<4x256xf32, #tpu.memory_space<vmem>>, vector<1x256xf32>
    %cst_176 = arith.constant dense<0.000000e+00> : vector<2x256xf32>
    %313 = tpu.matmul %5, %309, %cst_176 {dimension_numbers = #tpu.dot_dimension_numbers<[1], [0], [0], [1], [0, 0, 1, 1], [], []>} : vector<2x128xf32>, vector<128x256xf32>, vector<2x256xf32> -> vector<2x256xf32>
    %cst_177 = arith.constant dense<0.000000e+00> : vector<2x256xf32>
    %314 = tpu.matmul %295, %311, %cst_177 {dimension_numbers = #tpu.dot_dimension_numbers<[1], [0], [0], [1], [0, 0, 1, 1], [], []>} : vector<2x64xf32>, vector<64x256xf32>, vector<2x256xf32> -> vector<2x256xf32>
    %315 = arith.addf %313, %314 : vector<2x256xf32>
    %316 = vector.broadcast %312 : vector<1x256xf32> to vector<2x256xf32>
    %317 = arith.addf %315, %316 : vector<2x256xf32>
    %318 = vector.extract_strided_slice %317 {offsets = [0, 0], sizes = [2, 64], strides = [1, 1]} : vector<2x256xf32> to vector<2x64xf32>
    %cst_178 = arith.constant 0.000000e+00 : f32
    %319 = vector.broadcast %cst_178 : f32 to vector<2x64xf32>
    %320 = arith.subf %319, %318 : vector<2x64xf32>
    %321 = math.exp %320 : vector<2x64xf32>
    %cst_179 = arith.constant 1.000000e+00 : f32
    %322 = vector.broadcast %cst_179 : f32 to vector<2x64xf32>
    %323 = arith.addf %322, %321 : vector<2x64xf32>
    %cst_180 = arith.constant 1.000000e+00 : f32
    %324 = vector.broadcast %cst_180 : f32 to vector<2x64xf32>
    %325 = arith.divf %324, %323 : vector<2x64xf32>
    %326 = vector.extract_strided_slice %317 {offsets = [0, 64], sizes = [2, 64], strides = [1, 1]} : vector<2x256xf32> to vector<2x64xf32>
    %cst_181 = arith.constant 0.000000e+00 : f32
    %327 = vector.broadcast %cst_181 : f32 to vector<2x64xf32>
    %328 = arith.subf %327, %326 : vector<2x64xf32>
    %329 = math.exp %328 : vector<2x64xf32>
    %cst_182 = arith.constant 1.000000e+00 : f32
    %330 = vector.broadcast %cst_182 : f32 to vector<2x64xf32>
    %331 = arith.addf %330, %329 : vector<2x64xf32>
    %cst_183 = arith.constant 1.000000e+00 : f32
    %332 = vector.broadcast %cst_183 : f32 to vector<2x64xf32>
    %333 = arith.divf %332, %331 : vector<2x64xf32>
    %334 = vector.extract_strided_slice %317 {offsets = [0, 128], sizes = [2, 64], strides = [1, 1]} : vector<2x256xf32> to vector<2x64xf32>
    %335 = math.tanh %334 : vector<2x64xf32>
    %336 = vector.extract_strided_slice %317 {offsets = [0, 192], sizes = [2, 64], strides = [1, 1]} : vector<2x256xf32> to vector<2x64xf32>
    %cst_184 = arith.constant 0.000000e+00 : f32
    %337 = vector.broadcast %cst_184 : f32 to vector<2x64xf32>
    %338 = arith.subf %337, %336 : vector<2x64xf32>
    %339 = math.exp %338 : vector<2x64xf32>
    %cst_185 = arith.constant 1.000000e+00 : f32
    %340 = vector.broadcast %cst_185 : f32 to vector<2x64xf32>
    %341 = arith.addf %340, %339 : vector<2x64xf32>
    %cst_186 = arith.constant 1.000000e+00 : f32
    %342 = vector.broadcast %cst_186 : f32 to vector<2x64xf32>
    %343 = arith.divf %342, %341 : vector<2x64xf32>
    %344 = arith.mulf %333, %307 : vector<2x64xf32>
    %345 = arith.mulf %325, %335 : vector<2x64xf32>
    %346 = arith.addf %344, %345 : vector<2x64xf32>
    %347 = math.tanh %346 : vector<2x64xf32>
    %348 = arith.mulf %343, %347 : vector<2x64xf32>
    %c2_187 = arith.constant 2 : index
    %c0_188 = arith.constant 0 : index
    %c0_189 = arith.constant 0 : index
    %349 = vector.load %arg10[%c2_187, %c0_188, %c0_189] : memref<6x64x64xf32, #tpu.memory_space<vmem>>, vector<1x64x64xf32>
    %350 = vector.shape_cast %349 : vector<1x64x64xf32> to vector<64x64xf32>
    %c2_190 = arith.constant 2 : index
    %c0_191 = arith.constant 0 : index
    %c0_192 = arith.constant 0 : index
    %351 = vector.load %arg11[%c2_190, %c0_191, %c0_192] : memref<4x64x64xf32, #tpu.memory_space<vmem>>, vector<1x64x64xf32>
    %352 = vector.shape_cast %351 : vector<1x64x64xf32> to vector<64x64xf32>
    %cst_193 = arith.constant dense<0.000000e+00> : vector<2x64xf32>
    %353 = tpu.matmul %348, %350, %cst_193 {dimension_numbers = #tpu.dot_dimension_numbers<[1], [0], [0], [1], [0, 0, 1, 1], [], []>} : vector<2x64xf32>, vector<64x64xf32>, vector<2x64xf32> -> vector<2x64xf32>
    %cst_194 = arith.constant dense<0xFF800000> : vector<2xf32>
    %354 = vector.multi_reduction <maximumf>, %353, %cst_194 [1] : vector<2x64xf32> to vector<2xf32>
    %355 = vector.shape_cast %354 : vector<2xf32> to vector<2x1xf32>
    %356 = vector.broadcast %355 : vector<2x1xf32> to vector<2x64xf32>
    %357 = arith.subf %353, %356 : vector<2x64xf32>
    %358 = math.exp %357 : vector<2x64xf32>
    %cst_195 = arith.constant dense<0.000000e+00> : vector<2x64xf32>
    %359 = tpu.matmul %358, %352, %cst_195 {dimension_numbers = #tpu.dot_dimension_numbers<[1], [0], [0], [1], [0, 0, 1, 1], [], []>} : vector<2x64xf32>, vector<64x64xf32>, vector<2x64xf32> -> vector<2x64xf32>
    %360 = arith.divf %358, %359 : vector<2x64xf32>
    %c3_196 = arith.constant 3 : index
    %c0_197 = arith.constant 0 : index
    %c0_198 = arith.constant 0 : index
    %361 = vector.load %arg10[%c3_196, %c0_197, %c0_198] : memref<6x64x64xf32, #tpu.memory_space<vmem>>, vector<1x64x64xf32>
    %362 = vector.shape_cast %361 : vector<1x64x64xf32> to vector<64x64xf32>
    %c2_199 = arith.constant 2 : index
    %c0_200 = arith.constant 0 : index
    %c0_201 = arith.constant 0 : index
    %363 = vector.load %arg11[%c2_199, %c0_200, %c0_201] : memref<4x64x64xf32, #tpu.memory_space<vmem>>, vector<1x64x64xf32>
    %364 = vector.shape_cast %363 : vector<1x64x64xf32> to vector<64x64xf32>
    %cst_202 = arith.constant dense<0.000000e+00> : vector<2x64xf32>
    %365 = tpu.matmul %346, %362, %cst_202 {dimension_numbers = #tpu.dot_dimension_numbers<[1], [0], [0], [1], [0, 0, 1, 1], [], []>} : vector<2x64xf32>, vector<64x64xf32>, vector<2x64xf32> -> vector<2x64xf32>
    %cst_203 = arith.constant dense<0xFF800000> : vector<2xf32>
    %366 = vector.multi_reduction <maximumf>, %365, %cst_203 [1] : vector<2x64xf32> to vector<2xf32>
    %367 = vector.shape_cast %366 : vector<2xf32> to vector<2x1xf32>
    %368 = vector.broadcast %367 : vector<2x1xf32> to vector<2x64xf32>
    %369 = arith.subf %365, %368 : vector<2x64xf32>
    %370 = math.exp %369 : vector<2x64xf32>
    %cst_204 = arith.constant dense<0.000000e+00> : vector<2x64xf32>
    %371 = tpu.matmul %370, %364, %cst_204 {dimension_numbers = #tpu.dot_dimension_numbers<[1], [0], [0], [1], [0, 0, 1, 1], [], []>} : vector<2x64xf32>, vector<64x64xf32>, vector<2x64xf32> -> vector<2x64xf32>
    %372 = arith.divf %370, %371 : vector<2x64xf32>
    %c2_205 = arith.constant 2 : index
    %c0_206 = arith.constant 0 : index
    %c0_207 = arith.constant 0 : index
    %373 = vector.load %arg7[%c2_205, %c0_206, %c0_207] : memref<4x128x256xf32, #tpu.memory_space<vmem>>, vector<1x128x256xf32>
    %374 = vector.shape_cast %373 : vector<1x128x256xf32> to vector<128x256xf32>
    %c2_208 = arith.constant 2 : index
    %c0_209 = arith.constant 0 : index
    %c0_210 = arith.constant 0 : index
    %375 = vector.load %arg8[%c2_208, %c0_209, %c0_210] : memref<4x64x256xf32, #tpu.memory_space<vmem>>, vector<1x64x256xf32>
    %376 = vector.shape_cast %375 : vector<1x64x256xf32> to vector<64x256xf32>
    %c2_211 = arith.constant 2 : index
    %c0_212 = arith.constant 0 : index
    %377 = vector.load %arg9[%c2_211, %c0_212] : memref<4x256xf32, #tpu.memory_space<vmem>>, vector<1x256xf32>
    %cst_213 = arith.constant dense<0.000000e+00> : vector<2x256xf32>
    %378 = tpu.matmul %5, %374, %cst_213 {dimension_numbers = #tpu.dot_dimension_numbers<[1], [0], [0], [1], [0, 0, 1, 1], [], []>} : vector<2x128xf32>, vector<128x256xf32>, vector<2x256xf32> -> vector<2x256xf32>
    %cst_214 = arith.constant dense<0.000000e+00> : vector<2x256xf32>
    %379 = tpu.matmul %360, %376, %cst_214 {dimension_numbers = #tpu.dot_dimension_numbers<[1], [0], [0], [1], [0, 0, 1, 1], [], []>} : vector<2x64xf32>, vector<64x256xf32>, vector<2x256xf32> -> vector<2x256xf32>
    %380 = arith.addf %378, %379 : vector<2x256xf32>
    %381 = vector.broadcast %377 : vector<1x256xf32> to vector<2x256xf32>
    %382 = arith.addf %380, %381 : vector<2x256xf32>
    %383 = vector.extract_strided_slice %382 {offsets = [0, 0], sizes = [2, 64], strides = [1, 1]} : vector<2x256xf32> to vector<2x64xf32>
    %cst_215 = arith.constant 0.000000e+00 : f32
    %384 = vector.broadcast %cst_215 : f32 to vector<2x64xf32>
    %385 = arith.subf %384, %383 : vector<2x64xf32>
    %386 = math.exp %385 : vector<2x64xf32>
    %cst_216 = arith.constant 1.000000e+00 : f32
    %387 = vector.broadcast %cst_216 : f32 to vector<2x64xf32>
    %388 = arith.addf %387, %386 : vector<2x64xf32>
    %cst_217 = arith.constant 1.000000e+00 : f32
    %389 = vector.broadcast %cst_217 : f32 to vector<2x64xf32>
    %390 = arith.divf %389, %388 : vector<2x64xf32>
    %391 = vector.extract_strided_slice %382 {offsets = [0, 64], sizes = [2, 64], strides = [1, 1]} : vector<2x256xf32> to vector<2x64xf32>
    %cst_218 = arith.constant 0.000000e+00 : f32
    %392 = vector.broadcast %cst_218 : f32 to vector<2x64xf32>
    %393 = arith.subf %392, %391 : vector<2x64xf32>
    %394 = math.exp %393 : vector<2x64xf32>
    %cst_219 = arith.constant 1.000000e+00 : f32
    %395 = vector.broadcast %cst_219 : f32 to vector<2x64xf32>
    %396 = arith.addf %395, %394 : vector<2x64xf32>
    %cst_220 = arith.constant 1.000000e+00 : f32
    %397 = vector.broadcast %cst_220 : f32 to vector<2x64xf32>
    %398 = arith.divf %397, %396 : vector<2x64xf32>
    %399 = vector.extract_strided_slice %382 {offsets = [0, 128], sizes = [2, 64], strides = [1, 1]} : vector<2x256xf32> to vector<2x64xf32>
    %400 = math.tanh %399 : vector<2x64xf32>
    %401 = vector.extract_strided_slice %382 {offsets = [0, 192], sizes = [2, 64], strides = [1, 1]} : vector<2x256xf32> to vector<2x64xf32>
    %cst_221 = arith.constant 0.000000e+00 : f32
    %402 = vector.broadcast %cst_221 : f32 to vector<2x64xf32>
    %403 = arith.subf %402, %401 : vector<2x64xf32>
    %404 = math.exp %403 : vector<2x64xf32>
    %cst_222 = arith.constant 1.000000e+00 : f32
    %405 = vector.broadcast %cst_222 : f32 to vector<2x64xf32>
    %406 = arith.addf %405, %404 : vector<2x64xf32>
    %cst_223 = arith.constant 1.000000e+00 : f32
    %407 = vector.broadcast %cst_223 : f32 to vector<2x64xf32>
    %408 = arith.divf %407, %406 : vector<2x64xf32>
    %409 = arith.mulf %398, %372 : vector<2x64xf32>
    %410 = arith.mulf %390, %400 : vector<2x64xf32>
    %411 = arith.addf %409, %410 : vector<2x64xf32>
    %412 = math.tanh %411 : vector<2x64xf32>
    %413 = arith.mulf %408, %412 : vector<2x64xf32>
    %c4_224 = arith.constant 4 : index
    %c0_225 = arith.constant 0 : index
    %c0_226 = arith.constant 0 : index
    %414 = vector.load %arg10[%c4_224, %c0_225, %c0_226] : memref<6x64x64xf32, #tpu.memory_space<vmem>>, vector<1x64x64xf32>
    %415 = vector.shape_cast %414 : vector<1x64x64xf32> to vector<64x64xf32>
    %c3_227 = arith.constant 3 : index
    %c0_228 = arith.constant 0 : index
    %c0_229 = arith.constant 0 : index
    %416 = vector.load %arg11[%c3_227, %c0_228, %c0_229] : memref<4x64x64xf32, #tpu.memory_space<vmem>>, vector<1x64x64xf32>
    %417 = vector.shape_cast %416 : vector<1x64x64xf32> to vector<64x64xf32>
    %cst_230 = arith.constant dense<0.000000e+00> : vector<2x64xf32>
    %418 = tpu.matmul %413, %415, %cst_230 {dimension_numbers = #tpu.dot_dimension_numbers<[1], [0], [0], [1], [0, 0, 1, 1], [], []>} : vector<2x64xf32>, vector<64x64xf32>, vector<2x64xf32> -> vector<2x64xf32>
    %cst_231 = arith.constant dense<0xFF800000> : vector<2xf32>
    %419 = vector.multi_reduction <maximumf>, %418, %cst_231 [1] : vector<2x64xf32> to vector<2xf32>
    %420 = vector.shape_cast %419 : vector<2xf32> to vector<2x1xf32>
    %421 = vector.broadcast %420 : vector<2x1xf32> to vector<2x64xf32>
    %422 = arith.subf %418, %421 : vector<2x64xf32>
    %423 = math.exp %422 : vector<2x64xf32>
    %cst_232 = arith.constant dense<0.000000e+00> : vector<2x64xf32>
    %424 = tpu.matmul %423, %417, %cst_232 {dimension_numbers = #tpu.dot_dimension_numbers<[1], [0], [0], [1], [0, 0, 1, 1], [], []>} : vector<2x64xf32>, vector<64x64xf32>, vector<2x64xf32> -> vector<2x64xf32>
    %425 = arith.divf %423, %424 : vector<2x64xf32>
    %c5_233 = arith.constant 5 : index
    %c0_234 = arith.constant 0 : index
    %c0_235 = arith.constant 0 : index
    %426 = vector.load %arg10[%c5_233, %c0_234, %c0_235] : memref<6x64x64xf32, #tpu.memory_space<vmem>>, vector<1x64x64xf32>
    %427 = vector.shape_cast %426 : vector<1x64x64xf32> to vector<64x64xf32>
    %c3_236 = arith.constant 3 : index
    %c0_237 = arith.constant 0 : index
    %c0_238 = arith.constant 0 : index
    %428 = vector.load %arg11[%c3_236, %c0_237, %c0_238] : memref<4x64x64xf32, #tpu.memory_space<vmem>>, vector<1x64x64xf32>
    %429 = vector.shape_cast %428 : vector<1x64x64xf32> to vector<64x64xf32>
    %cst_239 = arith.constant dense<0.000000e+00> : vector<2x64xf32>
    %430 = tpu.matmul %411, %427, %cst_239 {dimension_numbers = #tpu.dot_dimension_numbers<[1], [0], [0], [1], [0, 0, 1, 1], [], []>} : vector<2x64xf32>, vector<64x64xf32>, vector<2x64xf32> -> vector<2x64xf32>
    %cst_240 = arith.constant dense<0xFF800000> : vector<2xf32>
    %431 = vector.multi_reduction <maximumf>, %430, %cst_240 [1] : vector<2x64xf32> to vector<2xf32>
    %432 = vector.shape_cast %431 : vector<2xf32> to vector<2x1xf32>
    %433 = vector.broadcast %432 : vector<2x1xf32> to vector<2x64xf32>
    %434 = arith.subf %430, %433 : vector<2x64xf32>
    %435 = math.exp %434 : vector<2x64xf32>
    %cst_241 = arith.constant dense<0.000000e+00> : vector<2x64xf32>
    %436 = tpu.matmul %435, %429, %cst_241 {dimension_numbers = #tpu.dot_dimension_numbers<[1], [0], [0], [1], [0, 0, 1, 1], [], []>} : vector<2x64xf32>, vector<64x64xf32>, vector<2x64xf32> -> vector<2x64xf32>
    %437 = arith.divf %435, %436 : vector<2x64xf32>
    %c3_242 = arith.constant 3 : index
    %c0_243 = arith.constant 0 : index
    %c0_244 = arith.constant 0 : index
    %438 = vector.load %arg7[%c3_242, %c0_243, %c0_244] : memref<4x128x256xf32, #tpu.memory_space<vmem>>, vector<1x128x256xf32>
    %439 = vector.shape_cast %438 : vector<1x128x256xf32> to vector<128x256xf32>
    %c3_245 = arith.constant 3 : index
    %c0_246 = arith.constant 0 : index
    %c0_247 = arith.constant 0 : index
    %440 = vector.load %arg8[%c3_245, %c0_246, %c0_247] : memref<4x64x256xf32, #tpu.memory_space<vmem>>, vector<1x64x256xf32>
    %441 = vector.shape_cast %440 : vector<1x64x256xf32> to vector<64x256xf32>
    %c3_248 = arith.constant 3 : index
    %c0_249 = arith.constant 0 : index
    %442 = vector.load %arg9[%c3_248, %c0_249] : memref<4x256xf32, #tpu.memory_space<vmem>>, vector<1x256xf32>
    %cst_250 = arith.constant dense<0.000000e+00> : vector<2x256xf32>
    %443 = tpu.matmul %5, %439, %cst_250 {dimension_numbers = #tpu.dot_dimension_numbers<[1], [0], [0], [1], [0, 0, 1, 1], [], []>} : vector<2x128xf32>, vector<128x256xf32>, vector<2x256xf32> -> vector<2x256xf32>
    %cst_251 = arith.constant dense<0.000000e+00> : vector<2x256xf32>
    %444 = tpu.matmul %425, %441, %cst_251 {dimension_numbers = #tpu.dot_dimension_numbers<[1], [0], [0], [1], [0, 0, 1, 1], [], []>} : vector<2x64xf32>, vector<64x256xf32>, vector<2x256xf32> -> vector<2x256xf32>
    %445 = arith.addf %443, %444 : vector<2x256xf32>
    %446 = vector.broadcast %442 : vector<1x256xf32> to vector<2x256xf32>
    %447 = arith.addf %445, %446 : vector<2x256xf32>
    %448 = vector.extract_strided_slice %447 {offsets = [0, 0], sizes = [2, 64], strides = [1, 1]} : vector<2x256xf32> to vector<2x64xf32>
    %cst_252 = arith.constant 0.000000e+00 : f32
    %449 = vector.broadcast %cst_252 : f32 to vector<2x64xf32>
    %450 = arith.subf %449, %448 : vector<2x64xf32>
    %451 = math.exp %450 : vector<2x64xf32>
    %cst_253 = arith.constant 1.000000e+00 : f32
    %452 = vector.broadcast %cst_253 : f32 to vector<2x64xf32>
    %453 = arith.addf %452, %451 : vector<2x64xf32>
    %cst_254 = arith.constant 1.000000e+00 : f32
    %454 = vector.broadcast %cst_254 : f32 to vector<2x64xf32>
    %455 = arith.divf %454, %453 : vector<2x64xf32>
    %456 = vector.extract_strided_slice %447 {offsets = [0, 64], sizes = [2, 64], strides = [1, 1]} : vector<2x256xf32> to vector<2x64xf32>
    %cst_255 = arith.constant 0.000000e+00 : f32
    %457 = vector.broadcast %cst_255 : f32 to vector<2x64xf32>
    %458 = arith.subf %457, %456 : vector<2x64xf32>
    %459 = math.exp %458 : vector<2x64xf32>
    %cst_256 = arith.constant 1.000000e+00 : f32
    %460 = vector.broadcast %cst_256 : f32 to vector<2x64xf32>
    %461 = arith.addf %460, %459 : vector<2x64xf32>
    %cst_257 = arith.constant 1.000000e+00 : f32
    %462 = vector.broadcast %cst_257 : f32 to vector<2x64xf32>
    %463 = arith.divf %462, %461 : vector<2x64xf32>
    %464 = vector.extract_strided_slice %447 {offsets = [0, 128], sizes = [2, 64], strides = [1, 1]} : vector<2x256xf32> to vector<2x64xf32>
    %465 = math.tanh %464 : vector<2x64xf32>
    %466 = arith.mulf %463, %437 : vector<2x64xf32>
    %467 = arith.mulf %455, %465 : vector<2x64xf32>
    %468 = arith.addf %466, %467 : vector<2x64xf32>
    %c0_258 = arith.constant 0 : index
    %c0_259 = arith.constant 0 : index
    %469 = vector.load %arg12[%c0_258, %c0_259] : memref<16x1xf32, #tpu.memory_space<vmem>>, vector<16x1xf32>
    %470 = vector.shape_cast %469 : vector<16x1xf32> to vector<1x16x1xf32>
    %471 = vector.shape_cast %242 : vector<2x64xf32> to vector<2x1x64xf32>
    %472 = vector.broadcast %470 : vector<1x16x1xf32> to vector<2x16x64xf32>
    %473 = vector.broadcast %471 : vector<2x1x64xf32> to vector<2x16x64xf32>
    %474 = arith.mulf %472, %473 : vector<2x16x64xf32>
    %c0_260 = arith.constant 0 : index
    %c0_261 = arith.constant 0 : index
    %475 = vector.load %arg13[%c0_260, %c0_261] : memref<16x1xf32, #tpu.memory_space<vmem>>, vector<16x1xf32>
    %476 = vector.shape_cast %475 : vector<16x1xf32> to vector<1x16x1xf32>
    %477 = vector.broadcast %476 : vector<1x16x1xf32> to vector<2x16x64xf32>
    %478 = arith.addf %474, %477 : vector<2x16x64xf32>
    %cst_262 = arith.constant dense<0xFF800000> : vector<2x16xf32>
    %479 = vector.multi_reduction <maximumf>, %478, %cst_262 [2] : vector<2x16x64xf32> to vector<2x16xf32>
    %480 = vector.shape_cast %479 : vector<2x16xf32> to vector<2x16x1xf32>
    %481 = vector.broadcast %480 : vector<2x16x1xf32> to vector<2x16x64xf32>
    %482 = arith.subf %478, %481 : vector<2x16x64xf32>
    %483 = math.exp %482 : vector<2x16x64xf32>
    %cst_263 = arith.constant dense<0.000000e+00> : vector<2x16xf32>
    %484 = vector.multi_reduction <add>, %483, %cst_263 [2] : vector<2x16x64xf32> to vector<2x16xf32>
    %485 = vector.shape_cast %484 : vector<2x16xf32> to vector<2x16x1xf32>
    %486 = vector.broadcast %485 : vector<2x16x1xf32> to vector<2x16x64xf32>
    %487 = arith.divf %483, %486 : vector<2x16x64xf32>
    %c0_264 = arith.constant 0 : index
    %c0_265 = arith.constant 0 : index
    %488 = vector.load %arg14[%c0_264, %c0_265] : memref<16x1xf32, #tpu.memory_space<vmem>>, vector<16x1xf32>
    %489 = vector.shape_cast %488 : vector<16x1xf32> to vector<1x16x1xf32>
    %490 = vector.broadcast %489 : vector<1x16x1xf32> to vector<2x16x64xf32>
    %491 = arith.mulf %490, %487 : vector<2x16x64xf32>
    %cst_266 = arith.constant dense<0.000000e+00> : vector<2x64xf32>
    %492 = vector.multi_reduction <add>, %491, %cst_266 [1] : vector<2x16x64xf32> to vector<2x64xf32>
    %cst_267 = arith.constant dense<0.000000e+00> : vector<2xf32>
    %493 = vector.multi_reduction <add>, %492, %cst_267 [1] : vector<2x64xf32> to vector<2xf32>
    %494 = vector.shape_cast %493 : vector<2xf32> to vector<2x1xf32>
    %cst_268 = arith.constant 6.400000e+01 : f32
    %495 = vector.broadcast %cst_268 : f32 to vector<2x1xf32>
    %496 = arith.divf %494, %495 : vector<2x1xf32>
    %497 = vector.broadcast %496 : vector<2x1xf32> to vector<2x64xf32>
    %498 = arith.subf %492, %497 : vector<2x64xf32>
    %499 = arith.mulf %498, %498 : vector<2x64xf32>
    %cst_269 = arith.constant dense<0.000000e+00> : vector<2xf32>
    %500 = vector.multi_reduction <add>, %499, %cst_269 [1] : vector<2x64xf32> to vector<2xf32>
    %501 = vector.shape_cast %500 : vector<2xf32> to vector<2x1xf32>
    %cst_270 = arith.constant 6.400000e+01 : f32
    %502 = vector.broadcast %cst_270 : f32 to vector<2x1xf32>
    %503 = arith.divf %501, %502 : vector<2x1xf32>
    %504 = vector.broadcast %496 : vector<2x1xf32> to vector<2x64xf32>
    %505 = arith.subf %492, %504 : vector<2x64xf32>
    %cst_271 = arith.constant 9.99999974E-6 : f32
    %506 = vector.broadcast %cst_271 : f32 to vector<2x1xf32>
    %507 = arith.addf %503, %506 : vector<2x1xf32>
    %508 = math.rsqrt %507 : vector<2x1xf32>
    %509 = vector.broadcast %508 : vector<2x1xf32> to vector<2x64xf32>
    %510 = arith.mulf %505, %509 : vector<2x64xf32>
    %c0_272 = arith.constant 0 : index
    %c0_273 = arith.constant 0 : index
    %511 = vector.load %arg15[%c0_272, %c0_273] : memref<2x64xf32, #tpu.memory_space<vmem>>, vector<1x64xf32>
    %512 = vector.broadcast %511 : vector<1x64xf32> to vector<2x64xf32>
    %513 = arith.mulf %510, %512 : vector<2x64xf32>
    %c1_274 = arith.constant 1 : index
    %c0_275 = arith.constant 0 : index
    %514 = vector.load %arg15[%c1_274, %c0_275] : memref<2x64xf32, #tpu.memory_space<vmem>>, vector<1x64xf32>
    %515 = vector.broadcast %514 : vector<1x64xf32> to vector<2x64xf32>
    %516 = arith.addf %513, %515 : vector<2x64xf32>
    %cst_276 = arith.constant 0.000000e+00 : f32
    %517 = vector.broadcast %cst_276 : f32 to vector<2x64xf32>
    %518 = arith.maximumf %516, %517 : vector<2x64xf32>
    %c0_277 = arith.constant 0 : index
    %c0_278 = arith.constant 0 : index
    %519 = vector.load %arg12[%c0_277, %c0_278] : memref<16x1xf32, #tpu.memory_space<vmem>>, vector<16x1xf32>
    %520 = vector.shape_cast %519 : vector<16x1xf32> to vector<1x16x1xf32>
    %521 = vector.shape_cast %468 : vector<2x64xf32> to vector<2x1x64xf32>
    %522 = vector.broadcast %520 : vector<1x16x1xf32> to vector<2x16x64xf32>
    %523 = vector.broadcast %521 : vector<2x1x64xf32> to vector<2x16x64xf32>
    %524 = arith.mulf %522, %523 : vector<2x16x64xf32>
    %c0_279 = arith.constant 0 : index
    %c0_280 = arith.constant 0 : index
    %525 = vector.load %arg13[%c0_279, %c0_280] : memref<16x1xf32, #tpu.memory_space<vmem>>, vector<16x1xf32>
    %526 = vector.shape_cast %525 : vector<16x1xf32> to vector<1x16x1xf32>
    %527 = vector.broadcast %526 : vector<1x16x1xf32> to vector<2x16x64xf32>
    %528 = arith.addf %524, %527 : vector<2x16x64xf32>
    %cst_281 = arith.constant dense<0xFF800000> : vector<2x16xf32>
    %529 = vector.multi_reduction <maximumf>, %528, %cst_281 [2] : vector<2x16x64xf32> to vector<2x16xf32>
    %530 = vector.shape_cast %529 : vector<2x16xf32> to vector<2x16x1xf32>
    %531 = vector.broadcast %530 : vector<2x16x1xf32> to vector<2x16x64xf32>
    %532 = arith.subf %528, %531 : vector<2x16x64xf32>
    %533 = math.exp %532 : vector<2x16x64xf32>
    %cst_282 = arith.constant dense<0.000000e+00> : vector<2x16xf32>
    %534 = vector.multi_reduction <add>, %533, %cst_282 [2] : vector<2x16x64xf32> to vector<2x16xf32>
    %535 = vector.shape_cast %534 : vector<2x16xf32> to vector<2x16x1xf32>
    %536 = vector.broadcast %535 : vector<2x16x1xf32> to vector<2x16x64xf32>
    %537 = arith.divf %533, %536 : vector<2x16x64xf32>
    %c0_283 = arith.constant 0 : index
    %c0_284 = arith.constant 0 : index
    %538 = vector.load %arg14[%c0_283, %c0_284] : memref<16x1xf32, #tpu.memory_space<vmem>>, vector<16x1xf32>
    %539 = vector.shape_cast %538 : vector<16x1xf32> to vector<1x16x1xf32>
    %540 = vector.broadcast %539 : vector<1x16x1xf32> to vector<2x16x64xf32>
    %541 = arith.mulf %540, %537 : vector<2x16x64xf32>
    %cst_285 = arith.constant dense<0.000000e+00> : vector<2x64xf32>
    %542 = vector.multi_reduction <add>, %541, %cst_285 [1] : vector<2x16x64xf32> to vector<2x64xf32>
    %cst_286 = arith.constant dense<0.000000e+00> : vector<2xf32>
    %543 = vector.multi_reduction <add>, %542, %cst_286 [1] : vector<2x64xf32> to vector<2xf32>
    %544 = vector.shape_cast %543 : vector<2xf32> to vector<2x1xf32>
    %cst_287 = arith.constant 6.400000e+01 : f32
    %545 = vector.broadcast %cst_287 : f32 to vector<2x1xf32>
    %546 = arith.divf %544, %545 : vector<2x1xf32>
    %547 = vector.broadcast %546 : vector<2x1xf32> to vector<2x64xf32>
    %548 = arith.subf %542, %547 : vector<2x64xf32>
    %549 = arith.mulf %548, %548 : vector<2x64xf32>
    %cst_288 = arith.constant dense<0.000000e+00> : vector<2xf32>
    %550 = vector.multi_reduction <add>, %549, %cst_288 [1] : vector<2x64xf32> to vector<2xf32>
    %551 = vector.shape_cast %550 : vector<2xf32> to vector<2x1xf32>
    %cst_289 = arith.constant 6.400000e+01 : f32
    %552 = vector.broadcast %cst_289 : f32 to vector<2x1xf32>
    %553 = arith.divf %551, %552 : vector<2x1xf32>
    %554 = vector.broadcast %546 : vector<2x1xf32> to vector<2x64xf32>
    %555 = arith.subf %542, %554 : vector<2x64xf32>
    %cst_290 = arith.constant 9.99999974E-6 : f32
    %556 = vector.broadcast %cst_290 : f32 to vector<2x1xf32>
    %557 = arith.addf %553, %556 : vector<2x1xf32>
    %558 = math.rsqrt %557 : vector<2x1xf32>
    %559 = vector.broadcast %558 : vector<2x1xf32> to vector<2x64xf32>
    %560 = arith.mulf %555, %559 : vector<2x64xf32>
    %c0_291 = arith.constant 0 : index
    %c0_292 = arith.constant 0 : index
    %561 = vector.load %arg15[%c0_291, %c0_292] : memref<2x64xf32, #tpu.memory_space<vmem>>, vector<1x64xf32>
    %562 = vector.broadcast %561 : vector<1x64xf32> to vector<2x64xf32>
    %563 = arith.mulf %560, %562 : vector<2x64xf32>
    %c1_293 = arith.constant 1 : index
    %c0_294 = arith.constant 0 : index
    %564 = vector.load %arg15[%c1_293, %c0_294] : memref<2x64xf32, #tpu.memory_space<vmem>>, vector<1x64xf32>
    %565 = vector.broadcast %564 : vector<1x64xf32> to vector<2x64xf32>
    %566 = arith.addf %563, %565 : vector<2x64xf32>
    %cst_295 = arith.constant 0.000000e+00 : f32
    %567 = vector.broadcast %cst_295 : f32 to vector<2x64xf32>
    %568 = arith.maximumf %566, %567 : vector<2x64xf32>
    %c0_296 = arith.constant 0 : index
    %c0_297 = arith.constant 0 : index
    %569 = vector.load %arg16[%c0_296, %c0_297] : memref<128x256xf32, #tpu.memory_space<vmem>>, vector<128x256xf32>
    %c0_298 = arith.constant 0 : index
    %c0_299 = arith.constant 0 : index
    %570 = vector.load %arg17[%c0_298, %c0_299] : memref<64x256xf32, #tpu.memory_space<vmem>>, vector<64x256xf32>
    %c0_300 = arith.constant 0 : index
    %c0_301 = arith.constant 0 : index
    %571 = vector.load %arg18[%c0_300, %c0_301] : memref<1x256xf32, #tpu.memory_space<vmem>>, vector<1x256xf32>
    %cst_302 = arith.constant dense<0.000000e+00> : vector<2x256xf32>
    %572 = tpu.matmul %5, %569, %cst_302 {dimension_numbers = #tpu.dot_dimension_numbers<[1], [0], [0], [1], [0, 0, 1, 1], [], []>} : vector<2x128xf32>, vector<128x256xf32>, vector<2x256xf32> -> vector<2x256xf32>
    %cst_303 = arith.constant dense<0.000000e+00> : vector<2x256xf32>
    %573 = tpu.matmul %568, %570, %cst_303 {dimension_numbers = #tpu.dot_dimension_numbers<[1], [0], [0], [1], [0, 0, 1, 1], [], []>} : vector<2x64xf32>, vector<64x256xf32>, vector<2x256xf32> -> vector<2x256xf32>
    %574 = arith.addf %572, %573 : vector<2x256xf32>
    %575 = vector.broadcast %571 : vector<1x256xf32> to vector<2x256xf32>
    %576 = arith.addf %574, %575 : vector<2x256xf32>
    %577 = vector.extract_strided_slice %576 {offsets = [0, 0], sizes = [2, 64], strides = [1, 1]} : vector<2x256xf32> to vector<2x64xf32>
    %cst_304 = arith.constant 0.000000e+00 : f32
    %578 = vector.broadcast %cst_304 : f32 to vector<2x64xf32>
    %579 = arith.subf %578, %577 : vector<2x64xf32>
    %580 = math.exp %579 : vector<2x64xf32>
    %cst_305 = arith.constant 1.000000e+00 : f32
    %581 = vector.broadcast %cst_305 : f32 to vector<2x64xf32>
    %582 = arith.addf %581, %580 : vector<2x64xf32>
    %cst_306 = arith.constant 1.000000e+00 : f32
    %583 = vector.broadcast %cst_306 : f32 to vector<2x64xf32>
    %584 = arith.divf %583, %582 : vector<2x64xf32>
    %585 = vector.extract_strided_slice %576 {offsets = [0, 64], sizes = [2, 64], strides = [1, 1]} : vector<2x256xf32> to vector<2x64xf32>
    %cst_307 = arith.constant 0.000000e+00 : f32
    %586 = vector.broadcast %cst_307 : f32 to vector<2x64xf32>
    %587 = arith.subf %586, %585 : vector<2x64xf32>
    %588 = math.exp %587 : vector<2x64xf32>
    %cst_308 = arith.constant 1.000000e+00 : f32
    %589 = vector.broadcast %cst_308 : f32 to vector<2x64xf32>
    %590 = arith.addf %589, %588 : vector<2x64xf32>
    %cst_309 = arith.constant 1.000000e+00 : f32
    %591 = vector.broadcast %cst_309 : f32 to vector<2x64xf32>
    %592 = arith.divf %591, %590 : vector<2x64xf32>
    %593 = vector.extract_strided_slice %576 {offsets = [0, 128], sizes = [2, 64], strides = [1, 1]} : vector<2x256xf32> to vector<2x64xf32>
    %594 = math.tanh %593 : vector<2x64xf32>
    %595 = vector.extract_strided_slice %576 {offsets = [0, 192], sizes = [2, 64], strides = [1, 1]} : vector<2x256xf32> to vector<2x64xf32>
    %cst_310 = arith.constant 0.000000e+00 : f32
    %596 = vector.broadcast %cst_310 : f32 to vector<2x64xf32>
    %597 = arith.subf %596, %595 : vector<2x64xf32>
    %598 = math.exp %597 : vector<2x64xf32>
    %cst_311 = arith.constant 1.000000e+00 : f32
    %599 = vector.broadcast %cst_311 : f32 to vector<2x64xf32>
    %600 = arith.addf %599, %598 : vector<2x64xf32>
    %cst_312 = arith.constant 1.000000e+00 : f32
    %601 = vector.broadcast %cst_312 : f32 to vector<2x64xf32>
    %602 = arith.divf %601, %600 : vector<2x64xf32>
    %603 = arith.mulf %592, %518 : vector<2x64xf32>
    %604 = arith.mulf %584, %594 : vector<2x64xf32>
    %605 = arith.addf %603, %604 : vector<2x64xf32>
    %606 = math.tanh %605 : vector<2x64xf32>
    %607 = arith.mulf %602, %606 : vector<2x64xf32>
    %c0_313 = arith.constant 0 : index
    %c0_314 = arith.constant 0 : index
    %608 = vector.load %arg19[%c0_313, %c0_314] : memref<64x10xf32, #tpu.memory_space<vmem>>, vector<64x10xf32>
    %cst_315 = arith.constant dense<0.000000e+00> : vector<2x10xf32>
    %609 = tpu.matmul %607, %608, %cst_315 {dimension_numbers = #tpu.dot_dimension_numbers<[1], [0], [0], [1], [0, 0, 1, 1], [], []>} : vector<2x64xf32>, vector<64x10xf32>, vector<2x10xf32> -> vector<2x10xf32>
    %c0_316 = arith.constant 0 : index
    %c0_317 = arith.constant 0 : index
    %610 = vector.load %arg20[%c0_316, %c0_317] : memref<1x10xf32, #tpu.memory_space<vmem>>, vector<1x10xf32>
    %611 = vector.broadcast %610 : vector<1x10xf32> to vector<2x10xf32>
    %612 = arith.addf %609, %611 : vector<2x10xf32>
    %c0_318 = arith.constant 0 : index
    %c0_319 = arith.constant 0 : index
    %613 = vector.load %arg21[%c0_318, %c0_319] : memref<2x10xf32, #tpu.memory_space<vmem>>, vector<2x10xf32>
    tpu.vector_store %arg21[%c0_318, %c0_319], %612 {strides = array<i32>} : memref<2x10xf32, #tpu.memory_space<vmem>>, vector<2x10xf32>,
    return
  }
}

</mosaic_0001>

<llo_original>
// kernel: spectral_forward.1
$region0: #{spectral_forward.1}
  #allocation0 [shape = 'u32[]', space=smem, size = 0x4, offset = 0x4, fixed_abs, tag = 'smem constant byte address 0x4 - core index']
  #allocation1 [shape = 'u32[72,128]{1,0:T(1,128)}', space=vmem, size = 0x9000, scoped, tag = 'internal scratch']
  %s0 = inlined_call_operand.vmem [shape: f32[2,32], index: 0, kind: input, shape index: {}]
  %s1 = inlined_call_operand.vmem [shape: f32[32,128], index: 1, kind: input, shape index: {}]
  %s2 = inlined_call_operand.vmem [shape: f32[1,128], index: 2, kind: input, shape index: {}]
  %s3 = inlined_call_operand.hbm [shape: f32[4,128,256], index: 3, kind: input, shape index: {}]
  %s4 = inlined_call_operand.hbm [shape: f32[4,64,256], index: 4, kind: input, shape index: {}]
  %s5 = inlined_call_operand.vmem [shape: f32[4,256], index: 5, kind: input, shape index: {}]
  %s6 = inlined_call_operand.hbm [shape: f32[6,64,64], index: 6, kind: input, shape index: {}]
  %s7 = inlined_call_operand.hbm [shape: f32[4,128,256], index: 7, kind: input, shape index: {}]
  %s8 = inlined_call_operand.hbm [shape: f32[4,64,256], index: 8, kind: input, shape index: {}]
  %s9 = inlined_call_operand.vmem [shape: f32[4,256], index: 9, kind: input, shape index: {}]
  %s10 = inlined_call_operand.hbm [shape: f32[6,64,64], index: 10, kind: input, shape index: {}]
  %s11 = inlined_call_operand.hbm [shape: f32[4,64,64], index: 11, kind: input, shape index: {}]
  %s12 = inlined_call_operand.vmem [shape: f32[16,1], index: 12, kind: input, shape index: {}]
  %s13 = inlined_call_operand.vmem [shape: f32[16,1], index: 13, kind: input, shape index: {}]
  %s14 = inlined_call_operand.vmem [shape: f32[16,1], index: 14, kind: input, shape index: {}]
  %s15 = inlined_call_operand.vmem [shape: f32[2,64], index: 15, kind: input, shape index: {}]
  %s16 = inlined_call_operand.hbm [shape: f32[128,256], index: 16, kind: input, shape index: {}]
  %s17 = inlined_call_operand.hbm [shape: f32[64,256], index: 17, kind: input, shape index: {}]
  %s18 = inlined_call_operand.vmem [shape: f32[1,256], index: 18, kind: input, shape index: {}]
  %s19 = inlined_call_operand.vmem [shape: f32[64,10], index: 19, kind: input, shape index: {}]
  %s20 = inlined_call_operand.vmem [shape: f32[1,10], index: 20, kind: input, shape index: {}]
  %s21 = inlined_call_operand.hbm [shape: f32[2,10], index: 21, kind: output, shape index: {}]
  %s22 = sld [smem:[#allocation0]]
  $region130: #{spectral_forward.1} parent=0
    _
  %s24 = ssub.s32 1, %s22
  %s25 = scalar_select 0, %s24, %s22
  $region1: #{spectral_forward.1} parent=0
    #allocation2 [shape = 'u8[524288]{0}', space=vmem, size = 0x80000, scoped, tag = 'input window, operand 3, single buffered']
    #allocation3 [shape = 's32[1]{0}', space=sflag, size = 0x4, scoped, tag = 'scoped memory for spectral_forward.1']
    #allocation4 [shape = 's32[1]{0}', space=sflag, size = 0x4, scoped, tag = 'scoped memory for spectral_forward.1']
    #allocation5 [shape = 'u8[262144]{0}', space=vmem, size = 0x40000, scoped, tag = 'input window, operand 4, single buffered']
    #allocation6 [shape = 's32[1]{0}', space=sflag, size = 0x4, scoped, tag = 'scoped memory for spectral_forward.1']
    #allocation7 [shape = 'u8[196608]{0}', space=vmem, size = 0x30000, scoped, tag = 'input window, operand 6, single buffered']
    #allocation8 [shape = 'u8[524288]{0}', space=vmem, size = 0x80000, scoped, tag = 'input window, operand 7, single buffered']
    #allocation9 [shape = 's32[1]{0}', space=sflag, size = 0x4, scoped, tag = 'scoped memory for spectral_forward.1']
    #allocation10 [shape = 'u8[262144]{0}', space=vmem, size = 0x40000, scoped, tag = 'input window, operand 8, single buffered']
    #allocation11 [shape = 'u8[196608]{0}', space=vmem, size = 0x30000, scoped, tag = 'input window, operand 10, single buffered']
    #allocation12 [shape = 's32[1]{0}', space=sflag, size = 0x4, scoped, tag = 'scoped memory for spectral_forward.1']
    #allocation13 [shape = 'u8[131072]{0}', space=vmem, size = 0x20000, scoped, tag = 'input window, operand 11, single buffered']
    #allocation14 [shape = 'u8[131072]{0}', space=vmem, size = 0x20000, scoped, tag = 'input window, operand 16, single buffered']
    #allocation15 [shape = 's32[1]{0}', space=sflag, size = 0x4, scoped, tag = 'scoped memory for spectral_forward.1']
    #allocation16 [shape = 'u8[65536]{0}', space=vmem, size = 0x10000, scoped, tag = 'input window, operand 17, single buffered']
    #allocation17 [shape = 'u8[1024]{0}', space=vmem, size = 0x400, scoped, tag = 'output window, operand 0, single buffered']
    %26 = vsyncpa [#allocation3], 0
    %27 = vsyncpa [#allocation6], 0
    %28 = vsyncpa [#allocation9], 0
    %29 = vsyncpa [#allocation12], 0
    %30 = vsyncpa [#allocation15], 0
    %31 = vsyncpa [#allocation4], 0
    // Predicated region
    $region2: #{spectral_forward.1} parent=1 // pred_check
      _
    $region3: #{spectral_forward.1} parent=1 // pred_check_branch
      %33 = sbr.rel (0) target = $region5
    $region4: #{spectral_forward.1} parent=1 // pred_region
      _
    $region5: #{spectral_forward.1} parent=1 // pred_fallthru
      _
    // Predicated region
    $region6: #{spectral_forward.1} parent=1 // pred_check
      _
    $region7: #{spectral_forward.1} parent=1 // pred_check_branch
      %35 = sbr.rel (0) target = $region9
    $region8: #{spectral_forward.1} parent=1 // pred_region
      _
    $region9: #{spectral_forward.1} parent=1 // pred_fallthru
      _
    // Predicated region
    $region10: #{spectral_forward.1} parent=1 // pred_check
      _
    $region11: #{spectral_forward.1} parent=1 // pred_check_branch
      %37 = sbr.rel (0) target = $region13
    $region12: #{spectral_forward.1} parent=1 // pred_region
      _
    $region13: #{spectral_forward.1} parent=1 // pred_fallthru
      _
    // Predicated region
    $region14: #{spectral_forward.1} parent=1 // pred_check
      _
    $region15: #{spectral_forward.1} parent=1 // pred_check_branch
      %39 = sbr.rel (0) target = $region17
    $region16: #{spectral_forward.1} parent=1 // pred_region
      %41 = vsyncadd [#allocation3], 0
      %s42 = sshll.u32 %s3, 4
      %s43 = int_to_ptr.hbm [resolvable:$true] %s42
      %s44 = sshll.u32 [#allocation2], 4
      %s45 = int_to_ptr.vmem [resolvable:$true] %s44
      %50 = dma.hbm_to_vmem [thread:$0]  %s43, 16384, %s45, [#allocation3], 256, 256, 16
    $region17: #{spectral_forward.1} parent=1 // pred_fallthru
      _
    // Predicated region
    $region18: #{spectral_forward.1} parent=1 // pred_check
      _
    $region19: #{spectral_forward.1} parent=1 // pred_check_branch
      %52 = sbr.rel (0) target = $region21
    $region20: #{spectral_forward.1} parent=1 // pred_region
      %54 = vsyncadd [#allocation6], 0
      %s55 = sshll.u32 %s4, 4
      %s56 = int_to_ptr.hbm [resolvable:$true] %s55
      %s57 = sshll.u32 [#allocation5], 4
      %s58 = int_to_ptr.vmem [resolvable:$true] %s57
      %63 = dma.hbm_to_vmem [thread:$0]  %s56, 8192, %s58, [#allocation6], 256, 256, 16
    $region21: #{spectral_forward.1} parent=1 // pred_fallthru
      _
    // Predicated region
    $region22: #{spectral_forward.1} parent=1 // pred_check
      _
    $region23: #{spectral_forward.1} parent=1 // pred_check_branch
      %65 = sbr.rel (0) target = $region25
    $region24: #{spectral_forward.1} parent=1 // pred_region
      _
    $region25: #{spectral_forward.1} parent=1 // pred_fallthru
      _
    // Predicated region
    $region26: #{spectral_forward.1} parent=1 // pred_check
      _
    $region27: #{spectral_forward.1} parent=1 // pred_check_branch
      %67 = sbr.rel (0) target = $region29
    $region28: #{spectral_forward.1} parent=1 // pred_region
      %69 = vsyncadd [#allocation6], 0
      %s70 = sshll.u32 %s6, 4
      %s71 = int_to_ptr.hbm [resolvable:$true] %s70
      %s72 = sshll.u32 [#allocation7], 4
      %s73 = int_to_ptr.vmem [resolvable:$true] %s72
      %78 = dma.hbm_to_vmem [thread:$0]  %s71, 6144, %s73, [#allocation6], 128, 128, 8
    $region29: #{spectral_forward.1} parent=1 // pred_fallthru
      _
    // Predicated region
    $region30: #{spectral_forward.1} parent=1 // pred_check
      _
    $region31: #{spectral_forward.1} parent=1 // pred_check_branch
      %80 = sbr.rel (0) target = $region33
    $region32: #{spectral_forward.1} parent=1 // pred_region
      %82 = vsyncadd [#allocation9], 0
      %s83 = sshll.u32 %s7, 4
      %s84 = int_to_ptr.hbm [resolvable:$true] %s83
      %s85 = sshll.u32 [#allocation8], 4
      %s86 = int_to_ptr.vmem [resolvable:$true] %s85
      %91 = dma.hbm_to_vmem [thread:$0]  %s84, 16384, %s86, [#allocation9], 256, 256, 16
    $region33: #{spectral_forward.1} parent=1 // pred_fallthru
      _
    // Predicated region
    $region34: #{spectral_forward.1} parent=1 // pred_check
      _
    $region35: #{spectral_forward.1} parent=1 // pred_check_branch
      %93 = sbr.rel (0) target = $region37
    $region36: #{spectral_forward.1} parent=1 // pred_region
      %95 = vsyncadd [#allocation9], 0
      %s96 = sshll.u32 %s8, 4
      %s97 = int_to_ptr.hbm [resolvable:$true] %s96
      %s98 = sshll.u32 [#allocation10], 4
      %s99 = int_to_ptr.vmem [resolvable:$true] %s98
      %104 = dma.hbm_to_vmem [thread:$0]  %s97, 8192, %s99, [#allocation9], 256, 256, 16
    $region37: #{spectral_forward.1} parent=1 // pred_fallthru
      _
    // Predicated region
    $region38: #{spectral_forward.1} parent=1 // pred_check
      _
    $region39: #{spectral_forward.1} parent=1 // pred_check_branch
      %106 = sbr.rel (0) target = $region41
    $region40: #{spectral_forward.1} parent=1 // pred_region
      _
    $region41: #{spectral_forward.1} parent=1 // pred_fallthru
      _
    // Predicated region
    $region42: #{spectral_forward.1} parent=1 // pred_check
      _
    $region43: #{spectral_forward.1} parent=1 // pred_check_branch
      %108 = sbr.rel (0) target = $region45
    $region44: #{spectral_forward.1} parent=1 // pred_region
      %110 = vsyncadd [#allocation12], 0
      %s111 = sshll.u32 %s10, 4
      %s112 = int_to_ptr.hbm [resolvable:$true] %s111
      %s113 = sshll.u32 [#allocation11], 4
      %s114 = int_to_ptr.vmem [resolvable:$true] %s113
      %119 = dma.hbm_to_vmem [thread:$0]  %s112, 6144, %s114, [#allocation12], 128, 128, 8
    $region45: #{spectral_forward.1} parent=1 // pred_fallthru
      _
    // Predicated region
    $region46: #{spectral_forward.1} parent=1 // pred_check
      _
    $region47: #{spectral_forward.1} parent=1 // pred_check_branch
      %121 = sbr.rel (0) target = $region49
    $region48: #{spectral_forward.1} parent=1 // pred_region
      %123 = vsyncadd [#allocation12], 0
      %s124 = sshll.u32 %s11, 4
      %s125 = int_to_ptr.hbm [resolvable:$true] %s124
      %s126 = sshll.u32 [#allocation13], 4
      %s127 = int_to_ptr.vmem [resolvable:$true] %s126
      %132 = dma.hbm_to_vmem [thread:$0]  %s125, 4096, %s127, [#allocation12], 128, 128, 8
    $region49: #{spectral_forward.1} parent=1 // pred_fallthru
      _
    // Predicated region
    $region50: #{spectral_forward.1} parent=1 // pred_check
      _
    $region51: #{spectral_forward.1} parent=1 // pred_check_branch
      %134 = sbr.rel (0) target = $region53
    $region52: #{spectral_forward.1} parent=1 // pred_region
      _
    $region53: #{spectral_forward.1} parent=1 // pred_fallthru
      _
    // Predicated region
    $region54: #{spectral_forward.1} parent=1 // pred_check
      _
    $region55: #{spectral_forward.1} parent=1 // pred_check_branch
      %136 = sbr.rel (0) target = $region57
    $region56: #{spectral_forward.1} parent=1 // pred_region
      _
    $region57: #{spectral_forward.1} parent=1 // pred_fallthru
      _
    // Predicated region
    $region58: #{spectral_forward.1} parent=1 // pred_check
      _
    $region59: #{spectral_forward.1} parent=1 // pred_check_branch
      %138 = sbr.rel (0) target = $region61
    $region60: #{spectral_forward.1} parent=1 // pred_region
      _
    $region61: #{spectral_forward.1} parent=1 // pred_fallthru
      _
    // Predicated region
    $region62: #{spectral_forward.1} parent=1 // pred_check
      _
    $region63: #{spectral_forward.1} parent=1 // pred_check_branch
      %140 = sbr.rel (0) target = $region65
    $region64: #{spectral_forward.1} parent=1 // pred_region
      _
    $region65: #{spectral_forward.1} parent=1 // pred_fallthru
      _
    // Predicated region
    $region66: #{spectral_forward.1} parent=1 // pred_check
      _
    $region67: #{spectral_forward.1} parent=1 // pred_check_branch
      %142 = sbr.rel (0) target = $region69
    $region68: #{spectral_forward.1} parent=1 // pred_region
      %144 = vsyncadd [#allocation15], 0
      %s145 = sshll.u32 %s16, 4
      %s146 = int_to_ptr.hbm [resolvable:$true] %s145
      %s147 = sshll.u32 [#allocation14], 4
      %s148 = int_to_ptr.vmem [resolvable:$true] %s147
      %153 = dma.hbm_to_vmem [thread:$0]  %s146, 4096, %s148, [#allocation15], 256, 256, 16
    $region69: #{spectral_forward.1} parent=1 // pred_fallthru
      _
    // Predicated region
    $region70: #{spectral_forward.1} parent=1 // pred_check
      _
    $region71: #{spectral_forward.1} parent=1 // pred_check_branch
      %155 = sbr.rel (0) target = $region73
    $region72: #{spectral_forward.1} parent=1 // pred_region
      %157 = vsyncadd [#allocation15], 0
      %s158 = sshll.u32 %s17, 4
      %s159 = int_to_ptr.hbm [resolvable:$true] %s158
      %s160 = sshll.u32 [#allocation16], 4
      %s161 = int_to_ptr.vmem [resolvable:$true] %s160
      %166 = dma.hbm_to_vmem [thread:$0]  %s159, 2048, %s161, [#allocation15], 256, 256, 16
    $region73: #{spectral_forward.1} parent=1 // pred_fallthru
      _
    // Predicated region
    $region74: #{spectral_forward.1} parent=1 // pred_check
      _
    $region75: #{spectral_forward.1} parent=1 // pred_check_branch
      %168 = sbr.rel (0) target = $region77
    $region76: #{spectral_forward.1} parent=1 // pred_region
      _
    $region77: #{spectral_forward.1} parent=1 // pred_fallthru
      _
    // Predicated region
    $region78: #{spectral_forward.1} parent=1 // pred_check
      _
    $region79: #{spectral_forward.1} parent=1 // pred_check_branch
      %170 = sbr.rel (0) target = $region81
    $region80: #{spectral_forward.1} parent=1 // pred_region
      _
    $region81: #{spectral_forward.1} parent=1 // pred_fallthru
      _
    // Predicated region
    $region82: #{spectral_forward.1} parent=1 // pred_check
      _
    $region83: #{spectral_forward.1} parent=1 // pred_check_branch
      %172 = sbr.rel (0) target = $region85
    $region84: #{spectral_forward.1} parent=1 // pred_region
      _
    $region85: #{spectral_forward.1} parent=1 // pred_fallthru
      _
    // Predicated region
    $region86: #{spectral_forward.1} parent=1 // pred_check
      _
    $region87: #{spectral_forward.1} parent=1 // pred_check_branch
      %174 = sbr.rel (0) target = $region89
    $region88: #{spectral_forward.1} parent=1 // pred_region
      %176 = dma.done [#allocation3], 16384
    $region89: #{spectral_forward.1} parent=1 // pred_fallthru
      _
    // Predicated region
    $region90: #{spectral_forward.1} parent=1 // pred_check
      _
    $region91: #{spectral_forward.1} parent=1 // pred_check_branch
      %178 = sbr.rel (0) target = $region93
    $region92: #{spectral_forward.1} parent=1 // pred_region
      %180 = dma.done [#allocation6], 8192
    $region93: #{spectral_forward.1} parent=1 // pred_fallthru
      _
    // Predicated region
    $region94: #{spectral_forward.1} parent=1 // pred_check
      _
    $region95: #{spectral_forward.1} parent=1 // pred_check_branch
      %182 = sbr.rel (0) target = $region97
    $region96: #{spectral_forward.1} parent=1 // pred_region
      %184 = dma.done [#allocation6], 6144
    $region97: #{spectral_forward.1} parent=1 // pred_fallthru
      _
    // Predicated region
    $region98: #{spectral_forward.1} parent=1 // pred_check
      _
    $region99: #{spectral_forward.1} parent=1 // pred_check_branch
      %186 = sbr.rel (0) target = $region101
    $region100: #{spectral_forward.1} parent=1 // pred_region
      %188 = dma.done [#allocation9], 16384
    $region101: #{spectral_forward.1} parent=1 // pred_fallthru
      _
    // Predicated region
    $region102: #{spectral_forward.1} parent=1 // pred_check
      _
    $region103: #{spectral_forward.1} parent=1 // pred_check_branch
      %190 = sbr.rel (0) target = $region105
    $region104: #{spectral_forward.1} parent=1 // pred_region
      %192 = dma.done [#allocation9], 8192
    $region105: #{spectral_forward.1} parent=1 // pred_fallthru
      _
    // Predicated region
    $region106: #{spectral_forward.1} parent=1 // pred_check
      _
    $region107: #{spectral_forward.1} parent=1 // pred_check_branch
      %194 = sbr.rel (0) target = $region109
    $region108: #{spectral_forward.1} parent=1 // pred_region
      %196 = dma.done [#allocation12], 6144
    $region109: #{spectral_forward.1} parent=1 // pred_fallthru
      _
    // Predicated region
    $region110: #{spectral_forward.1} parent=1 // pred_check
      _
    $region111: #{spectral_forward.1} parent=1 // pred_check_branch
      %198 = sbr.rel (0) target = $region113
    $region112: #{spectral_forward.1} parent=1 // pred_region
      %200 = dma.done [#allocation12], 4096
    $region113: #{spectral_forward.1} parent=1 // pred_fallthru
      _
    // Predicated region
    $region114: #{spectral_forward.1} parent=1 // pred_check
      _
    $region115: #{spectral_forward.1} parent=1 // pred_check_branch
      %202 = sbr.rel (0) target = $region117
    $region116: #{spectral_forward.1} parent=1 // pred_region
      %204 = dma.done [#allocation15], 4096
    $region117: #{spectral_forward.1} parent=1 // pred_fallthru
      _
    // Predicated region
    $region118: #{spectral_forward.1} parent=1 // pred_check
      _
    $region119: #{spectral_forward.1} parent=1 // pred_check_branch
      %206 = sbr.rel (0) target = $region121
    $region120: #{spectral_forward.1} parent=1 // pred_region
      %208 = dma.done [#allocation15], 2048
    $region121: #{spectral_forward.1} parent=1 // pred_fallthru
      _
    %v209 = vld [vmem:[%s0] sm:$0x3]
    %v210 = vld [vmem:[%s1] sm:$0xff]
    %v211 = vld [vmem:[%s1 + $0x8] sm:$0xff]
    %v212 = vld [vmem:[%s1 + $0x10] sm:$0xff]
    %v213 = vld [vmem:[%s1 + $0x18] sm:$0xff]
    %v214 = vld [vmem:[%s2] sm:$0x1]
    %v216 = vperm.slane %v214, 0
    %vm218 = vcmask 261120
    %v220 = vsel %vm218, %v209, 0
    %222 = vmatpush.msra.mxu0 0.0
    %223 = vmatpush.msra.mxu0 0.0
    %224 = vmatpush.msra.mxu0 0.0
    %225 = vmatpush.msra.mxu0 0.0
    %226 = vmatpush.msra.mxu0 0.0
    %227 = vmatpush.msra.mxu0 0.0
    %228 = vmatpush.msra.mxu0 0.0
    %229 = vmatpush.msra.mxu0 0.0
    %230 = vmatpush.msra.mxu0 0.0
    %231 = vmatpush.msra.mxu0 0.0
    %232 = vmatpush.msra.mxu0 0.0
    %233 = vmatpush.msra.mxu0 0.0
    %234 = vmatpush.msra.mxu0 %v213
    %235 = vmatpush.msra.mxu0 %v212
    %236 = vmatpush.msra.mxu0 %v211
    %237 = vmatpush.msra.mxu0 %v210
    %238 = vmatmul.f32.gmra.mxu0 %v220
    %v239 = vpop.f32.mrf.mxu0
    %v240 = vadd.f32 %v216, %v239
    %241 = vdwg.mxu0
    %v242 = vld [vmem:[#allocation2] sm:$0xff]
    %v243 = vld [vmem:[#allocation2 + $0x8] sm:$0xff]
    %v244 = vld [vmem:[#allocation2 + $0x10] sm:$0xff]
    %v245 = vld [vmem:[#allocation2 + $0x18] sm:$0xff]
    %v246 = vld [vmem:[#allocation2 + $0x20] sm:$0xff]
    %v247 = vld [vmem:[#allocation2 + $0x28] sm:$0xff]
    %v248 = vld [vmem:[#allocation2 + $0x30] sm:$0xff]
    %v249 = vld [vmem:[#allocation2 + $0x38] sm:$0xff]
    %v250 = vld [vmem:[#allocation2 + $0x40] sm:$0xff]
    %v251 = vld [vmem:[#allocation2 + $0x48] sm:$0xff]
    %v252 = vld [vmem:[#allocation2 + $0x50] sm:$0xff]
    %v253 = vld [vmem:[#allocation2 + $0x58] sm:$0xff]
    %v254 = vld [vmem:[#allocation2 + $0x60] sm:$0xff]
    %v255 = vld [vmem:[#allocation2 + $0x68] sm:$0xff]
    %v256 = vld [vmem:[#allocation2 + $0x70] sm:$0xff]
    %v257 = vld [vmem:[#allocation2 + $0x78] sm:$0xff]
    %v258 = vld [vmem:[#allocation2 + $0x80] sm:$0xff]
    %v259 = vld [vmem:[#allocation2 + $0x88] sm:$0xff]
    %v260 = vld [vmem:[#allocation2 + $0x90] sm:$0xff]
    %v261 = vld [vmem:[#allocation2 + $0x98] sm:$0xff]
    %v262 = vld [vmem:[#allocation2 + $0xa0] sm:$0xff]
    %v263 = vld [vmem:[#allocation2 + $0xa8] sm:$0xff]
    %v264 = vld [vmem:[#allocation2 + $0xb0] sm:$0xff]
    %v265 = vld [vmem:[#allocation2 + $0xb8] sm:$0xff]
    %v266 = vld [vmem:[#allocation2 + $0xc0] sm:$0xff]
    %v267 = vld [vmem:[#allocation2 + $0xc8] sm:$0xff]
    %v268 = vld [vmem:[#allocation2 + $0xd0] sm:$0xff]
    %v269 = vld [vmem:[#allocation2 + $0xd8] sm:$0xff]
    %v270 = vld [vmem:[#allocation2 + $0xe0] sm:$0xff]
    %v271 = vld [vmem:[#allocation2 + $0xe8] sm:$0xff]
    %v272 = vld [vmem:[#allocation2 + $0xf0] sm:$0xff]
    %v273 = vld [vmem:[#allocation2 + $0xf8] sm:$0xff]
    %v274 = vld [vmem:[#allocation5] sm:$0xff]
    %v275 = vld [vmem:[#allocation5 + $0x8] sm:$0xff]
    %v276 = vld [vmem:[#allocation5 + $0x10] sm:$0xff]
    %v277 = vld [vmem:[#allocation5 + $0x18] sm:$0xff]
    %v278 = vld [vmem:[#allocation5 + $0x20] sm:$0xff]
    %v279 = vld [vmem:[#allocation5 + $0x28] sm:$0xff]
    %v280 = vld [vmem:[#allocation5 + $0x30] sm:$0xff]
    %v281 = vld [vmem:[#allocation5 + $0x38] sm:$0xff]
    %v282 = vld [vmem:[#allocation5 + $0x40] sm:$0xff]
    %v283 = vld [vmem:[#allocation5 + $0x48] sm:$0xff]
    %v284 = vld [vmem:[#allocation5 + $0x50] sm:$0xff]
    %v285 = vld [vmem:[#allocation5 + $0x58] sm:$0xff]
    %v286 = vld [vmem:[#allocation5 + $0x60] sm:$0xff]
    %v287 = vld [vmem:[#allocation5 + $0x68] sm:$0xff]
    %v288 = vld [vmem:[#allocation5 + $0x70] sm:$0xff]
    %v289 = vld [vmem:[#allocation5 + $0x78] sm:$0xff]
    %v290 = vld [vmem:[%s5] ss:$4 sm:$0x3]
    %vm291 = vcmask 523264
    %v293 = vsel %vm291, 0.0, 0
    %295 = vmatpush.msra.mxu0 0.0
    %296 = vmatpush.msra.mxu0 0.0
    %297 = vmatpush.msra.mxu0 0.0
    %298 = vmatpush.msra.mxu0 0.0
    %299 = vmatpush.msra.mxu0 0.0
    %300 = vmatpush.msra.mxu0 0.0
    %301 = vmatpush.msra.mxu0 0.0
    %302 = vmatpush.msra.mxu0 0.0
    %303 = vmatpush.msra.mxu0 %v288
    %304 = vmatpush.msra.mxu0 %v286
    %305 = vmatpush.msra.mxu0 %v284
    %306 = vmatpush.msra.mxu0 %v282
    %307 = vmatpush.msra.mxu0 %v280
    %308 = vmatpush.msra.mxu0 %v278
    %309 = vmatpush.msra.mxu0 %v276
    %310 = vmatpush.msra.mxu0 %v274
    %311 = vmatmul.f32.gmra.mxu0 %v293
    %v312 = vpop.f32.mrf.mxu0
    %v313 = vadd.f32 0.0, %v312
    %314 = vdwg.mxu0
    %315 = vmatpush.msra.mxu0 0.0
    %316 = vmatpush.msra.mxu0 0.0
    %317 = vmatpush.msra.mxu0 0.0
    %318 = vmatpush.msra.mxu0 0.0
    %319 = vmatpush.msra.mxu0 0.0
    %320 = vmatpush.msra.mxu0 0.0
    %321 = vmatpush.msra.mxu0 0.0
    %322 = vmatpush.msra.mxu0 0.0
    %323 = vmatpush.msra.mxu0 %v289
    %324 = vmatpush.msra.mxu0 %v287
    %325 = vmatpush.msra.mxu0 %v285
    %326 = vmatpush.msra.mxu0 %v283
    %327 = vmatpush.msra.mxu0 %v281
    %328 = vmatpush.msra.mxu0 %v279
    %329 = vmatpush.msra.mxu0 %v277
    %330 = vmatpush.msra.mxu0 %v275
    %331 = vmatmul.f32.gmra.mxu0 %v293
    %v332 = vpop.f32.mrf.mxu0
    %v333 = vadd.f32 0.0, %v332
    %334 = vdwg.mxu0
    %335 = vmatpush.msra.mxu0 %v272
    %336 = vmatpush.msra.mxu0 %v270
    %337 = vmatpush.msra.mxu0 %v268
    %338 = vmatpush.msra.mxu0 %v266
    %339 = vmatpush.msra.mxu0 %v264
    %340 = vmatpush.msra.mxu0 %v262
    %341 = vmatpush.msra.mxu0 %v260
    %342 = vmatpush.msra.mxu0 %v258
    %343 = vmatpush.msra.mxu0 %v256
    %344 = vmatpush.msra.mxu0 %v254
    %345 = vmatpush.msra.mxu0 %v252
    %346 = vmatpush.msra.mxu0 %v250
    %347 = vmatpush.msra.mxu0 %v248
    %348 = vmatpush.msra.mxu0 %v246
    %349 = vmatpush.msra.mxu0 %v244
    %350 = vmatpush.msra.mxu0 %v242
    %351 = vmatmul.f32.gmra.mxu0 %v240
    %v352 = vpop.f32.mrf.mxu0
    %v353 = vadd.f32 %v313, %v352
    %354 = vdwg.mxu0
    %355 = vmatpush.msra.mxu0 %v273
    %356 = vmatpush.msra.mxu0 %v271
    %357 = vmatpush.msra.mxu0 %v269
    %358 = vmatpush.msra.mxu0 %v267
    %359 = vmatpush.msra.mxu0 %v265
    %360 = vmatpush.msra.mxu0 %v263
    %361 = vmatpush.msra.mxu0 %v261
    %362 = vmatpush.msra.mxu0 %v259
    %363 = vmatpush.msra.mxu0 %v257
    %364 = vmatpush.msra.mxu0 %v255
    %365 = vmatpush.msra.mxu0 %v253
    %366 = vmatpush.msra.mxu0 %v251
    %367 = vmatpush.msra.mxu0 %v249
    %368 = vmatpush.msra.mxu0 %v247
    %369 = vmatpush.msra.mxu0 %v245
    %370 = vmatpush.msra.mxu0 %v243
    %371 = vmatmul.f32.gmra.mxu0 %v240
    %v372 = vpop.f32.mrf.mxu0
    %v373 = vadd.f32 %v333, %v372
    %374 = vdwg.mxu0
    %v376 = vperm.slane %v290, 0
    %v377 = vperm.slane %v290, 1
    %v380 = vadd.f32 %v353, %v376
    %v381 = vadd.f32 %v373, %v377
    %v382 = vsub.f32 0.0, %v380
    %v383 = vmul.f32 %v382, 1.442695
    %v384 = vpow.pop %v383
    %v385 = vadd.f32 %v384, 1.0
    %v386 = vrcp.pop %v385
    %v387 = vmul.f32 %v385, %v386
    %v388 = vsub.f32 1.0, %v387
    %v389 = vmul.f32 %v386, %v388
    %v390 = vadd.f32 %v386, %v389
    %vm391 = vweird.f32 %v385
    %vm392 = vweird.f32 %v386
    %vm393 = vmor %vm391, %vm392
    %v394 = vsel %vm393, %v386, %v390
    %v395 = vand.u32 2147483647, %v385
    %vm396 = vcmp.eq.f32.partialorder %v395, 8.507059e+37
    %v397 = vand.u32 %v385, 2147483648
    %v398 = vor.u32 1.1754944e-38, %v397
    %v399 = vsel %vm396, %v398, %v394
    %v400 = vmul.f32 1.0, %v399
    %v401 = vtanh.pop %v381
    %v402 = vsub.f32 0.0, %v381
    %v403 = vmul.f32 %v402, 1.442695
    %v404 = vpow.pop %v403
    %v405 = vadd.f32 %v404, 1.0
    %v406 = vrcp.pop %v405
    %v407 = vmul.f32 %v405, %v406
    %v408 = vsub.f32 1.0, %v407
    %v409 = vmul.f32 %v406, %v408
    %v410 = vadd.f32 %v406, %v409
    %vm411 = vweird.f32 %v405
    %vm412 = vweird.f32 %v406
    %vm413 = vmor %vm411, %vm412
    %v414 = vsel %vm413, %v406, %v410
    %v415 = vand.u32 2147483647, %v405
    %vm416 = vcmp.eq.f32.partialorder %v415, 8.507059e+37
    %v417 = vand.u32 %v405, 2147483648
    %v418 = vor.u32 1.1754944e-38, %v417
    %v419 = vsel %vm416, %v418, %v414
    %v420 = vmul.f32 1.0, %v419
    %v421 = vmul.f32 %v400, 0.0
    %v422 = vmul.f32 %v400, %v401
    %424 = vrot.lane.b32.xlu0 %v422, 64
    %v425 = vpop.permute.xlu0 %424
    %v427 = vadd.f32 %v421, %v425
    %v428 = vtanh.pop %v427
    %v429 = vmul.f32 %v420, %v428
    %v430 = vld [vmem:[#allocation7] sm:$0xff]
    %v431 = vld [vmem:[#allocation7 + $0x8] sm:$0xff]
    %v432 = vld [vmem:[#allocation7 + $0x10] sm:$0xff]
    %v433 = vld [vmem:[#allocation7 + $0x18] sm:$0xff]
    %v434 = vld [vmem:[#allocation7 + $0x20] sm:$0xff]
    %v435 = vld [vmem:[#allocation7 + $0x28] sm:$0xff]
    %v436 = vld [vmem:[#allocation7 + $0x30] sm:$0xff]
    %v437 = vld [vmem:[#allocation7 + $0x38] sm:$0xff]
    %s438 = scalar_lea.vmem [#allocation13], 128
    %v439 = vld [vmem:[%s438] sm:$0xff]
    %v440 = vld [vmem:[%s438 + $0x8] sm:$0xff]
    %v441 = vld [vmem:[%s438 + $0x10] sm:$0xff]
    %v442 = vld [vmem:[%s438 + $0x18] sm:$0xff]
    %v443 = vld [vmem:[%s438 + $0x20] sm:$0xff]
    %v444 = vld [vmem:[%s438 + $0x28] sm:$0xff]
    %v445 = vld [vmem:[%s438 + $0x30] sm:$0xff]
    %v446 = vld [vmem:[%s438 + $0x38] sm:$0xff]
    %448 = vrot.lane.b32.xlu0 %v429, 64
    %v449 = vpop.permute.xlu0 %448
    %v450 = vsel %vm291, %v449, 0
    %452 = vmatpush.msra.mxu0 0.0
    %453 = vmatpush.msra.mxu0 0.0
    %454 = vmatpush.msra.mxu0 0.0
    %455 = vmatpush.msra.mxu0 0.0
    %456 = vmatpush.msra.mxu0 0.0
    %457 = vmatpush.msra.mxu0 0.0
    %458 = vmatpush.msra.mxu0 0.0
    %459 = vmatpush.msra.mxu0 0.0
    %460 = vmatpush.msra.mxu0 %v437
    %461 = vmatpush.msra.mxu0 %v436
    %462 = vmatpush.msra.mxu0 %v435
    %463 = vmatpush.msra.mxu0 %v434
    %464 = vmatpush.msra.mxu0 %v433
    %465 = vmatpush.msra.mxu0 %v432
    %466 = vmatpush.msra.mxu0 %v431
    %467 = vmatpush.msra.mxu0 %v430
    %468 = vmatmul.f32.gmra.mxu0 %v450
    %v469 = vpop.f32.mrf.mxu0
    %v470 = vadd.f32 0.0, %v469
    %471 = vdwg.mxu0
    %vm472 = vcmask 517120
    %v473 = vsel %vm472, %v470, -inf
    %474 = vmax.xlane.f32.xlu0 %v473
    %v475 = vpop.xlane.xlu0 %474
    %v476 = vsub.f32 %v470, %v475
    %v477 = vmul.f32 %v476, 1.442695
    %v478 = vpow.pop %v477
    %v480 = vsel %vm291, %v478, 0
    %482 = vmatpush.msra.mxu0 0.0
    %483 = vmatpush.msra.mxu0 0.0
    %484 = vmatpush.msra.mxu0 0.0
    %485 = vmatpush.msra.mxu0 0.0
    %486 = vmatpush.msra.mxu0 0.0
    %487 = vmatpush.msra.mxu0 0.0
    %488 = vmatpush.msra.mxu0 0.0
    %489 = vmatpush.msra.mxu0 0.0
    %490 = vmatpush.msra.mxu0 %v446
    %491 = vmatpush.msra.mxu0 %v445
    %492 = vmatpush.msra.mxu0 %v444
    %493 = vmatpush.msra.mxu0 %v443
    %494 = vmatpush.msra.mxu0 %v442
    %495 = vmatpush.msra.mxu0 %v441
    %496 = vmatpush.msra.mxu0 %v440
    %497 = vmatpush.msra.mxu0 %v439
    %498 = vmatmul.f32.gmra.mxu0 %v480
    %v499 = vpop.f32.mrf.mxu0
    %v500 = vadd.f32 0.0, %v499
    %501 = vdwg.mxu0
    %v502 = vrcp.pop %v500
    %v503 = vmul.f32 %v500, %v502
    %v504 = vsub.f32 1.0, %v503
    %v505 = vmul.f32 %v502, %v504
    %v506 = vadd.f32 %v502, %v505
    %vm507 = vweird.f32 %v500
    %vm508 = vweird.f32 %v502
    %vm509 = vmor %vm507, %vm508
    %v510 = vsel %vm509, %v502, %v506
    %v511 = vand.u32 2147483647, %v500
    %vm512 = vcmp.eq.f32.partialorder %v511, 8.507059e+37
    %v513 = vand.u32 %v500, 2147483648
    %v514 = vor.u32 1.1754944e-38, %v513
    %v515 = vsel %vm512, %v514, %v510
    %v516 = vmul.f32 %v478, %v515
    %s517 = scalar_lea.vmem [#allocation7], 64
    %v518 = vld [vmem:[%s517] sm:$0xff]
    %v519 = vld [vmem:[%s517 + $0x8] sm:$0xff]
    %v520 = vld [vmem:[%s517 + $0x10] sm:$0xff]
    %v521 = vld [vmem:[%s517 + $0x18] sm:$0xff]
    %v522 = vld [vmem:[%s517 + $0x20] sm:$0xff]
    %v523 = vld [vmem:[%s517 + $0x28] sm:$0xff]
    %v524 = vld [vmem:[%s517 + $0x30] sm:$0xff]
    %v525 = vld [vmem:[%s517 + $0x38] sm:$0xff]
    %527 = vrot.lane.b32.xlu0 %v427, 64
    %v528 = vpop.permute.xlu0 %527
    %v529 = vsel %vm291, %v528, 0
    %531 = vmatpush.msra.mxu0 0.0
    %532 = vmatpush.msra.mxu0 0.0
    %533 = vmatpush.msra.mxu0 0.0
    %534 = vmatpush.msra.mxu0 0.0
    %535 = vmatpush.msra.mxu0 0.0
    %536 = vmatpush.msra.mxu0 0.0
    %537 = vmatpush.msra.mxu0 0.0
    %538 = vmatpush.msra.mxu0 0.0
    %539 = vmatpush.msra.mxu0 %v525
    %540 = vmatpush.msra.mxu0 %v524
    %541 = vmatpush.msra.mxu0 %v523
    %542 = vmatpush.msra.mxu0 %v522
    %543 = vmatpush.msra.mxu0 %v521
    %544 = vmatpush.msra.mxu0 %v520
    %545 = vmatpush.msra.mxu0 %v519
    %546 = vmatpush.msra.mxu0 %v518
    %547 = vmatmul.f32.gmra.mxu0 %v529
    %v548 = vpop.f32.mrf.mxu0
    %v549 = vadd.f32 0.0, %v548
    %550 = vdwg.mxu0
    %v551 = vsel %vm472, %v549, -inf
    %552 = vmax.xlane.f32.xlu0 %v551
    %v553 = vpop.xlane.xlu0 %552
    %v554 = vsub.f32 %v549, %v553
    %v555 = vmul.f32 %v554, 1.442695
    %v556 = vpow.pop %v555
    %v558 = vsel %vm291, %v556, 0
    %560 = vmatpush.msra.mxu0 0.0
    %561 = vmatpush.msra.mxu0 0.0
    %562 = vmatpush.msra.mxu0 0.0
    %563 = vmatpush.msra.mxu0 0.0
    %564 = vmatpush.msra.mxu0 0.0
    %565 = vmatpush.msra.mxu0 0.0
    %566 = vmatpush.msra.mxu0 0.0
    %567 = vmatpush.msra.mxu0 0.0
    %568 = vmatpush.msra.mxu0 %v446
    %569 = vmatpush.msra.mxu0 %v445
    %570 = vmatpush.msra.mxu0 %v444
    %571 = vmatpush.msra.mxu0 %v443
    %572 = vmatpush.msra.mxu0 %v442
    %573 = vmatpush.msra.mxu0 %v441
    %574 = vmatpush.msra.mxu0 %v440
    %575 = vmatpush.msra.mxu0 %v439
    %576 = vmatmul.f32.gmra.mxu0 %v558
    %v577 = vpop.f32.mrf.mxu0
    %v578 = vadd.f32 0.0, %v577
    %579 = vdwg.mxu0
    %v580 = vrcp.pop %v578
    %v581 = vmul.f32 %v578, %v580
    %v582 = vsub.f32 1.0, %v581
    %v583 = vmul.f32 %v580, %v582
    %v584 = vadd.f32 %v580, %v583
    %vm585 = vweird.f32 %v578
    %vm586 = vweird.f32 %v580
    %vm587 = vmor %vm585, %vm586
    %v588 = vsel %vm587, %v580, %v584
    %v589 = vand.u32 2147483647, %v578
    %vm590 = vcmp.eq.f32.partialorder %v589, 8.507059e+37
    %v591 = vand.u32 %v578, 2147483648
    %v592 = vor.u32 1.1754944e-38, %v591
    %v593 = vsel %vm590, %v592, %v588
    %v594 = vmul.f32 %v556, %v593
    %s595 = scalar_lea.vmem [#allocation2], 256
    %v596 = vld [vmem:[%s595] sm:$0xff]
    %v597 = vld [vmem:[%s595 + $0x8] sm:$0xff]
    %v598 = vld [vmem:[%s595 + $0x10] sm:$0xff]
    %v599 = vld [vmem:[%s595 + $0x18] sm:$0xff]
    %v600 = vld [vmem:[%s595 + $0x20] sm:$0xff]
    %v601 = vld [vmem:[%s595 + $0x28] sm:$0xff]
    %v602 = vld [vmem:[%s595 + $0x30] sm:$0xff]
    %v603 = vld [vmem:[%s595 + $0x38] sm:$0xff]
    %v604 = vld [vmem:[%s595 + $0x40] sm:$0xff]
    %v605 = vld [vmem:[%s595 + $0x48] sm:$0xff]
    %v606 = vld [vmem:[%s595 + $0x50] sm:$0xff]
    %v607 = vld [vmem:[%s595 + $0x58] sm:$0xff]
    %v608 = vld [vmem:[%s595 + $0x60] sm:$0xff]
    %v609 = vld [vmem:[%s595 + $0x68] sm:$0xff]
    %v610 = vld [vmem:[%s595 + $0x70] sm:$0xff]
    %v611 = vld [vmem:[%s595 + $0x78] sm:$0xff]
    %v612 = vld [vmem:[%s595 + $0x80] sm:$0xff]
    %v613 = vld [vmem:[%s595 + $0x88] sm:$0xff]
    %v614 = vld [vmem:[%s595 + $0x90] sm:$0xff]
    %v615 = vld [vmem:[%s595 + $0x98] sm:$0xff]
    %v616 = vld [vmem:[%s595 + $0xa0] sm:$0xff]
    %v617 = vld [vmem:[%s595 + $0xa8] sm:$0xff]
    %v618 = vld [vmem:[%s595 + $0xb0] sm:$0xff]
    %v619 = vld [vmem:[%s595 + $0xb8] sm:$0xff]
    %v620 = vld [vmem:[%s595 + $0xc0] sm:$0xff]
    %v621 = vld [vmem:[%s595 + $0xc8] sm:$0xff]
    %v622 = vld [vmem:[%s595 + $0xd0] sm:$0xff]
    %v623 = vld [vmem:[%s595 + $0xd8] sm:$0xff]
    %v624 = vld [vmem:[%s595 + $0xe0] sm:$0xff]
    %v625 = vld [vmem:[%s595 + $0xe8] sm:$0xff]
    %v626 = vld [vmem:[%s595 + $0xf0] sm:$0xff]
    %v627 = vld [vmem:[%s595 + $0xf8] sm:$0xff]
    %s628 = scalar_lea.vmem [#allocation5], 128
    %v629 = vld [vmem:[%s628] sm:$0xff]
    %v630 = vld [vmem:[%s628 + $0x8] sm:$0xff]
    %v631 = vld [vmem:[%s628 + $0x10] sm:$0xff]
    %v632 = vld [vmem:[%s628 + $0x18] sm:$0xff]
    %v633 = vld [vmem:[%s628 + $0x20] sm:$0xff]
    %v634 = vld [vmem:[%s628 + $0x28] sm:$0xff]
    %v635 = vld [vmem:[%s628 + $0x30] sm:$0xff]
    %v636 = vld [vmem:[%s628 + $0x38] sm:$0xff]
    %v637 = vld [vmem:[%s628 + $0x40] sm:$0xff]
    %v638 = vld [vmem:[%s628 + $0x48] sm:$0xff]
    %v639 = vld [vmem:[%s628 + $0x50] sm:$0xff]
    %v640 = vld [vmem:[%s628 + $0x58] sm:$0xff]
    %v641 = vld [vmem:[%s628 + $0x60] sm:$0xff]
    %v642 = vld [vmem:[%s628 + $0x68] sm:$0xff]
    %v643 = vld [vmem:[%s628 + $0x70] sm:$0xff]
    %v644 = vld [vmem:[%s628 + $0x78] sm:$0xff]
    %s645 = scalar_lea.vmem %s5, 1
    %v646 = vld [vmem:[%s645] ss:$4 sm:$0x3]
    %v648 = vsel %vm291, %v516, 0
    %650 = vmatpush.msra.mxu0 0.0
    %651 = vmatpush.msra.mxu0 0.0
    %652 = vmatpush.msra.mxu0 0.0
    %653 = vmatpush.msra.mxu0 0.0
    %654 = vmatpush.msra.mxu0 0.0
    %655 = vmatpush.msra.mxu0 0.0
    %656 = vmatpush.msra.mxu0 0.0
    %657 = vmatpush.msra.mxu0 0.0
    %658 = vmatpush.msra.mxu0 %v643
    %659 = vmatpush.msra.mxu0 %v641
    %660 = vmatpush.msra.mxu0 %v639
    %661 = vmatpush.msra.mxu0 %v637
    %662 = vmatpush.msra.mxu0 %v635
    %663 = vmatpush.msra.mxu0 %v633
    %664 = vmatpush.msra.mxu0 %v631
    %665 = vmatpush.msra.mxu0 %v629
    %666 = vmatmul.f32.gmra.mxu0 %v648
    %v667 = vpop.f32.mrf.mxu0
    %v668 = vadd.f32 0.0, %v667
    %669 = vdwg.mxu0
    %670 = vmatpush.msra.mxu0 0.0
    %671 = vmatpush.msra.mxu0 0.0
    %672 = vmatpush.msra.mxu0 0.0
    %673 = vmatpush.msra.mxu0 0.0
    %674 = vmatpush.msra.mxu0 0.0
    %675 = vmatpush.msra.mxu0 0.0
    %676 = vmatpush.msra.mxu0 0.0
    %677 = vmatpush.msra.mxu0 0.0
    %678 = vmatpush.msra.mxu0 %v644
    %679 = vmatpush.msra.mxu0 %v642
    %680 = vmatpush.msra.mxu0 %v640
    %681 = vmatpush.msra.mxu0 %v638
    %682 = vmatpush.msra.mxu0 %v636
    %683 = vmatpush.msra.mxu0 %v634
    %684 = vmatpush.msra.mxu0 %v632
    %685 = vmatpush.msra.mxu0 %v630
    %686 = vmatmul.f32.gmra.mxu0 %v648
    %v687 = vpop.f32.mrf.mxu0
    %v688 = vadd.f32 0.0, %v687
    %689 = vdwg.mxu0
    %690 = vmatpush.msra.mxu0 %v626
    %691 = vmatpush.msra.mxu0 %v624
    %692 = vmatpush.msra.mxu0 %v622
    %693 = vmatpush.msra.mxu0 %v620
    %694 = vmatpush.msra.mxu0 %v618
    %695 = vmatpush.msra.mxu0 %v616
    %696 = vmatpush.msra.mxu0 %v614
    %697 = vmatpush.msra.mxu0 %v612
    %698 = vmatpush.msra.mxu0 %v610
    %699 = vmatpush.msra.mxu0 %v608
    %700 = vmatpush.msra.mxu0 %v606
    %701 = vmatpush.msra.mxu0 %v604
    %702 = vmatpush.msra.mxu0 %v602
    %703 = vmatpush.msra.mxu0 %v600
    %704 = vmatpush.msra.mxu0 %v598
    %705 = vmatpush.msra.mxu0 %v596
    %706 = vmatmul.f32.gmra.mxu0 %v240
    %v707 = vpop.f32.mrf.mxu0
    %v708 = vadd.f32 %v668, %v707
    %709 = vdwg.mxu0
    %710 = vmatpush.msra.mxu0 %v627
    %711 = vmatpush.msra.mxu0 %v625
    %712 = vmatpush.msra.mxu0 %v623
    %713 = vmatpush.msra.mxu0 %v621
    %714 = vmatpush.msra.mxu0 %v619
    %715 = vmatpush.msra.mxu0 %v617
    %716 = vmatpush.msra.mxu0 %v615
    %717 = vmatpush.msra.mxu0 %v613
    %718 = vmatpush.msra.mxu0 %v611
    %719 = vmatpush.msra.mxu0 %v609
    %720 = vmatpush.msra.mxu0 %v607
    %721 = vmatpush.msra.mxu0 %v605
    %722 = vmatpush.msra.mxu0 %v603
    %723 = vmatpush.msra.mxu0 %v601
    %724 = vmatpush.msra.mxu0 %v599
    %725 = vmatpush.msra.mxu0 %v597
    %726 = vmatmul.f32.gmra.mxu0 %v240
    %v727 = vpop.f32.mrf.mxu0
    %v728 = vadd.f32 %v688, %v727
    %729 = vdwg.mxu0
    %v731 = vperm.slane %v646, 0
    %v732 = vperm.slane %v646, 1
    %v735 = vadd.f32 %v708, %v731
    %v736 = vadd.f32 %v728, %v732
    %v737 = vsub.f32 0.0, %v735
    %v738 = vmul.f32 %v737, 1.442695
    %v739 = vpow.pop %v738
    %v740 = vadd.f32 %v739, 1.0
    %v741 = vrcp.pop %v740
    %v742 = vmul.f32 %v740, %v741
    %v743 = vsub.f32 1.0, %v742
    %v744 = vmul.f32 %v741, %v743
    %v745 = vadd.f32 %v741, %v744
    %vm746 = vweird.f32 %v740
    %vm747 = vweird.f32 %v741
    %vm748 = vmor %vm746, %vm747
    %v749 = vsel %vm748, %v741, %v745
    %v750 = vand.u32 2147483647, %v740
    %vm751 = vcmp.eq.f32.partialorder %v750, 8.507059e+37
    %v752 = vand.u32 %v740, 2147483648
    %v753 = vor.u32 1.1754944e-38, %v752
    %v754 = vsel %vm751, %v753, %v749
    %v755 = vmul.f32 1.0, %v754
    %v756 = vtanh.pop %v736
    %v757 = vsub.f32 0.0, %v736
    %v758 = vmul.f32 %v757, 1.442695
    %v759 = vpow.pop %v758
    %v760 = vadd.f32 %v759, 1.0
    %v761 = vrcp.pop %v760
    %v762 = vmul.f32 %v760, %v761
    %v763 = vsub.f32 1.0, %v762
    %v764 = vmul.f32 %v761, %v763
    %v765 = vadd.f32 %v761, %v764
    %vm766 = vweird.f32 %v760
    %vm767 = vweird.f32 %v761
    %vm768 = vmor %vm766, %vm767
    %v769 = vsel %vm768, %v761, %v765
    %v770 = vand.u32 2147483647, %v760
    %vm771 = vcmp.eq.f32.partialorder %v770, 8.507059e+37
    %v772 = vand.u32 %v760, 2147483648
    %v773 = vor.u32 1.1754944e-38, %v772
    %v774 = vsel %vm771, %v773, %v769
    %v775 = vmul.f32 1.0, %v774
    %777 = vrot.lane.b32.xlu0 %v594, 64
    %v778 = vpop.permute.xlu0 %777
    %v780 = vmul.f32 %v755, %v778
    %v781 = vmul.f32 %v755, %v756
    %783 = vrot.lane.b32.xlu0 %v781, 64
    %v784 = vpop.permute.xlu0 %783
    %v786 = vadd.f32 %v780, %v784
    %v787 = vtanh.pop %v786
    %v788 = vmul.f32 %v775, %v787
    %s789 = scalar_lea.vmem [#allocation7], 128
    %v790 = vld [vmem:[%s789] sm:$0xff]
    %v791 = vld [vmem:[%s789 + $0x8] sm:$0xff]
    %v792 = vld [vmem:[%s789 + $0x10] sm:$0xff]
    %v793 = vld [vmem:[%s789 + $0x18] sm:$0xff]
    %v794 = vld [vmem:[%s789 + $0x20] sm:$0xff]
    %v795 = vld [vmem:[%s789 + $0x28] sm:$0xff]
    %v796 = vld [vmem:[%s789 + $0x30] sm:$0xff]
    %v797 = vld [vmem:[%s789 + $0x38] sm:$0xff]
    %s798 = scalar_lea.vmem [#allocation13], 64
    %v799 = vld [vmem:[%s798] sm:$0xff]
    %v800 = vld [vmem:[%s798 + $0x8] sm:$0xff]
    %v801 = vld [vmem:[%s798 + $0x10] sm:$0xff]
    %v802 = vld [vmem:[%s798 + $0x18] sm:$0xff]
    %v803 = vld [vmem:[%s798 + $0x20] sm:$0xff]
    %v804 = vld [vmem:[%s798 + $0x28] sm:$0xff]
    %v805 = vld [vmem:[%s798 + $0x30] sm:$0xff]
    %v806 = vld [vmem:[%s798 + $0x38] sm:$0xff]
    %808 = vrot.lane.b32.xlu0 %v788, 64
    %v809 = vpop.permute.xlu0 %808
    %v810 = vsel %vm291, %v809, 0
    %812 = vmatpush.msra.mxu0 0.0
    %813 = vmatpush.msra.mxu0 0.0
    %814 = vmatpush.msra.mxu0 0.0
    %815 = vmatpush.msra.mxu0 0.0
    %816 = vmatpush.msra.mxu0 0.0
    %817 = vmatpush.msra.mxu0 0.0
    %818 = vmatpush.msra.mxu0 0.0
    %819 = vmatpush.msra.mxu0 0.0
    %820 = vmatpush.msra.mxu0 %v797
    %821 = vmatpush.msra.mxu0 %v796
    %822 = vmatpush.msra.mxu0 %v795
    %823 = vmatpush.msra.mxu0 %v794
    %824 = vmatpush.msra.mxu0 %v793
    %825 = vmatpush.msra.mxu0 %v792
    %826 = vmatpush.msra.mxu0 %v791
    %827 = vmatpush.msra.mxu0 %v790
    %828 = vmatmul.f32.gmra.mxu0 %v810
    %v829 = vpop.f32.mrf.mxu0
    %v830 = vadd.f32 0.0, %v829
    %831 = vdwg.mxu0
    %v832 = vsel %vm472, %v830, -inf
    %833 = vmax.xlane.f32.xlu0 %v832
    %v834 = vpop.xlane.xlu0 %833
    %v835 = vsub.f32 %v830, %v834
    %v836 = vmul.f32 %v835, 1.442695
    %v837 = vpow.pop %v836
    %v839 = vsel %vm291, %v837, 0
    %841 = vmatpush.msra.mxu0 0.0
    %842 = vmatpush.msra.mxu0 0.0
    %843 = vmatpush.msra.mxu0 0.0
    %844 = vmatpush.msra.mxu0 0.0
    %845 = vmatpush.msra.mxu0 0.0
    %846 = vmatpush.msra.mxu0 0.0
    %847 = vmatpush.msra.mxu0 0.0
    %848 = vmatpush.msra.mxu0 0.0
    %849 = vmatpush.msra.mxu0 %v806
    %850 = vmatpush.msra.mxu0 %v805
    %851 = vmatpush.msra.mxu0 %v804
    %852 = vmatpush.msra.mxu0 %v803
    %853 = vmatpush.msra.mxu0 %v802
    %854 = vmatpush.msra.mxu0 %v801
    %855 = vmatpush.msra.mxu0 %v800
    %856 = vmatpush.msra.mxu0 %v799
    %857 = vmatmul.f32.gmra.mxu0 %v839
    %v858 = vpop.f32.mrf.mxu0
    %v859 = vadd.f32 0.0, %v858
    %860 = vdwg.mxu0
    %v861 = vrcp.pop %v859
    %v862 = vmul.f32 %v859, %v861
    %v863 = vsub.f32 1.0, %v862
    %v864 = vmul.f32 %v861, %v863
    %v865 = vadd.f32 %v861, %v864
    %vm866 = vweird.f32 %v859
    %vm867 = vweird.f32 %v861
    %vm868 = vmor %vm866, %vm867
    %v869 = vsel %vm868, %v861, %v865
    %v870 = vand.u32 2147483647, %v859
    %vm871 = vcmp.eq.f32.partialorder %v870, 8.507059e+37
    %v872 = vand.u32 %v859, 2147483648
    %v873 = vor.u32 1.1754944e-38, %v872
    %v874 = vsel %vm871, %v873, %v869
    %v875 = vmul.f32 %v837, %v874
    %s876 = scalar_lea.vmem [#allocation7], 192
    %v877 = vld [vmem:[%s876] sm:$0xff]
    %v878 = vld [vmem:[%s876 + $0x8] sm:$0xff]
    %v879 = vld [vmem:[%s876 + $0x10] sm:$0xff]
    %v880 = vld [vmem:[%s876 + $0x18] sm:$0xff]
    %v881 = vld [vmem:[%s876 + $0x20] sm:$0xff]
    %v882 = vld [vmem:[%s876 + $0x28] sm:$0xff]
    %v883 = vld [vmem:[%s876 + $0x30] sm:$0xff]
    %v884 = vld [vmem:[%s876 + $0x38] sm:$0xff]
    %886 = vrot.lane.b32.xlu0 %v786, 64
    %v887 = vpop.permute.xlu0 %886
    %v888 = vsel %vm291, %v887, 0
    %890 = vmatpush.msra.mxu0 0.0
    %891 = vmatpush.msra.mxu0 0.0
    %892 = vmatpush.msra.mxu0 0.0
    %893 = vmatpush.msra.mxu0 0.0
    %894 = vmatpush.msra.mxu0 0.0
    %895 = vmatpush.msra.mxu0 0.0
    %896 = vmatpush.msra.mxu0 0.0
    %897 = vmatpush.msra.mxu0 0.0
    %898 = vmatpush.msra.mxu0 %v884
    %899 = vmatpush.msra.mxu0 %v883
    %900 = vmatpush.msra.mxu0 %v882
    %901 = vmatpush.msra.mxu0 %v881
    %902 = vmatpush.msra.mxu0 %v880
    %903 = vmatpush.msra.mxu0 %v879
    %904 = vmatpush.msra.mxu0 %v878
    %905 = vmatpush.msra.mxu0 %v877
    %906 = vmatmul.f32.gmra.mxu0 %v888
    %v907 = vpop.f32.mrf.mxu0
    %v908 = vadd.f32 0.0, %v907
    %909 = vdwg.mxu0
    %v910 = vsel %vm472, %v908, -inf
    %911 = vmax.xlane.f32.xlu0 %v910
    %v912 = vpop.xlane.xlu0 %911
    %v913 = vsub.f32 %v908, %v912
    %v914 = vmul.f32 %v913, 1.442695
    %v915 = vpow.pop %v914
    %v917 = vsel %vm291, %v915, 0
    %919 = vmatpush.msra.mxu0 0.0
    %920 = vmatpush.msra.mxu0 0.0
    %921 = vmatpush.msra.mxu0 0.0
    %922 = vmatpush.msra.mxu0 0.0
    %923 = vmatpush.msra.mxu0 0.0
    %924 = vmatpush.msra.mxu0 0.0
    %925 = vmatpush.msra.mxu0 0.0
    %926 = vmatpush.msra.mxu0 0.0
    %927 = vmatpush.msra.mxu0 %v806
    %928 = vmatpush.msra.mxu0 %v805
    %929 = vmatpush.msra.mxu0 %v804
    %930 = vmatpush.msra.mxu0 %v803
    %931 = vmatpush.msra.mxu0 %v802
    %932 = vmatpush.msra.mxu0 %v801
    %933 = vmatpush.msra.mxu0 %v800
    %934 = vmatpush.msra.mxu0 %v799
    %935 = vmatmul.f32.gmra.mxu0 %v917
    %v936 = vpop.f32.mrf.mxu0
    %v937 = vadd.f32 0.0, %v936
    %938 = vdwg.mxu0
    %v939 = vrcp.pop %v937
    %v940 = vmul.f32 %v937, %v939
    %v941 = vsub.f32 1.0, %v940
    %v942 = vmul.f32 %v939, %v941
    %v943 = vadd.f32 %v939, %v942
    %vm944 = vweird.f32 %v937
    %vm945 = vweird.f32 %v939
    %vm946 = vmor %vm944, %vm945
    %v947 = vsel %vm946, %v939, %v943
    %v948 = vand.u32 2147483647, %v937
    %vm949 = vcmp.eq.f32.partialorder %v948, 8.507059e+37
    %v950 = vand.u32 %v937, 2147483648
    %v951 = vor.u32 1.1754944e-38, %v950
    %v952 = vsel %vm949, %v951, %v947
    %v953 = vmul.f32 %v915, %v952
    %s954 = scalar_lea.vmem [#allocation2], 512
    %v955 = vld [vmem:[%s954] sm:$0xff]
    %v956 = vld [vmem:[%s954 + $0x8] sm:$0xff]
    %v957 = vld [vmem:[%s954 + $0x10] sm:$0xff]
    %v958 = vld [vmem:[%s954 + $0x18] sm:$0xff]
    %v959 = vld [vmem:[%s954 + $0x20] sm:$0xff]
    %v960 = vld [vmem:[%s954 + $0x28] sm:$0xff]
    %v961 = vld [vmem:[%s954 + $0x30] sm:$0xff]
    %v962 = vld [vmem:[%s954 + $0x38] sm:$0xff]
    %v963 = vld [vmem:[%s954 + $0x40] sm:$0xff]
    %v964 = vld [vmem:[%s954 + $0x48] sm:$0xff]
    %v965 = vld [vmem:[%s954 + $0x50] sm:$0xff]
    %v966 = vld [vmem:[%s954 + $0x58] sm:$0xff]
    %v967 = vld [vmem:[%s954 + $0x60] sm:$0xff]
    %v968 = vld [vmem:[%s954 + $0x68] sm:$0xff]
    %v969 = vld [vmem:[%s954 + $0x70] sm:$0xff]
    %v970 = vld [vmem:[%s954 + $0x78] sm:$0xff]
    %v971 = vld [vmem:[%s954 + $0x80] sm:$0xff]
    %v972 = vld [vmem:[%s954 + $0x88] sm:$0xff]
    %v973 = vld [vmem:[%s954 + $0x90] sm:$0xff]
    %v974 = vld [vmem:[%s954 + $0x98] sm:$0xff]
    %v975 = vld [vmem:[%s954 + $0xa0] sm:$0xff]
    %v976 = vld [vmem:[%s954 + $0xa8] sm:$0xff]
    %v977 = vld [vmem:[%s954 + $0xb0] sm:$0xff]
    %v978 = vld [vmem:[%s954 + $0xb8] sm:$0xff]
    %v979 = vld [vmem:[%s954 + $0xc0] sm:$0xff]
    %v980 = vld [vmem:[%s954 + $0xc8] sm:$0xff]
    %v981 = vld [vmem:[%s954 + $0xd0] sm:$0xff]
    %v982 = vld [vmem:[%s954 + $0xd8] sm:$0xff]
    %v983 = vld [vmem:[%s954 + $0xe0] sm:$0xff]
    %v984 = vld [vmem:[%s954 + $0xe8] sm:$0xff]
    %v985 = vld [vmem:[%s954 + $0xf0] sm:$0xff]
    %v986 = vld [vmem:[%s954 + $0xf8] sm:$0xff]
    %s987 = scalar_lea.vmem [#allocation5], 256
    %v988 = vld [vmem:[%s987] sm:$0xff]
    %v989 = vld [vmem:[%s987 + $0x8] sm:$0xff]
    %v990 = vld [vmem:[%s987 + $0x10] sm:$0xff]
    %v991 = vld [vmem:[%s987 + $0x18] sm:$0xff]
    %v992 = vld [vmem:[%s987 + $0x20] sm:$0xff]
    %v993 = vld [vmem:[%s987 + $0x28] sm:$0xff]
    %v994 = vld [vmem:[%s987 + $0x30] sm:$0xff]
    %v995 = vld [vmem:[%s987 + $0x38] sm:$0xff]
    %v996 = vld [vmem:[%s987 + $0x40] sm:$0xff]
    %v997 = vld [vmem:[%s987 + $0x48] sm:$0xff]
    %v998 = vld [vmem:[%s987 + $0x50] sm:$0xff]
    %v999 = vld [vmem:[%s987 + $0x58] sm:$0xff]
    %v1000 = vld [vmem:[%s987 + $0x60] sm:$0xff]
    %v1001 = vld [vmem:[%s987 + $0x68] sm:$0xff]
    %v1002 = vld [vmem:[%s987 + $0x70] sm:$0xff]
    %v1003 = vld [vmem:[%s987 + $0x78] sm:$0xff]
    %s1004 = scalar_lea.vmem %s5, 2
    %v1005 = vld [vmem:[%s1004] ss:$4 sm:$0x3]
    %v1007 = vsel %vm291, %v875, 0
    %1009 = vmatpush.msra.mxu0 0.0
    %1010 = vmatpush.msra.mxu0 0.0
    %1011 = vmatpush.msra.mxu0 0.0
    %1012 = vmatpush.msra.mxu0 0.0
    %1013 = vmatpush.msra.mxu0 0.0
    %1014 = vmatpush.msra.mxu0 0.0
    %1015 = vmatpush.msra.mxu0 0.0
    %1016 = vmatpush.msra.mxu0 0.0
    %1017 = vmatpush.msra.mxu0 %v1002
    %1018 = vmatpush.msra.mxu0 %v1000
    %1019 = vmatpush.msra.mxu0 %v998
    %1020 = vmatpush.msra.mxu0 %v996
    %1021 = vmatpush.msra.mxu0 %v994
    %1022 = vmatpush.msra.mxu0 %v992
    %1023 = vmatpush.msra.mxu0 %v990
    %1024 = vmatpush.msra.mxu0 %v988
    %1025 = vmatmul.f32.gmra.mxu0 %v1007
    %v1026 = vpop.f32.mrf.mxu0
    %v1027 = vadd.f32 0.0, %v1026
    %1028 = vdwg.mxu0
    %1029 = vmatpush.msra.mxu0 0.0
    %1030 = vmatpush.msra.mxu0 0.0
    %1031 = vmatpush.msra.mxu0 0.0
    %1032 = vmatpush.msra.mxu0 0.0
    %1033 = vmatpush.msra.mxu0 0.0
    %1034 = vmatpush.msra.mxu0 0.0
    %1035 = vmatpush.msra.mxu0 0.0
    %1036 = vmatpush.msra.mxu0 0.0
    %1037 = vmatpush.msra.mxu0 %v1003
    %1038 = vmatpush.msra.mxu0 %v1001
    %1039 = vmatpush.msra.mxu0 %v999
    %1040 = vmatpush.msra.mxu0 %v997
    %1041 = vmatpush.msra.mxu0 %v995
    %1042 = vmatpush.msra.mxu0 %v993
    %1043 = vmatpush.msra.mxu0 %v991
    %1044 = vmatpush.msra.mxu0 %v989
    %1045 = vmatmul.f32.gmra.mxu0 %v1007
    %v1046 = vpop.f32.mrf.mxu0
    %v1047 = vadd.f32 0.0, %v1046
    %1048 = vdwg.mxu0
    %1049 = vmatpush.msra.mxu0 %v985
    %1050 = vmatpush.msra.mxu0 %v983
    %1051 = vmatpush.msra.mxu0 %v981
    %1052 = vmatpush.msra.mxu0 %v979
    %1053 = vmatpush.msra.mxu0 %v977
    %1054 = vmatpush.msra.mxu0 %v975
    %1055 = vmatpush.msra.mxu0 %v973
    %1056 = vmatpush.msra.mxu0 %v971
    %1057 = vmatpush.msra.mxu0 %v969
    %1058 = vmatpush.msra.mxu0 %v967
    %1059 = vmatpush.msra.mxu0 %v965
    %1060 = vmatpush.msra.mxu0 %v963
    %1061 = vmatpush.msra.mxu0 %v961
    %1062 = vmatpush.msra.mxu0 %v959
    %1063 = vmatpush.msra.mxu0 %v957
    %1064 = vmatpush.msra.mxu0 %v955
    %1065 = vmatmul.f32.gmra.mxu0 %v240
    %v1066 = vpop.f32.mrf.mxu0
    %v1067 = vadd.f32 %v1027, %v1066
    %1068 = vdwg.mxu0
    %1069 = vmatpush.msra.mxu0 %v986
    %1070 = vmatpush.msra.mxu0 %v984
    %1071 = vmatpush.msra.mxu0 %v982
    %1072 = vmatpush.msra.mxu0 %v980
    %1073 = vmatpush.msra.mxu0 %v978
    %1074 = vmatpush.msra.mxu0 %v976
    %1075 = vmatpush.msra.mxu0 %v974
    %1076 = vmatpush.msra.mxu0 %v972
    %1077 = vmatpush.msra.mxu0 %v970
    %1078 = vmatpush.msra.mxu0 %v968
    %1079 = vmatpush.msra.mxu0 %v966
    %1080 = vmatpush.msra.mxu0 %v964
    %1081 = vmatpush.msra.mxu0 %v962
    %1082 = vmatpush.msra.mxu0 %v960
    %1083 = vmatpush.msra.mxu0 %v958
    %1084 = vmatpush.msra.mxu0 %v956
    %1085 = vmatmul.f32.gmra.mxu0 %v240
    %v1086 = vpop.f32.mrf.mxu0
    %v1087 = vadd.f32 %v1047, %v1086
    %1088 = vdwg.mxu0
    %v1090 = vperm.slane %v1005, 0
    %v1091 = vperm.slane %v1005, 1
    %v1094 = vadd.f32 %v1067, %v1090
    %v1095 = vadd.f32 %v1087, %v1091
    %v1096 = vsub.f32 0.0, %v1094
    %v1097 = vmul.f32 %v1096, 1.442695
    %v1098 = vpow.pop %v1097
    %v1099 = vadd.f32 %v1098, 1.0
    %v1100 = vrcp.pop %v1099
    %v1101 = vmul.f32 %v1099, %v1100
    %v1102 = vsub.f32 1.0, %v1101
    %v1103 = vmul.f32 %v1100, %v1102
    %v1104 = vadd.f32 %v1100, %v1103
    %vm1105 = vweird.f32 %v1099
    %vm1106 = vweird.f32 %v1100
    %vm1107 = vmor %vm1105, %vm1106
    %v1108 = vsel %vm1107, %v1100, %v1104
    %v1109 = vand.u32 2147483647, %v1099
    %vm1110 = vcmp.eq.f32.partialorder %v1109, 8.507059e+37
    %v1111 = vand.u32 %v1099, 2147483648
    %v1112 = vor.u32 1.1754944e-38, %v1111
    %v1113 = vsel %vm1110, %v1112, %v1108
    %v1114 = vmul.f32 1.0, %v1113
    %v1115 = vtanh.pop %v1095
    %v1116 = vsub.f32 0.0, %v1095
    %v1117 = vmul.f32 %v1116, 1.442695
    %v1118 = vpow.pop %v1117
    %v1119 = vadd.f32 %v1118, 1.0
    %v1120 = vrcp.pop %v1119
    %v1121 = vmul.f32 %v1119, %v1120
    %v1122 = vsub.f32 1.0, %v1121
    %v1123 = vmul.f32 %v1120, %v1122
    %v1124 = vadd.f32 %v1120, %v1123
    %vm1125 = vweird.f32 %v1119
    %vm1126 = vweird.f32 %v1120
    %vm1127 = vmor %vm1125, %vm1126
    %v1128 = vsel %vm1127, %v1120, %v1124
    %v1129 = vand.u32 2147483647, %v1119
    %vm1130 = vcmp.eq.f32.partialorder %v1129, 8.507059e+37
    %v1131 = vand.u32 %v1119, 2147483648
    %v1132 = vor.u32 1.1754944e-38, %v1131
    %v1133 = vsel %vm1130, %v1132, %v1128
    %v1134 = vmul.f32 1.0, %v1133
    %1136 = vrot.lane.b32.xlu0 %v953, 64
    %v1137 = vpop.permute.xlu0 %1136
    %v1139 = vmul.f32 %v1114, %v1137
    %v1140 = vmul.f32 %v1114, %v1115
    %1142 = vrot.lane.b32.xlu0 %v1140, 64
    %v1143 = vpop.permute.xlu0 %1142
    %v1145 = vadd.f32 %v1139, %v1143
    %v1146 = vtanh.pop %v1145
    %v1147 = vmul.f32 %v1134, %v1146
    %s1148 = scalar_lea.vmem [#allocation7], 256
    %v1149 = vld [vmem:[%s1148] sm:$0xff]
    %v1150 = vld [vmem:[%s1148 + $0x8] sm:$0xff]
    %v1151 = vld [vmem:[%s1148 + $0x10] sm:$0xff]
    %v1152 = vld [vmem:[%s1148 + $0x18] sm:$0xff]
    %v1153 = vld [vmem:[%s1148 + $0x20] sm:$0xff]
    %v1154 = vld [vmem:[%s1148 + $0x28] sm:$0xff]
    %v1155 = vld [vmem:[%s1148 + $0x30] sm:$0xff]
    %v1156 = vld [vmem:[%s1148 + $0x38] sm:$0xff]
    %v1157 = vld [vmem:[#allocation13] sm:$0xff]
    %v1158 = vld [vmem:[#allocation13 + $0x8] sm:$0xff]
    %v1159 = vld [vmem:[#allocation13 + $0x10] sm:$0xff]
    %v1160 = vld [vmem:[#allocation13 + $0x18] sm:$0xff]
    %v1161 = vld [vmem:[#allocation13 + $0x20] sm:$0xff]
    %v1162 = vld [vmem:[#allocation13 + $0x28] sm:$0xff]
    %v1163 = vld [vmem:[#allocation13 + $0x30] sm:$0xff]
    %v1164 = vld [vmem:[#allocation13 + $0x38] sm:$0xff]
    %1166 = vrot.lane.b32.xlu0 %v1147, 64
    %v1167 = vpop.permute.xlu0 %1166
    %v1168 = vsel %vm291, %v1167, 0
    %1170 = vmatpush.msra.mxu0 0.0
    %1171 = vmatpush.msra.mxu0 0.0
    %1172 = vmatpush.msra.mxu0 0.0
    %1173 = vmatpush.msra.mxu0 0.0
    %1174 = vmatpush.msra.mxu0 0.0
    %1175 = vmatpush.msra.mxu0 0.0
    %1176 = vmatpush.msra.mxu0 0.0
    %1177 = vmatpush.msra.mxu0 0.0
    %1178 = vmatpush.msra.mxu0 %v1156
    %1179 = vmatpush.msra.mxu0 %v1155
    %1180 = vmatpush.msra.mxu0 %v1154
    %1181 = vmatpush.msra.mxu0 %v1153
    %1182 = vmatpush.msra.mxu0 %v1152
    %1183 = vmatpush.msra.mxu0 %v1151
    %1184 = vmatpush.msra.mxu0 %v1150
    %1185 = vmatpush.msra.mxu0 %v1149
    %1186 = vmatmul.f32.gmra.mxu0 %v1168
    %v1187 = vpop.f32.mrf.mxu0
    %v1188 = vadd.f32 0.0, %v1187
    %1189 = vdwg.mxu0
    %v1190 = vsel %vm472, %v1188, -inf
    %1191 = vmax.xlane.f32.xlu0 %v1190
    %v1192 = vpop.xlane.xlu0 %1191
    %v1193 = vsub.f32 %v1188, %v1192
    %v1194 = vmul.f32 %v1193, 1.442695
    %v1195 = vpow.pop %v1194
    %v1197 = vsel %vm291, %v1195, 0
    %1199 = vmatpush.msra.mxu0 0.0
    %1200 = vmatpush.msra.mxu0 0.0
    %1201 = vmatpush.msra.mxu0 0.0
    %1202 = vmatpush.msra.mxu0 0.0
    %1203 = vmatpush.msra.mxu0 0.0
    %1204 = vmatpush.msra.mxu0 0.0
    %1205 = vmatpush.msra.mxu0 0.0
    %1206 = vmatpush.msra.mxu0 0.0
    %1207 = vmatpush.msra.mxu0 %v1164
    %1208 = vmatpush.msra.mxu0 %v1163
    %1209 = vmatpush.msra.mxu0 %v1162
    %1210 = vmatpush.msra.mxu0 %v1161
    %1211 = vmatpush.msra.mxu0 %v1160
    %1212 = vmatpush.msra.mxu0 %v1159
    %1213 = vmatpush.msra.mxu0 %v1158
    %1214 = vmatpush.msra.mxu0 %v1157
    %1215 = vmatmul.f32.gmra.mxu0 %v1197
    %v1216 = vpop.f32.mrf.mxu0
    %v1217 = vadd.f32 0.0, %v1216
    %1218 = vdwg.mxu0
    %v1219 = vrcp.pop %v1217
    %v1220 = vmul.f32 %v1217, %v1219
    %v1221 = vsub.f32 1.0, %v1220
    %v1222 = vmul.f32 %v1219, %v1221
    %v1223 = vadd.f32 %v1219, %v1222
    %vm1224 = vweird.f32 %v1217
    %vm1225 = vweird.f32 %v1219
    %vm1226 = vmor %vm1224, %vm1225
    %v1227 = vsel %vm1226, %v1219, %v1223
    %v1228 = vand.u32 2147483647, %v1217
    %vm1229 = vcmp.eq.f32.partialorder %v1228, 8.507059e+37
    %v1230 = vand.u32 %v1217, 2147483648
    %v1231 = vor.u32 1.1754944e-38, %v1230
    %v1232 = vsel %vm1229, %v1231, %v1227
    %v1233 = vmul.f32 %v1195, %v1232
    %s1234 = scalar_lea.vmem [#allocation7], 320
    %v1235 = vld [vmem:[%s1234] sm:$0xff]
    %v1236 = vld [vmem:[%s1234 + $0x8] sm:$0xff]
    %v1237 = vld [vmem:[%s1234 + $0x10] sm:$0xff]
    %v1238 = vld [vmem:[%s1234 + $0x18] sm:$0xff]
    %v1239 = vld [vmem:[%s1234 + $0x20] sm:$0xff]
    %v1240 = vld [vmem:[%s1234 + $0x28] sm:$0xff]
    %v1241 = vld [vmem:[%s1234 + $0x30] sm:$0xff]
    %v1242 = vld [vmem:[%s1234 + $0x38] sm:$0xff]
    %1244 = vrot.lane.b32.xlu0 %v1145, 64
    %v1245 = vpop.permute.xlu0 %1244
    %v1246 = vsel %vm291, %v1245, 0
    %1248 = vmatpush.msra.mxu0 0.0
    %1249 = vmatpush.msra.mxu0 0.0
    %1250 = vmatpush.msra.mxu0 0.0
    %1251 = vmatpush.msra.mxu0 0.0
    %1252 = vmatpush.msra.mxu0 0.0
    %1253 = vmatpush.msra.mxu0 0.0
    %1254 = vmatpush.msra.mxu0 0.0
    %1255 = vmatpush.msra.mxu0 0.0
    %1256 = vmatpush.msra.mxu0 %v1242
    %1257 = vmatpush.msra.mxu0 %v1241
    %1258 = vmatpush.msra.mxu0 %v1240
    %1259 = vmatpush.msra.mxu0 %v1239
    %1260 = vmatpush.msra.mxu0 %v1238
    %1261 = vmatpush.msra.mxu0 %v1237
    %1262 = vmatpush.msra.mxu0 %v1236
    %1263 = vmatpush.msra.mxu0 %v1235
    %1264 = vmatmul.f32.gmra.mxu0 %v1246
    %v1265 = vpop.f32.mrf.mxu0
    %v1266 = vadd.f32 0.0, %v1265
    %1267 = vdwg.mxu0
    %v1268 = vsel %vm472, %v1266, -inf
    %1269 = vmax.xlane.f32.xlu0 %v1268
    %v1270 = vpop.xlane.xlu0 %1269
    %v1271 = vsub.f32 %v1266, %v1270
    %v1272 = vmul.f32 %v1271, 1.442695
    %v1273 = vpow.pop %v1272
    %v1275 = vsel %vm291, %v1273, 0
    %1277 = vmatpush.msra.mxu0 0.0
    %1278 = vmatpush.msra.mxu0 0.0
    %1279 = vmatpush.msra.mxu0 0.0
    %1280 = vmatpush.msra.mxu0 0.0
    %1281 = vmatpush.msra.mxu0 0.0
    %1282 = vmatpush.msra.mxu0 0.0
    %1283 = vmatpush.msra.mxu0 0.0
    %1284 = vmatpush.msra.mxu0 0.0
    %1285 = vmatpush.msra.mxu0 %v1164
    %1286 = vmatpush.msra.mxu0 %v1163
    %1287 = vmatpush.msra.mxu0 %v1162
    %1288 = vmatpush.msra.mxu0 %v1161
    %1289 = vmatpush.msra.mxu0 %v1160
    %1290 = vmatpush.msra.mxu0 %v1159
    %1291 = vmatpush.msra.mxu0 %v1158
    %1292 = vmatpush.msra.mxu0 %v1157
    %1293 = vmatmul.f32.gmra.mxu0 %v1275
    %v1294 = vpop.f32.mrf.mxu0
    %v1295 = vadd.f32 0.0, %v1294
    %1296 = vdwg.mxu0
    %v1297 = vrcp.pop %v1295
    %v1298 = vmul.f32 %v1295, %v1297
    %v1299 = vsub.f32 1.0, %v1298
    %v1300 = vmul.f32 %v1297, %v1299
    %v1301 = vadd.f32 %v1297, %v1300
    %vm1302 = vweird.f32 %v1295
    %vm1303 = vweird.f32 %v1297
    %vm1304 = vmor %vm1302, %vm1303
    %v1305 = vsel %vm1304, %v1297, %v1301
    %v1306 = vand.u32 2147483647, %v1295
    %vm1307 = vcmp.eq.f32.partialorder %v1306, 8.507059e+37
    %v1308 = vand.u32 %v1295, 2147483648
    %v1309 = vor.u32 1.1754944e-38, %v1308
    %v1310 = vsel %vm1307, %v1309, %v1305
    %v1311 = vmul.f32 %v1273, %v1310
    %s1312 = scalar_lea.vmem [#allocation2], 768
    %v1313 = vld [vmem:[%s1312] sm:$0xff]
    %v1314 = vld [vmem:[%s1312 + $0x8] sm:$0xff]
    %v1315 = vld [vmem:[%s1312 + $0x10] sm:$0xff]
    %v1316 = vld [vmem:[%s1312 + $0x18] sm:$0xff]
    %v1317 = vld [vmem:[%s1312 + $0x20] sm:$0xff]
    %v1318 = vld [vmem:[%s1312 + $0x28] sm:$0xff]
    %v1319 = vld [vmem:[%s1312 + $0x30] sm:$0xff]
    %v1320 = vld [vmem:[%s1312 + $0x38] sm:$0xff]
    %v1321 = vld [vmem:[%s1312 + $0x40] sm:$0xff]
    %v1322 = vld [vmem:[%s1312 + $0x48] sm:$0xff]
    %v1323 = vld [vmem:[%s1312 + $0x50] sm:$0xff]
    %v1324 = vld [vmem:[%s1312 + $0x58] sm:$0xff]
    %v1325 = vld [vmem:[%s1312 + $0x60] sm:$0xff]
    %v1326 = vld [vmem:[%s1312 + $0x68] sm:$0xff]
    %v1327 = vld [vmem:[%s1312 + $0x70] sm:$0xff]
    %v1328 = vld [vmem:[%s1312 + $0x78] sm:$0xff]
    %v1329 = vld [vmem:[%s1312 + $0x80] sm:$0xff]
    %v1330 = vld [vmem:[%s1312 + $0x88] sm:$0xff]
    %v1331 = vld [vmem:[%s1312 + $0x90] sm:$0xff]
    %v1332 = vld [vmem:[%s1312 + $0x98] sm:$0xff]
    %v1333 = vld [vmem:[%s1312 + $0xa0] sm:$0xff]
    %v1334 = vld [vmem:[%s1312 + $0xa8] sm:$0xff]
    %v1335 = vld [vmem:[%s1312 + $0xb0] sm:$0xff]
    %v1336 = vld [vmem:[%s1312 + $0xb8] sm:$0xff]
    %v1337 = vld [vmem:[%s1312 + $0xc0] sm:$0xff]
    %v1338 = vld [vmem:[%s1312 + $0xc8] sm:$0xff]
    %v1339 = vld [vmem:[%s1312 + $0xd0] sm:$0xff]
    %v1340 = vld [vmem:[%s1312 + $0xd8] sm:$0xff]
    %v1341 = vld [vmem:[%s1312 + $0xe0] sm:$0xff]
    %v1342 = vld [vmem:[%s1312 + $0xe8] sm:$0xff]
    %v1343 = vld [vmem:[%s1312 + $0xf0] sm:$0xff]
    %v1344 = vld [vmem:[%s1312 + $0xf8] sm:$0xff]
    %s1345 = scalar_lea.vmem [#allocation5], 384
    %v1346 = vld [vmem:[%s1345] sm:$0xff]
    %v1347 = vld [vmem:[%s1345 + $0x8] sm:$0xff]
    %v1348 = vld [vmem:[%s1345 + $0x10] sm:$0xff]
    %v1349 = vld [vmem:[%s1345 + $0x18] sm:$0xff]
    %v1350 = vld [vmem:[%s1345 + $0x20] sm:$0xff]
    %v1351 = vld [vmem:[%s1345 + $0x28] sm:$0xff]
    %v1352 = vld [vmem:[%s1345 + $0x30] sm:$0xff]
    %v1353 = vld [vmem:[%s1345 + $0x38] sm:$0xff]
    %v1354 = vld [vmem:[%s1345 + $0x40] sm:$0xff]
    %v1355 = vld [vmem:[%s1345 + $0x48] sm:$0xff]
    %v1356 = vld [vmem:[%s1345 + $0x50] sm:$0xff]
    %v1357 = vld [vmem:[%s1345 + $0x58] sm:$0xff]
    %v1358 = vld [vmem:[%s1345 + $0x60] sm:$0xff]
    %v1359 = vld [vmem:[%s1345 + $0x68] sm:$0xff]
    %v1360 = vld [vmem:[%s1345 + $0x70] sm:$0xff]
    %v1361 = vld [vmem:[%s1345 + $0x78] sm:$0xff]
    %s1362 = scalar_lea.vmem %s5, 3
    %v1363 = vld [vmem:[%s1362] ss:$4 sm:$0x3]
    %v1365 = vsel %vm291, %v1233, 0
    %1367 = vmatpush.msra.mxu0 0.0
    %1368 = vmatpush.msra.mxu0 0.0
    %1369 = vmatpush.msra.mxu0 0.0
    %1370 = vmatpush.msra.mxu0 0.0
    %1371 = vmatpush.msra.mxu0 0.0
    %1372 = vmatpush.msra.mxu0 0.0
    %1373 = vmatpush.msra.mxu0 0.0
    %1374 = vmatpush.msra.mxu0 0.0
    %1375 = vmatpush.msra.mxu0 %v1360
    %1376 = vmatpush.msra.mxu0 %v1358
    %1377 = vmatpush.msra.mxu0 %v1356
    %1378 = vmatpush.msra.mxu0 %v1354
    %1379 = vmatpush.msra.mxu0 %v1352
    %1380 = vmatpush.msra.mxu0 %v1350
    %1381 = vmatpush.msra.mxu0 %v1348
    %1382 = vmatpush.msra.mxu0 %v1346
    %1383 = vmatmul.f32.gmra.mxu0 %v1365
    %v1384 = vpop.f32.mrf.mxu0
    %v1385 = vadd.f32 0.0, %v1384
    %1386 = vdwg.mxu0
    %1387 = vmatpush.msra.mxu0 0.0
    %1388 = vmatpush.msra.mxu0 0.0
    %1389 = vmatpush.msra.mxu0 0.0
    %1390 = vmatpush.msra.mxu0 0.0
    %1391 = vmatpush.msra.mxu0 0.0
    %1392 = vmatpush.msra.mxu0 0.0
    %1393 = vmatpush.msra.mxu0 0.0
    %1394 = vmatpush.msra.mxu0 0.0
    %1395 = vmatpush.msra.mxu0 %v1361
    %1396 = vmatpush.msra.mxu0 %v1359
    %1397 = vmatpush.msra.mxu0 %v1357
    %1398 = vmatpush.msra.mxu0 %v1355
    %1399 = vmatpush.msra.mxu0 %v1353
    %1400 = vmatpush.msra.mxu0 %v1351
    %1401 = vmatpush.msra.mxu0 %v1349
    %1402 = vmatpush.msra.mxu0 %v1347
    %1403 = vmatmul.f32.gmra.mxu0 %v1365
    %v1404 = vpop.f32.mrf.mxu0
    %v1405 = vadd.f32 0.0, %v1404
    %1406 = vdwg.mxu0
    %1407 = vmatpush.msra.mxu0 %v1343
    %1408 = vmatpush.msra.mxu0 %v1341
    %1409 = vmatpush.msra.mxu0 %v1339
    %1410 = vmatpush.msra.mxu0 %v1337
    %1411 = vmatpush.msra.mxu0 %v1335
    %1412 = vmatpush.msra.mxu0 %v1333
    %1413 = vmatpush.msra.mxu0 %v1331
    %1414 = vmatpush.msra.mxu0 %v1329
    %1415 = vmatpush.msra.mxu0 %v1327
    %1416 = vmatpush.msra.mxu0 %v1325
    %1417 = vmatpush.msra.mxu0 %v1323
    %1418 = vmatpush.msra.mxu0 %v1321
    %1419 = vmatpush.msra.mxu0 %v1319
    %1420 = vmatpush.msra.mxu0 %v1317
    %1421 = vmatpush.msra.mxu0 %v1315
    %1422 = vmatpush.msra.mxu0 %v1313
    %1423 = vmatmul.f32.gmra.mxu0 %v240
    %v1424 = vpop.f32.mrf.mxu0
    %v1425 = vadd.f32 %v1385, %v1424
    %1426 = vdwg.mxu0
    %1427 = vmatpush.msra.mxu0 %v1344
    %1428 = vmatpush.msra.mxu0 %v1342
    %1429 = vmatpush.msra.mxu0 %v1340
    %1430 = vmatpush.msra.mxu0 %v1338
    %1431 = vmatpush.msra.mxu0 %v1336
    %1432 = vmatpush.msra.mxu0 %v1334
    %1433 = vmatpush.msra.mxu0 %v1332
    %1434 = vmatpush.msra.mxu0 %v1330
    %1435 = vmatpush.msra.mxu0 %v1328
    %1436 = vmatpush.msra.mxu0 %v1326
    %1437 = vmatpush.msra.mxu0 %v1324
    %1438 = vmatpush.msra.mxu0 %v1322
    %1439 = vmatpush.msra.mxu0 %v1320
    %1440 = vmatpush.msra.mxu0 %v1318
    %1441 = vmatpush.msra.mxu0 %v1316
    %1442 = vmatpush.msra.mxu0 %v1314
    %1443 = vmatmul.f32.gmra.mxu0 %v240
    %v1444 = vpop.f32.mrf.mxu0
    %v1445 = vadd.f32 %v1405, %v1444
    %1446 = vdwg.mxu0
    %v1448 = vperm.slane %v1363, 0
    %v1449 = vperm.slane %v1363, 1
    %v1452 = vadd.f32 %v1425, %v1448
    %v1453 = vadd.f32 %v1445, %v1449
    %v1454 = vsub.f32 0.0, %v1452
    %v1455 = vmul.f32 %v1454, 1.442695
    %v1456 = vpow.pop %v1455
    %v1457 = vadd.f32 %v1456, 1.0
    %v1458 = vrcp.pop %v1457
    %v1459 = vmul.f32 %v1457, %v1458
    %v1460 = vsub.f32 1.0, %v1459
    %v1461 = vmul.f32 %v1458, %v1460
    %v1462 = vadd.f32 %v1458, %v1461
    %vm1463 = vweird.f32 %v1457
    %vm1464 = vweird.f32 %v1458
    %vm1465 = vmor %vm1463, %vm1464
    %v1466 = vsel %vm1465, %v1458, %v1462
    %v1467 = vand.u32 2147483647, %v1457
    %vm1468 = vcmp.eq.f32.partialorder %v1467, 8.507059e+37
    %v1469 = vand.u32 %v1457, 2147483648
    %v1470 = vor.u32 1.1754944e-38, %v1469
    %v1471 = vsel %vm1468, %v1470, %v1466
    %v1472 = vmul.f32 1.0, %v1471
    %v1473 = vtanh.pop %v1453
    %v1474 = vsub.f32 0.0, %v1453
    %v1475 = vmul.f32 %v1474, 1.442695
    %v1476 = vpow.pop %v1475
    %v1477 = vadd.f32 %v1476, 1.0
    %v1478 = vrcp.pop %v1477
    %v1479 = vmul.f32 %v1477, %v1478
    %v1480 = vsub.f32 1.0, %v1479
    %v1481 = vmul.f32 %v1478, %v1480
    %v1482 = vadd.f32 %v1478, %v1481
    %vm1483 = vweird.f32 %v1477
    %vm1484 = vweird.f32 %v1478
    %vm1485 = vmor %vm1483, %vm1484
    %v1486 = vsel %vm1485, %v1478, %v1482
    %v1487 = vand.u32 2147483647, %v1477
    %vm1488 = vcmp.eq.f32.partialorder %v1487, 8.507059e+37
    %v1489 = vand.u32 %v1477, 2147483648
    %v1490 = vor.u32 1.1754944e-38, %v1489
    %v1491 = vsel %vm1488, %v1490, %v1486
    %v1492 = vmul.f32 1.0, %v1491
    %1494 = vrot.lane.b32.xlu0 %v1311, 64
    %v1495 = vpop.permute.xlu0 %1494
    %v1497 = vmul.f32 %v1472, %v1495
    %v1498 = vmul.f32 %v1472, %v1473
    %1500 = vrot.lane.b32.xlu0 %v1498, 64
    %v1501 = vpop.permute.xlu0 %1500
    %v1503 = vadd.f32 %v1497, %v1501
    %v1504 = vtanh.pop %v1503
    %v1505 = vmul.f32 %v1492, %v1504
    %v1506 = vld [vmem:[#allocation8] sm:$0xff]
    %v1507 = vld [vmem:[#allocation8 + $0x8] sm:$0xff]
    %v1508 = vld [vmem:[#allocation8 + $0x10] sm:$0xff]
    %v1509 = vld [vmem:[#allocation8 + $0x18] sm:$0xff]
    %v1510 = vld [vmem:[#allocation8 + $0x20] sm:$0xff]
    %v1511 = vld [vmem:[#allocation8 + $0x28] sm:$0xff]
    %v1512 = vld [vmem:[#allocation8 + $0x30] sm:$0xff]
    %v1513 = vld [vmem:[#allocation8 + $0x38] sm:$0xff]
    %v1514 = vld [vmem:[#allocation8 + $0x40] sm:$0xff]
    %v1515 = vld [vmem:[#allocation8 + $0x48] sm:$0xff]
    %v1516 = vld [vmem:[#allocation8 + $0x50] sm:$0xff]
    %v1517 = vld [vmem:[#allocation8 + $0x58] sm:$0xff]
    %v1518 = vld [vmem:[#allocation8 + $0x60] sm:$0xff]
    %v1519 = vld [vmem:[#allocation8 + $0x68] sm:$0xff]
    %v1520 = vld [vmem:[#allocation8 + $0x70] sm:$0xff]
    %v1521 = vld [vmem:[#allocation8 + $0x78] sm:$0xff]
    %v1522 = vld [vmem:[#allocation8 + $0x80] sm:$0xff]
    %v1523 = vld [vmem:[#allocation8 + $0x88] sm:$0xff]
    %v1524 = vld [vmem:[#allocation8 + $0x90] sm:$0xff]
    %v1525 = vld [vmem:[#allocation8 + $0x98] sm:$0xff]
    %v1526 = vld [vmem:[#allocation8 + $0xa0] sm:$0xff]
    %v1527 = vld [vmem:[#allocation8 + $0xa8] sm:$0xff]
    %v1528 = vld [vmem:[#allocation8 + $0xb0] sm:$0xff]
    %v1529 = vld [vmem:[#allocation8 + $0xb8] sm:$0xff]
    %v1530 = vld [vmem:[#allocation8 + $0xc0] sm:$0xff]
    %v1531 = vld [vmem:[#allocation8 + $0xc8] sm:$0xff]
    %v1532 = vld [vmem:[#allocation8 + $0xd0] sm:$0xff]
    %v1533 = vld [vmem:[#allocation8 + $0xd8] sm:$0xff]
    %v1534 = vld [vmem:[#allocation8 + $0xe0] sm:$0xff]
    %v1535 = vld [vmem:[#allocation8 + $0xe8] sm:$0xff]
    %v1536 = vld [vmem:[#allocation8 + $0xf0] sm:$0xff]
    %v1537 = vld [vmem:[#allocation8 + $0xf8] sm:$0xff]
    %v1538 = vld [vmem:[#allocation10] sm:$0xff]
    %v1539 = vld [vmem:[#allocation10 + $0x8] sm:$0xff]
    %v1540 = vld [vmem:[#allocation10 + $0x10] sm:$0xff]
    %v1541 = vld [vmem:[#allocation10 + $0x18] sm:$0xff]
    %v1542 = vld [vmem:[#allocation10 + $0x20] sm:$0xff]
    %v1543 = vld [vmem:[#allocation10 + $0x28] sm:$0xff]
    %v1544 = vld [vmem:[#allocation10 + $0x30] sm:$0xff]
    %v1545 = vld [vmem:[#allocation10 + $0x38] sm:$0xff]
    %v1546 = vld [vmem:[#allocation10 + $0x40] sm:$0xff]
    %v1547 = vld [vmem:[#allocation10 + $0x48] sm:$0xff]
    %v1548 = vld [vmem:[#allocation10 + $0x50] sm:$0xff]
    %v1549 = vld [vmem:[#allocation10 + $0x58] sm:$0xff]
    %v1550 = vld [vmem:[#allocation10 + $0x60] sm:$0xff]
    %v1551 = vld [vmem:[#allocation10 + $0x68] sm:$0xff]
    %v1552 = vld [vmem:[#allocation10 + $0x70] sm:$0xff]
    %v1553 = vld [vmem:[#allocation10 + $0x78] sm:$0xff]
    %v1554 = vld [vmem:[%s9] ss:$4 sm:$0x3]
    %1555 = vmatpush.msra.mxu0 0.0
    %1556 = vmatpush.msra.mxu0 0.0
    %1557 = vmatpush.msra.mxu0 0.0
    %1558 = vmatpush.msra.mxu0 0.0
    %1559 = vmatpush.msra.mxu0 0.0
    %1560 = vmatpush.msra.mxu0 0.0
    %1561 = vmatpush.msra.mxu0 0.0
    %1562 = vmatpush.msra.mxu0 0.0
    %1563 = vmatpush.msra.mxu0 %v1552
    %1564 = vmatpush.msra.mxu0 %v1550
    %1565 = vmatpush.msra.mxu0 %v1548
    %1566 = vmatpush.msra.mxu0 %v1546
    %1567 = vmatpush.msra.mxu0 %v1544
    %1568 = vmatpush.msra.mxu0 %v1542
    %1569 = vmatpush.msra.mxu0 %v1540
    %1570 = vmatpush.msra.mxu0 %v1538
    %1571 = vmatmul.f32.gmra.mxu0 %v293
    %v1572 = vpop.f32.mrf.mxu0
    %v1573 = vadd.f32 0.0, %v1572
    %1574 = vdwg.mxu0
    %1575 = vmatpush.msra.mxu0 0.0
    %1576 = vmatpush.msra.mxu0 0.0
    %1577 = vmatpush.msra.mxu0 0.0
    %1578 = vmatpush.msra.mxu0 0.0
    %1579 = vmatpush.msra.mxu0 0.0
    %1580 = vmatpush.msra.mxu0 0.0
    %1581 = vmatpush.msra.mxu0 0.0
    %1582 = vmatpush.msra.mxu0 0.0
    %1583 = vmatpush.msra.mxu0 %v1553
    %1584 = vmatpush.msra.mxu0 %v1551
    %1585 = vmatpush.msra.mxu0 %v1549
    %1586 = vmatpush.msra.mxu0 %v1547
    %1587 = vmatpush.msra.mxu0 %v1545
    %1588 = vmatpush.msra.mxu0 %v1543
    %1589 = vmatpush.msra.mxu0 %v1541
    %1590 = vmatpush.msra.mxu0 %v1539
    %1591 = vmatmul.f32.gmra.mxu0 %v293
    %v1592 = vpop.f32.mrf.mxu0
    %v1593 = vadd.f32 0.0, %v1592
    %1594 = vdwg.mxu0
    %1595 = vmatpush.msra.mxu0 %v1536
    %1596 = vmatpush.msra.mxu0 %v1534
    %1597 = vmatpush.msra.mxu0 %v1532
    %1598 = vmatpush.msra.mxu0 %v1530
    %1599 = vmatpush.msra.mxu0 %v1528
    %1600 = vmatpush.msra.mxu0 %v1526
    %1601 = vmatpush.msra.mxu0 %v1524
    %1602 = vmatpush.msra.mxu0 %v1522
    %1603 = vmatpush.msra.mxu0 %v1520
    %1604 = vmatpush.msra.mxu0 %v1518
    %1605 = vmatpush.msra.mxu0 %v1516
    %1606 = vmatpush.msra.mxu0 %v1514
    %1607 = vmatpush.msra.mxu0 %v1512
    %1608 = vmatpush.msra.mxu0 %v1510
    %1609 = vmatpush.msra.mxu0 %v1508
    %1610 = vmatpush.msra.mxu0 %v1506
    %1611 = vmatmul.f32.gmra.mxu0 %v240
    %v1612 = vpop.f32.mrf.mxu0
    %v1613 = vadd.f32 %v1573, %v1612
    %1614 = vdwg.mxu0
    %1615 = vmatpush.msra.mxu0 %v1537
    %1616 = vmatpush.msra.mxu0 %v1535
    %1617 = vmatpush.msra.mxu0 %v1533
    %1618 = vmatpush.msra.mxu0 %v1531
    %1619 = vmatpush.msra.mxu0 %v1529
    %1620 = vmatpush.msra.mxu0 %v1527
    %1621 = vmatpush.msra.mxu0 %v1525
    %1622 = vmatpush.msra.mxu0 %v1523
    %1623 = vmatpush.msra.mxu0 %v1521
    %1624 = vmatpush.msra.mxu0 %v1519
    %1625 = vmatpush.msra.mxu0 %v1517
    %1626 = vmatpush.msra.mxu0 %v1515
    %1627 = vmatpush.msra.mxu0 %v1513
    %1628 = vmatpush.msra.mxu0 %v1511
    %1629 = vmatpush.msra.mxu0 %v1509
    %1630 = vmatpush.msra.mxu0 %v1507
    %1631 = vmatmul.f32.gmra.mxu0 %v240
    %v1632 = vpop.f32.mrf.mxu0
    %v1633 = vadd.f32 %v1593, %v1632
    %1634 = vdwg.mxu0
    %v1636 = vperm.slane %v1554, 0
    %v1637 = vperm.slane %v1554, 1
    %v1640 = vadd.f32 %v1613, %v1636
    %v1641 = vadd.f32 %v1633, %v1637
    %v1642 = vsub.f32 0.0, %v1640
    %v1643 = vmul.f32 %v1642, 1.442695
    %v1644 = vpow.pop %v1643
    %v1645 = vadd.f32 %v1644, 1.0
    %v1646 = vrcp.pop %v1645
    %v1647 = vmul.f32 %v1645, %v1646
    %v1648 = vsub.f32 1.0, %v1647
    %v1649 = vmul.f32 %v1646, %v1648
    %v1650 = vadd.f32 %v1646, %v1649
    %vm1651 = vweird.f32 %v1645
    %vm1652 = vweird.f32 %v1646
    %vm1653 = vmor %vm1651, %vm1652
    %v1654 = vsel %vm1653, %v1646, %v1650
    %v1655 = vand.u32 2147483647, %v1645
    %vm1656 = vcmp.eq.f32.partialorder %v1655, 8.507059e+37
    %v1657 = vand.u32 %v1645, 2147483648
    %v1658 = vor.u32 1.1754944e-38, %v1657
    %v1659 = vsel %vm1656, %v1658, %v1654
    %v1660 = vmul.f32 1.0, %v1659
    %v1661 = vtanh.pop %v1641
    %v1662 = vsub.f32 0.0, %v1641
    %v1663 = vmul.f32 %v1662, 1.442695
    %v1664 = vpow.pop %v1663
    %v1665 = vadd.f32 %v1664, 1.0
    %v1666 = vrcp.pop %v1665
    %v1667 = vmul.f32 %v1665, %v1666
    %v1668 = vsub.f32 1.0, %v1667
    %v1669 = vmul.f32 %v1666, %v1668
    %v1670 = vadd.f32 %v1666, %v1669
    %vm1671 = vweird.f32 %v1665
    %vm1672 = vweird.f32 %v1666
    %vm1673 = vmor %vm1671, %vm1672
    %v1674 = vsel %vm1673, %v1666, %v1670
    %v1675 = vand.u32 2147483647, %v1665
    %vm1676 = vcmp.eq.f32.partialorder %v1675, 8.507059e+37
    %v1677 = vand.u32 %v1665, 2147483648
    %v1678 = vor.u32 1.1754944e-38, %v1677
    %v1679 = vsel %vm1676, %v1678, %v1674
    %v1680 = vmul.f32 1.0, %v1679
    %v1681 = vmul.f32 %v1660, 0.0
    %v1682 = vmul.f32 %v1660, %v1661
    %1684 = vrot.lane.b32.xlu0 %v1682, 64
    %v1685 = vpop.permute.xlu0 %1684
    %v1687 = vadd.f32 %v1681, %v1685
    %v1688 = vtanh.pop %v1687
    %v1689 = vmul.f32 %v1680, %v1688
    %v1690 = vld [vmem:[#allocation11] sm:$0xff]
    %v1691 = vld [vmem:[#allocation11 + $0x8] sm:$0xff]
    %v1692 = vld [vmem:[#allocation11 + $0x10] sm:$0xff]
    %v1693 = vld [vmem:[#allocation11 + $0x18] sm:$0xff]
    %v1694 = vld [vmem:[#allocation11 + $0x20] sm:$0xff]
    %v1695 = vld [vmem:[#allocation11 + $0x28] sm:$0xff]
    %v1696 = vld [vmem:[#allocation11 + $0x30] sm:$0xff]
    %v1697 = vld [vmem:[#allocation11 + $0x38] sm:$0xff]
    %1699 = vrot.lane.b32.xlu0 %v1689, 64
    %v1700 = vpop.permute.xlu0 %1699
    %v1701 = vsel %vm291, %v1700, 0
    %1703 = vmatpush.msra.mxu0 0.0
    %1704 = vmatpush.msra.mxu0 0.0
    %1705 = vmatpush.msra.mxu0 0.0
    %1706 = vmatpush.msra.mxu0 0.0
    %1707 = vmatpush.msra.mxu0 0.0
    %1708 = vmatpush.msra.mxu0 0.0
    %1709 = vmatpush.msra.mxu0 0.0
    %1710 = vmatpush.msra.mxu0 0.0
    %1711 = vmatpush.msra.mxu0 %v1697
    %1712 = vmatpush.msra.mxu0 %v1696
    %1713 = vmatpush.msra.mxu0 %v1695
    %1714 = vmatpush.msra.mxu0 %v1694
    %1715 = vmatpush.msra.mxu0 %v1693
    %1716 = vmatpush.msra.mxu0 %v1692
    %1717 = vmatpush.msra.mxu0 %v1691
    %1718 = vmatpush.msra.mxu0 %v1690
    %1719 = vmatmul.f32.gmra.mxu0 %v1701
    %v1720 = vpop.f32.mrf.mxu0
    %v1721 = vadd.f32 0.0, %v1720
    %1722 = vdwg.mxu0
    %v1723 = vsel %vm472, %v1721, -inf
    %1724 = vmax.xlane.f32.xlu0 %v1723
    %v1725 = vpop.xlane.xlu0 %1724
    %v1726 = vsub.f32 %v1721, %v1725
    %v1727 = vmul.f32 %v1726, 1.442695
    %v1728 = vpow.pop %v1727
    %v1730 = vsel %vm291, %v1728, 0
    %1732 = vmatpush.msra.mxu0 0.0
    %1733 = vmatpush.msra.mxu0 0.0
    %1734 = vmatpush.msra.mxu0 0.0
    %1735 = vmatpush.msra.mxu0 0.0
    %1736 = vmatpush.msra.mxu0 0.0
    %1737 = vmatpush.msra.mxu0 0.0
    %1738 = vmatpush.msra.mxu0 0.0
    %1739 = vmatpush.msra.mxu0 0.0
    %1740 = vmatpush.msra.mxu0 %v806
    %1741 = vmatpush.msra.mxu0 %v805
    %1742 = vmatpush.msra.mxu0 %v804
    %1743 = vmatpush.msra.mxu0 %v803
    %1744 = vmatpush.msra.mxu0 %v802
    %1745 = vmatpush.msra.mxu0 %v801
    %1746 = vmatpush.msra.mxu0 %v800
    %1747 = vmatpush.msra.mxu0 %v799
    %1748 = vmatmul.f32.gmra.mxu0 %v1730
    %v1749 = vpop.f32.mrf.mxu0
    %v1750 = vadd.f32 0.0, %v1749
    %1751 = vdwg.mxu0
    %v1752 = vrcp.pop %v1750
    %v1753 = vmul.f32 %v1750, %v1752
    %v1754 = vsub.f32 1.0, %v1753
    %v1755 = vmul.f32 %v1752, %v1754
    %v1756 = vadd.f32 %v1752, %v1755
    %vm1757 = vweird.f32 %v1750
    %vm1758 = vweird.f32 %v1752
    %vm1759 = vmor %vm1757, %vm1758
    %v1760 = vsel %vm1759, %v1752, %v1756
    %v1761 = vand.u32 2147483647, %v1750
    %vm1762 = vcmp.eq.f32.partialorder %v1761, 8.507059e+37
    %v1763 = vand.u32 %v1750, 2147483648
    %v1764 = vor.u32 1.1754944e-38, %v1763
    %v1765 = vsel %vm1762, %v1764, %v1760
    %v1766 = vmul.f32 %v1728, %v1765
    %s1767 = scalar_lea.vmem [#allocation11], 64
    %v1768 = vld [vmem:[%s1767] sm:$0xff]
    %v1769 = vld [vmem:[%s1767 + $0x8] sm:$0xff]
    %v1770 = vld [vmem:[%s1767 + $0x10] sm:$0xff]
    %v1771 = vld [vmem:[%s1767 + $0x18] sm:$0xff]
    %v1772 = vld [vmem:[%s1767 + $0x20] sm:$0xff]
    %v1773 = vld [vmem:[%s1767 + $0x28] sm:$0xff]
    %v1774 = vld [vmem:[%s1767 + $0x30] sm:$0xff]
    %v1775 = vld [vmem:[%s1767 + $0x38] sm:$0xff]
    %1777 = vrot.lane.b32.xlu0 %v1687, 64
    %v1778 = vpop.permute.xlu0 %1777
    %v1779 = vsel %vm291, %v1778, 0
    %1781 = vmatpush.msra.mxu0 0.0
    %1782 = vmatpush.msra.mxu0 0.0
    %1783 = vmatpush.msra.mxu0 0.0
    %1784 = vmatpush.msra.mxu0 0.0
    %1785 = vmatpush.msra.mxu0 0.0
    %1786 = vmatpush.msra.mxu0 0.0
    %1787 = vmatpush.msra.mxu0 0.0
    %1788 = vmatpush.msra.mxu0 0.0
    %1789 = vmatpush.msra.mxu0 %v1775
    %1790 = vmatpush.msra.mxu0 %v1774
    %1791 = vmatpush.msra.mxu0 %v1773
    %1792 = vmatpush.msra.mxu0 %v1772
    %1793 = vmatpush.msra.mxu0 %v1771
    %1794 = vmatpush.msra.mxu0 %v1770
    %1795 = vmatpush.msra.mxu0 %v1769
    %1796 = vmatpush.msra.mxu0 %v1768
    %1797 = vmatmul.f32.gmra.mxu0 %v1779
    %v1798 = vpop.f32.mrf.mxu0
    %v1799 = vadd.f32 0.0, %v1798
    %1800 = vdwg.mxu0
    %v1801 = vsel %vm472, %v1799, -inf
    %1802 = vmax.xlane.f32.xlu0 %v1801
    %v1803 = vpop.xlane.xlu0 %1802
    %v1804 = vsub.f32 %v1799, %v1803
    %v1805 = vmul.f32 %v1804, 1.442695
    %v1806 = vpow.pop %v1805
    %v1808 = vsel %vm291, %v1806, 0
    %1810 = vmatpush.msra.mxu0 0.0
    %1811 = vmatpush.msra.mxu0 0.0
    %1812 = vmatpush.msra.mxu0 0.0
    %1813 = vmatpush.msra.mxu0 0.0
    %1814 = vmatpush.msra.mxu0 0.0
    %1815 = vmatpush.msra.mxu0 0.0
    %1816 = vmatpush.msra.mxu0 0.0
    %1817 = vmatpush.msra.mxu0 0.0
    %1818 = vmatpush.msra.mxu0 %v806
    %1819 = vmatpush.msra.mxu0 %v805
    %1820 = vmatpush.msra.mxu0 %v804
    %1821 = vmatpush.msra.mxu0 %v803
    %1822 = vmatpush.msra.mxu0 %v802
    %1823 = vmatpush.msra.mxu0 %v801
    %1824 = vmatpush.msra.mxu0 %v800
    %1825 = vmatpush.msra.mxu0 %v799
    %1826 = vmatmul.f32.gmra.mxu0 %v1808
    %v1827 = vpop.f32.mrf.mxu0
    %v1828 = vadd.f32 0.0, %v1827
    %1829 = vdwg.mxu0
    %v1830 = vrcp.pop %v1828
    %v1831 = vmul.f32 %v1828, %v1830
    %v1832 = vsub.f32 1.0, %v1831
    %v1833 = vmul.f32 %v1830, %v1832
    %v1834 = vadd.f32 %v1830, %v1833
    %vm1835 = vweird.f32 %v1828
    %vm1836 = vweird.f32 %v1830
    %vm1837 = vmor %vm1835, %vm1836
    %v1838 = vsel %vm1837, %v1830, %v1834
    %v1839 = vand.u32 2147483647, %v1828
    %vm1840 = vcmp.eq.f32.partialorder %v1839, 8.507059e+37
    %v1841 = vand.u32 %v1828, 2147483648
    %v1842 = vor.u32 1.1754944e-38, %v1841
    %v1843 = vsel %vm1840, %v1842, %v1838
    %v1844 = vmul.f32 %v1806, %v1843
    %s1845 = scalar_lea.vmem [#allocation8], 256
    %v1846 = vld [vmem:[%s1845] sm:$0xff]
    %v1847 = vld [vmem:[%s1845 + $0x8] sm:$0xff]
    %v1848 = vld [vmem:[%s1845 + $0x10] sm:$0xff]
    %v1849 = vld [vmem:[%s1845 + $0x18] sm:$0xff]
    %v1850 = vld [vmem:[%s1845 + $0x20] sm:$0xff]
    %v1851 = vld [vmem:[%s1845 + $0x28] sm:$0xff]
    %v1852 = vld [vmem:[%s1845 + $0x30] sm:$0xff]
    %v1853 = vld [vmem:[%s1845 + $0x38] sm:$0xff]
    %v1854 = vld [vmem:[%s1845 + $0x40] sm:$0xff]
    %v1855 = vld [vmem:[%s1845 + $0x48] sm:$0xff]
    %v1856 = vld [vmem:[%s1845 + $0x50] sm:$0xff]
    %v1857 = vld [vmem:[%s1845 + $0x58] sm:$0xff]
    %v1858 = vld [vmem:[%s1845 + $0x60] sm:$0xff]
    %v1859 = vld [vmem:[%s1845 + $0x68] sm:$0xff]
    %v1860 = vld [vmem:[%s1845 + $0x70] sm:$0xff]
    %v1861 = vld [vmem:[%s1845 + $0x78] sm:$0xff]
    %v1862 = vld [vmem:[%s1845 + $0x80] sm:$0xff]
    %v1863 = vld [vmem:[%s1845 + $0x88] sm:$0xff]
    %v1864 = vld [vmem:[%s1845 + $0x90] sm:$0xff]
    %v1865 = vld [vmem:[%s1845 + $0x98] sm:$0xff]
    %v1866 = vld [vmem:[%s1845 + $0xa0] sm:$0xff]
    %v1867 = vld [vmem:[%s1845 + $0xa8] sm:$0xff]
    %v1868 = vld [vmem:[%s1845 + $0xb0] sm:$0xff]
    %v1869 = vld [vmem:[%s1845 + $0xb8] sm:$0xff]
    %v1870 = vld [vmem:[%s1845 + $0xc0] sm:$0xff]
    %v1871 = vld [vmem:[%s1845 + $0xc8] sm:$0xff]
    %v1872 = vld [vmem:[%s1845 + $0xd0] sm:$0xff]
    %v1873 = vld [vmem:[%s1845 + $0xd8] sm:$0xff]
    %v1874 = vld [vmem:[%s1845 + $0xe0] sm:$0xff]
    %v1875 = vld [vmem:[%s1845 + $0xe8] sm:$0xff]
    %v1876 = vld [vmem:[%s1845 + $0xf0] sm:$0xff]
    %v1877 = vld [vmem:[%s1845 + $0xf8] sm:$0xff]
    %s1878 = scalar_lea.vmem [#allocation10], 128
    %v1879 = vld [vmem:[%s1878] sm:$0xff]
    %v1880 = vld [vmem:[%s1878 + $0x8] sm:$0xff]
    %v1881 = vld [vmem:[%s1878 + $0x10] sm:$0xff]
    %v1882 = vld [vmem:[%s1878 + $0x18] sm:$0xff]
    %v1883 = vld [vmem:[%s1878 + $0x20] sm:$0xff]
    %v1884 = vld [vmem:[%s1878 + $0x28] sm:$0xff]
    %v1885 = vld [vmem:[%s1878 + $0x30] sm:$0xff]
    %v1886 = vld [vmem:[%s1878 + $0x38] sm:$0xff]
    %v1887 = vld [vmem:[%s1878 + $0x40] sm:$0xff]
    %v1888 = vld [vmem:[%s1878 + $0x48] sm:$0xff]
    %v1889 = vld [vmem:[%s1878 + $0x50] sm:$0xff]
    %v1890 = vld [vmem:[%s1878 + $0x58] sm:$0xff]
    %v1891 = vld [vmem:[%s1878 + $0x60] sm:$0xff]
    %v1892 = vld [vmem:[%s1878 + $0x68] sm:$0xff]
    %v1893 = vld [vmem:[%s1878 + $0x70] sm:$0xff]
    %v1894 = vld [vmem:[%s1878 + $0x78] sm:$0xff]
    %s1895 = scalar_lea.vmem %s9, 1
    %v1896 = vld [vmem:[%s1895] ss:$4 sm:$0x3]
    %v1898 = vsel %vm291, %v1766, 0
    %1900 = vmatpush.msra.mxu0 0.0
    %1901 = vmatpush.msra.mxu0 0.0
    %1902 = vmatpush.msra.mxu0 0.0
    %1903 = vmatpush.msra.mxu0 0.0
    %1904 = vmatpush.msra.mxu0 0.0
    %1905 = vmatpush.msra.mxu0 0.0
    %1906 = vmatpush.msra.mxu0 0.0
    %1907 = vmatpush.msra.mxu0 0.0
    %1908 = vmatpush.msra.mxu0 %v1893
    %1909 = vmatpush.msra.mxu0 %v1891
    %1910 = vmatpush.msra.mxu0 %v1889
    %1911 = vmatpush.msra.mxu0 %v1887
    %1912 = vmatpush.msra.mxu0 %v1885
    %1913 = vmatpush.msra.mxu0 %v1883
    %1914 = vmatpush.msra.mxu0 %v1881
    %1915 = vmatpush.msra.mxu0 %v1879
    %1916 = vmatmul.f32.gmra.mxu0 %v1898
    %v1917 = vpop.f32.mrf.mxu0
    %v1918 = vadd.f32 0.0, %v1917
    %1919 = vdwg.mxu0
    %1920 = vmatpush.msra.mxu0 0.0
    %1921 = vmatpush.msra.mxu0 0.0
    %1922 = vmatpush.msra.mxu0 0.0
    %1923 = vmatpush.msra.mxu0 0.0
    %1924 = vmatpush.msra.mxu0 0.0
    %1925 = vmatpush.msra.mxu0 0.0
    %1926 = vmatpush.msra.mxu0 0.0
    %1927 = vmatpush.msra.mxu0 0.0
    %1928 = vmatpush.msra.mxu0 %v1894
    %1929 = vmatpush.msra.mxu0 %v1892
    %1930 = vmatpush.msra.mxu0 %v1890
    %1931 = vmatpush.msra.mxu0 %v1888
    %1932 = vmatpush.msra.mxu0 %v1886
    %1933 = vmatpush.msra.mxu0 %v1884
    %1934 = vmatpush.msra.mxu0 %v1882
    %1935 = vmatpush.msra.mxu0 %v1880
    %1936 = vmatmul.f32.gmra.mxu0 %v1898
    %v1937 = vpop.f32.mrf.mxu0
    %v1938 = vadd.f32 0.0, %v1937
    %1939 = vdwg.mxu0
    %1940 = vmatpush.msra.mxu0 %v1876
    %1941 = vmatpush.msra.mxu0 %v1874
    %1942 = vmatpush.msra.mxu0 %v1872
    %1943 = vmatpush.msra.mxu0 %v1870
    %1944 = vmatpush.msra.mxu0 %v1868
    %1945 = vmatpush.msra.mxu0 %v1866
    %1946 = vmatpush.msra.mxu0 %v1864
    %1947 = vmatpush.msra.mxu0 %v1862
    %1948 = vmatpush.msra.mxu0 %v1860
    %1949 = vmatpush.msra.mxu0 %v1858
    %1950 = vmatpush.msra.mxu0 %v1856
    %1951 = vmatpush.msra.mxu0 %v1854
    %1952 = vmatpush.msra.mxu0 %v1852
    %1953 = vmatpush.msra.mxu0 %v1850
    %1954 = vmatpush.msra.mxu0 %v1848
    %1955 = vmatpush.msra.mxu0 %v1846
    %1956 = vmatmul.f32.gmra.mxu0 %v240
    %v1957 = vpop.f32.mrf.mxu0
    %v1958 = vadd.f32 %v1918, %v1957
    %1959 = vdwg.mxu0
    %1960 = vmatpush.msra.mxu0 %v1877
    %1961 = vmatpush.msra.mxu0 %v1875
    %1962 = vmatpush.msra.mxu0 %v1873
    %1963 = vmatpush.msra.mxu0 %v1871
    %1964 = vmatpush.msra.mxu0 %v1869
    %1965 = vmatpush.msra.mxu0 %v1867
    %1966 = vmatpush.msra.mxu0 %v1865
    %1967 = vmatpush.msra.mxu0 %v1863
    %1968 = vmatpush.msra.mxu0 %v1861
    %1969 = vmatpush.msra.mxu0 %v1859
    %1970 = vmatpush.msra.mxu0 %v1857
    %1971 = vmatpush.msra.mxu0 %v1855
    %1972 = vmatpush.msra.mxu0 %v1853
    %1973 = vmatpush.msra.mxu0 %v1851
    %1974 = vmatpush.msra.mxu0 %v1849
    %1975 = vmatpush.msra.mxu0 %v1847
    %1976 = vmatmul.f32.gmra.mxu0 %v240
    %v1977 = vpop.f32.mrf.mxu0
    %v1978 = vadd.f32 %v1938, %v1977
    %1979 = vdwg.mxu0
    %v1981 = vperm.slane %v1896, 0
    %v1982 = vperm.slane %v1896, 1
    %v1985 = vadd.f32 %v1958, %v1981
    %v1986 = vadd.f32 %v1978, %v1982
    %v1987 = vsub.f32 0.0, %v1985
    %v1988 = vmul.f32 %v1987, 1.442695
    %v1989 = vpow.pop %v1988
    %v1990 = vadd.f32 %v1989, 1.0
    %v1991 = vrcp.pop %v1990
    %v1992 = vmul.f32 %v1990, %v1991
    %v1993 = vsub.f32 1.0, %v1992
    %v1994 = vmul.f32 %v1991, %v1993
    %v1995 = vadd.f32 %v1991, %v1994
    %vm1996 = vweird.f32 %v1990
    %vm1997 = vweird.f32 %v1991
    %vm1998 = vmor %vm1996, %vm1997
    %v1999 = vsel %vm1998, %v1991, %v1995
    %v2000 = vand.u32 2147483647, %v1990
    %vm2001 = vcmp.eq.f32.partialorder %v2000, 8.507059e+37
    %v2002 = vand.u32 %v1990, 2147483648
    %v2003 = vor.u32 1.1754944e-38, %v2002
    %v2004 = vsel %vm2001, %v2003, %v1999
    %v2005 = vmul.f32 1.0, %v2004
    %v2006 = vtanh.pop %v1986
    %v2007 = vsub.f32 0.0, %v1986
    %v2008 = vmul.f32 %v2007, 1.442695
    %v2009 = vpow.pop %v2008
    %v2010 = vadd.f32 %v2009, 1.0
    %v2011 = vrcp.pop %v2010
    %v2012 = vmul.f32 %v2010, %v2011
    %v2013 = vsub.f32 1.0, %v2012
    %v2014 = vmul.f32 %v2011, %v2013
    %v2015 = vadd.f32 %v2011, %v2014
    %vm2016 = vweird.f32 %v2010
    %vm2017 = vweird.f32 %v2011
    %vm2018 = vmor %vm2016, %vm2017
    %v2019 = vsel %vm2018, %v2011, %v2015
    %v2020 = vand.u32 2147483647, %v2010
    %vm2021 = vcmp.eq.f32.partialorder %v2020, 8.507059e+37
    %v2022 = vand.u32 %v2010, 2147483648
    %v2023 = vor.u32 1.1754944e-38, %v2022
    %v2024 = vsel %vm2021, %v2023, %v2019
    %v2025 = vmul.f32 1.0, %v2024
    %2027 = vrot.lane.b32.xlu0 %v1844, 64
    %v2028 = vpop.permute.xlu0 %2027
    %v2030 = vmul.f32 %v2005, %v2028
    %v2031 = vmul.f32 %v2005, %v2006
    %2033 = vrot.lane.b32.xlu0 %v2031, 64
    %v2034 = vpop.permute.xlu0 %2033
    %v2036 = vadd.f32 %v2030, %v2034
    %v2037 = vtanh.pop %v2036
    %v2038 = vmul.f32 %v2025, %v2037
    %s2039 = scalar_lea.vmem [#allocation11], 128
    %v2040 = vld [vmem:[%s2039] sm:$0xff]
    %v2041 = vld [vmem:[%s2039 + $0x8] sm:$0xff]
    %v2042 = vld [vmem:[%s2039 + $0x10] sm:$0xff]
    %v2043 = vld [vmem:[%s2039 + $0x18] sm:$0xff]
    %v2044 = vld [vmem:[%s2039 + $0x20] sm:$0xff]
    %v2045 = vld [vmem:[%s2039 + $0x28] sm:$0xff]
    %v2046 = vld [vmem:[%s2039 + $0x30] sm:$0xff]
    %v2047 = vld [vmem:[%s2039 + $0x38] sm:$0xff]
    %2049 = vrot.lane.b32.xlu0 %v2038, 64
    %v2050 = vpop.permute.xlu0 %2049
    %v2051 = vsel %vm291, %v2050, 0
    %2053 = vmatpush.msra.mxu0 0.0
    %2054 = vmatpush.msra.mxu0 0.0
    %2055 = vmatpush.msra.mxu0 0.0
    %2056 = vmatpush.msra.mxu0 0.0
    %2057 = vmatpush.msra.mxu0 0.0
    %2058 = vmatpush.msra.mxu0 0.0
    %2059 = vmatpush.msra.mxu0 0.0
    %2060 = vmatpush.msra.mxu0 0.0
    %2061 = vmatpush.msra.mxu0 %v2047
    %2062 = vmatpush.msra.mxu0 %v2046
    %2063 = vmatpush.msra.mxu0 %v2045
    %2064 = vmatpush.msra.mxu0 %v2044
    %2065 = vmatpush.msra.mxu0 %v2043
    %2066 = vmatpush.msra.mxu0 %v2042
    %2067 = vmatpush.msra.mxu0 %v2041
    %2068 = vmatpush.msra.mxu0 %v2040
    %2069 = vmatmul.f32.gmra.mxu0 %v2051
    %v2070 = vpop.f32.mrf.mxu0
    %v2071 = vadd.f32 0.0, %v2070
    %2072 = vdwg.mxu0
    %v2073 = vsel %vm472, %v2071, -inf
    %2074 = vmax.xlane.f32.xlu0 %v2073
    %v2075 = vpop.xlane.xlu0 %2074
    %v2076 = vsub.f32 %v2071, %v2075
    %v2077 = vmul.f32 %v2076, 1.442695
    %v2078 = vpow.pop %v2077
    %v2080 = vsel %vm291, %v2078, 0
    %2082 = vmatpush.msra.mxu0 0.0
    %2083 = vmatpush.msra.mxu0 0.0
    %2084 = vmatpush.msra.mxu0 0.0
    %2085 = vmatpush.msra.mxu0 0.0
    %2086 = vmatpush.msra.mxu0 0.0
    %2087 = vmatpush.msra.mxu0 0.0
    %2088 = vmatpush.msra.mxu0 0.0
    %2089 = vmatpush.msra.mxu0 0.0
    %2090 = vmatpush.msra.mxu0 %v446
    %2091 = vmatpush.msra.mxu0 %v445
    %2092 = vmatpush.msra.mxu0 %v444
    %2093 = vmatpush.msra.mxu0 %v443
    %2094 = vmatpush.msra.mxu0 %v442
    %2095 = vmatpush.msra.mxu0 %v441
    %2096 = vmatpush.msra.mxu0 %v440
    %2097 = vmatpush.msra.mxu0 %v439
    %2098 = vmatmul.f32.gmra.mxu0 %v2080
    %v2099 = vpop.f32.mrf.mxu0
    %v2100 = vadd.f32 0.0, %v2099
    %2101 = vdwg.mxu0
    %v2102 = vrcp.pop %v2100
    %v2103 = vmul.f32 %v2100, %v2102
    %v2104 = vsub.f32 1.0, %v2103
    %v2105 = vmul.f32 %v2102, %v2104
    %v2106 = vadd.f32 %v2102, %v2105
    %vm2107 = vweird.f32 %v2100
    %vm2108 = vweird.f32 %v2102
    %vm2109 = vmor %vm2107, %vm2108
    %v2110 = vsel %vm2109, %v2102, %v2106
    %v2111 = vand.u32 2147483647, %v2100
    %vm2112 = vcmp.eq.f32.partialorder %v2111, 8.507059e+37
    %v2113 = vand.u32 %v2100, 2147483648
    %v2114 = vor.u32 1.1754944e-38, %v2113
    %v2115 = vsel %vm2112, %v2114, %v2110
    %v2116 = vmul.f32 %v2078, %v2115
    %s2117 = scalar_lea.vmem [#allocation11], 192
    %v2118 = vld [vmem:[%s2117] sm:$0xff]
    %v2119 = vld [vmem:[%s2117 + $0x8] sm:$0xff]
    %v2120 = vld [vmem:[%s2117 + $0x10] sm:$0xff]
    %v2121 = vld [vmem:[%s2117 + $0x18] sm:$0xff]
    %v2122 = vld [vmem:[%s2117 + $0x20] sm:$0xff]
    %v2123 = vld [vmem:[%s2117 + $0x28] sm:$0xff]
    %v2124 = vld [vmem:[%s2117 + $0x30] sm:$0xff]
    %v2125 = vld [vmem:[%s2117 + $0x38] sm:$0xff]
    %2127 = vrot.lane.b32.xlu0 %v2036, 64
    %v2128 = vpop.permute.xlu0 %2127
    %v2129 = vsel %vm291, %v2128, 0
    %2131 = vmatpush.msra.mxu0 0.0
    %2132 = vmatpush.msra.mxu0 0.0
    %2133 = vmatpush.msra.mxu0 0.0
    %2134 = vmatpush.msra.mxu0 0.0
    %2135 = vmatpush.msra.mxu0 0.0
    %2136 = vmatpush.msra.mxu0 0.0
    %2137 = vmatpush.msra.mxu0 0.0
    %2138 = vmatpush.msra.mxu0 0.0
    %2139 = vmatpush.msra.mxu0 %v2125
    %2140 = vmatpush.msra.mxu0 %v2124
    %2141 = vmatpush.msra.mxu0 %v2123
    %2142 = vmatpush.msra.mxu0 %v2122
    %2143 = vmatpush.msra.mxu0 %v2121
    %2144 = vmatpush.msra.mxu0 %v2120
    %2145 = vmatpush.msra.mxu0 %v2119
    %2146 = vmatpush.msra.mxu0 %v2118
    %2147 = vmatmul.f32.gmra.mxu0 %v2129
    %v2148 = vpop.f32.mrf.mxu0
    %v2149 = vadd.f32 0.0, %v2148
    %2150 = vdwg.mxu0
    %v2151 = vsel %vm472, %v2149, -inf
    %2152 = vmax.xlane.f32.xlu0 %v2151
    %v2153 = vpop.xlane.xlu0 %2152
    %v2154 = vsub.f32 %v2149, %v2153
    %v2155 = vmul.f32 %v2154, 1.442695
    %v2156 = vpow.pop %v2155
    %v2158 = vsel %vm291, %v2156, 0
    %2160 = vmatpush.msra.mxu0 0.0
    %2161 = vmatpush.msra.mxu0 0.0
    %2162 = vmatpush.msra.mxu0 0.0
    %2163 = vmatpush.msra.mxu0 0.0
    %2164 = vmatpush.msra.mxu0 0.0
    %2165 = vmatpush.msra.mxu0 0.0
    %2166 = vmatpush.msra.mxu0 0.0
    %2167 = vmatpush.msra.mxu0 0.0
    %2168 = vmatpush.msra.mxu0 %v446
    %2169 = vmatpush.msra.mxu0 %v445
    %2170 = vmatpush.msra.mxu0 %v444
    %2171 = vmatpush.msra.mxu0 %v443
    %2172 = vmatpush.msra.mxu0 %v442
    %2173 = vmatpush.msra.mxu0 %v441
    %2174 = vmatpush.msra.mxu0 %v440
    %2175 = vmatpush.msra.mxu0 %v439
    %2176 = vmatmul.f32.gmra.mxu0 %v2158
    %v2177 = vpop.f32.mrf.mxu0
    %v2178 = vadd.f32 0.0, %v2177
    %2179 = vdwg.mxu0
    %v2180 = vrcp.pop %v2178
    %v2181 = vmul.f32 %v2178, %v2180
    %v2182 = vsub.f32 1.0, %v2181
    %v2183 = vmul.f32 %v2180, %v2182
    %v2184 = vadd.f32 %v2180, %v2183
    %vm2185 = vweird.f32 %v2178
    %vm2186 = vweird.f32 %v2180
    %vm2187 = vmor %vm2185, %vm2186
    %v2188 = vsel %vm2187, %v2180, %v2184
    %v2189 = vand.u32 2147483647, %v2178
    %vm2190 = vcmp.eq.f32.partialorder %v2189, 8.507059e+37
    %v2191 = vand.u32 %v2178, 2147483648
    %v2192 = vor.u32 1.1754944e-38, %v2191
    %v2193 = vsel %vm2190, %v2192, %v2188
    %v2194 = vmul.f32 %v2156, %v2193
    %s2195 = scalar_lea.vmem [#allocation8], 512
    %v2196 = vld [vmem:[%s2195] sm:$0xff]
    %v2197 = vld [vmem:[%s2195 + $0x8] sm:$0xff]
    %v2198 = vld [vmem:[%s2195 + $0x10] sm:$0xff]
    %v2199 = vld [vmem:[%s2195 + $0x18] sm:$0xff]
    %v2200 = vld [vmem:[%s2195 + $0x20] sm:$0xff]
    %v2201 = vld [vmem:[%s2195 + $0x28] sm:$0xff]
    %v2202 = vld [vmem:[%s2195 + $0x30] sm:$0xff]
    %v2203 = vld [vmem:[%s2195 + $0x38] sm:$0xff]
    %v2204 = vld [vmem:[%s2195 + $0x40] sm:$0xff]
    %v2205 = vld [vmem:[%s2195 + $0x48] sm:$0xff]
    %v2206 = vld [vmem:[%s2195 + $0x50] sm:$0xff]
    %v2207 = vld [vmem:[%s2195 + $0x58] sm:$0xff]
    %v2208 = vld [vmem:[%s2195 + $0x60] sm:$0xff]
    %v2209 = vld [vmem:[%s2195 + $0x68] sm:$0xff]
    %v2210 = vld [vmem:[%s2195 + $0x70] sm:$0xff]
    %v2211 = vld [vmem:[%s2195 + $0x78] sm:$0xff]
    %v2212 = vld [vmem:[%s2195 + $0x80] sm:$0xff]
    %v2213 = vld [vmem:[%s2195 + $0x88] sm:$0xff]
    %v2214 = vld [vmem:[%s2195 + $0x90] sm:$0xff]
    %v2215 = vld [vmem:[%s2195 + $0x98] sm:$0xff]
    %v2216 = vld [vmem:[%s2195 + $0xa0] sm:$0xff]
    %v2217 = vld [vmem:[%s2195 + $0xa8] sm:$0xff]
    %v2218 = vld [vmem:[%s2195 + $0xb0] sm:$0xff]
    %v2219 = vld [vmem:[%s2195 + $0xb8] sm:$0xff]
    %v2220 = vld [vmem:[%s2195 + $0xc0] sm:$0xff]
    %v2221 = vld [vmem:[%s2195 + $0xc8] sm:$0xff]
    %v2222 = vld [vmem:[%s2195 + $0xd0] sm:$0xff]
    %v2223 = vld [vmem:[%s2195 + $0xd8] sm:$0xff]
    %v2224 = vld [vmem:[%s2195 + $0xe0] sm:$0xff]
    %v2225 = vld [vmem:[%s2195 + $0xe8] sm:$0xff]
    %v2226 = vld [vmem:[%s2195 + $0xf0] sm:$0xff]
    %v2227 = vld [vmem:[%s2195 + $0xf8] sm:$0xff]
    %s2228 = scalar_lea.vmem [#allocation10], 256
    %v2229 = vld [vmem:[%s2228] sm:$0xff]
    %v2230 = vld [vmem:[%s2228 + $0x8] sm:$0xff]
    %v2231 = vld [vmem:[%s2228 + $0x10] sm:$0xff]
    %v2232 = vld [vmem:[%s2228 + $0x18] sm:$0xff]
    %v2233 = vld [vmem:[%s2228 + $0x20] sm:$0xff]
    %v2234 = vld [vmem:[%s2228 + $0x28] sm:$0xff]
    %v2235 = vld [vmem:[%s2228 + $0x30] sm:$0xff]
    %v2236 = vld [vmem:[%s2228 + $0x38] sm:$0xff]
    %v2237 = vld [vmem:[%s2228 + $0x40] sm:$0xff]
    %v2238 = vld [vmem:[%s2228 + $0x48] sm:$0xff]
    %v2239 = vld [vmem:[%s2228 + $0x50] sm:$0xff]
    %v2240 = vld [vmem:[%s2228 + $0x58] sm:$0xff]
    %v2241 = vld [vmem:[%s2228 + $0x60] sm:$0xff]
    %v2242 = vld [vmem:[%s2228 + $0x68] sm:$0xff]
    %v2243 = vld [vmem:[%s2228 + $0x70] sm:$0xff]
    %v2244 = vld [vmem:[%s2228 + $0x78] sm:$0xff]
    %s2245 = scalar_lea.vmem %s9, 2
    %v2246 = vld [vmem:[%s2245] ss:$4 sm:$0x3]
    %v2248 = vsel %vm291, %v2116, 0
    %2250 = vmatpush.msra.mxu0 0.0
    %2251 = vmatpush.msra.mxu0 0.0
    %2252 = vmatpush.msra.mxu0 0.0
    %2253 = vmatpush.msra.mxu0 0.0
    %2254 = vmatpush.msra.mxu0 0.0
    %2255 = vmatpush.msra.mxu0 0.0
    %2256 = vmatpush.msra.mxu0 0.0
    %2257 = vmatpush.msra.mxu0 0.0
    %2258 = vmatpush.msra.mxu0 %v2243
    %2259 = vmatpush.msra.mxu0 %v2241
    %2260 = vmatpush.msra.mxu0 %v2239
    %2261 = vmatpush.msra.mxu0 %v2237
    %2262 = vmatpush.msra.mxu0 %v2235
    %2263 = vmatpush.msra.mxu0 %v2233
    %2264 = vmatpush.msra.mxu0 %v2231
    %2265 = vmatpush.msra.mxu0 %v2229
    %2266 = vmatmul.f32.gmra.mxu0 %v2248
    %v2267 = vpop.f32.mrf.mxu0
    %v2268 = vadd.f32 0.0, %v2267
    %2269 = vdwg.mxu0
    %2270 = vmatpush.msra.mxu0 0.0
    %2271 = vmatpush.msra.mxu0 0.0
    %2272 = vmatpush.msra.mxu0 0.0
    %2273 = vmatpush.msra.mxu0 0.0
    %2274 = vmatpush.msra.mxu0 0.0
    %2275 = vmatpush.msra.mxu0 0.0
    %2276 = vmatpush.msra.mxu0 0.0
    %2277 = vmatpush.msra.mxu0 0.0
    %2278 = vmatpush.msra.mxu0 %v2244
    %2279 = vmatpush.msra.mxu0 %v2242
    %2280 = vmatpush.msra.mxu0 %v2240
    %2281 = vmatpush.msra.mxu0 %v2238
    %2282 = vmatpush.msra.mxu0 %v2236
    %2283 = vmatpush.msra.mxu0 %v2234
    %2284 = vmatpush.msra.mxu0 %v2232
    %2285 = vmatpush.msra.mxu0 %v2230
    %2286 = vmatmul.f32.gmra.mxu0 %v2248
    %v2287 = vpop.f32.mrf.mxu0
    %v2288 = vadd.f32 0.0, %v2287
    %2289 = vdwg.mxu0
    %2290 = vmatpush.msra.mxu0 %v2226
    %2291 = vmatpush.msra.mxu0 %v2224
    %2292 = vmatpush.msra.mxu0 %v2222
    %2293 = vmatpush.msra.mxu0 %v2220
    %2294 = vmatpush.msra.mxu0 %v2218
    %2295 = vmatpush.msra.mxu0 %v2216
    %2296 = vmatpush.msra.mxu0 %v2214
    %2297 = vmatpush.msra.mxu0 %v2212
    %2298 = vmatpush.msra.mxu0 %v2210
    %2299 = vmatpush.msra.mxu0 %v2208
    %2300 = vmatpush.msra.mxu0 %v2206
    %2301 = vmatpush.msra.mxu0 %v2204
    %2302 = vmatpush.msra.mxu0 %v2202
    %2303 = vmatpush.msra.mxu0 %v2200
    %2304 = vmatpush.msra.mxu0 %v2198
    %2305 = vmatpush.msra.mxu0 %v2196
    %2306 = vmatmul.f32.gmra.mxu0 %v240
    %v2307 = vpop.f32.mrf.mxu0
    %v2308 = vadd.f32 %v2268, %v2307
    %2309 = vdwg.mxu0
    %2310 = vmatpush.msra.mxu0 %v2227
    %2311 = vmatpush.msra.mxu0 %v2225
    %2312 = vmatpush.msra.mxu0 %v2223
    %2313 = vmatpush.msra.mxu0 %v2221
    %2314 = vmatpush.msra.mxu0 %v2219
    %2315 = vmatpush.msra.mxu0 %v2217
    %2316 = vmatpush.msra.mxu0 %v2215
    %2317 = vmatpush.msra.mxu0 %v2213
    %2318 = vmatpush.msra.mxu0 %v2211
    %2319 = vmatpush.msra.mxu0 %v2209
    %2320 = vmatpush.msra.mxu0 %v2207
    %2321 = vmatpush.msra.mxu0 %v2205
    %2322 = vmatpush.msra.mxu0 %v2203
    %2323 = vmatpush.msra.mxu0 %v2201
    %2324 = vmatpush.msra.mxu0 %v2199
    %2325 = vmatpush.msra.mxu0 %v2197
    %2326 = vmatmul.f32.gmra.mxu0 %v240
    %v2327 = vpop.f32.mrf.mxu0
    %v2328 = vadd.f32 %v2288, %v2327
    %2329 = vdwg.mxu0
    %v2331 = vperm.slane %v2246, 0
    %v2332 = vperm.slane %v2246, 1
    %v2335 = vadd.f32 %v2308, %v2331
    %v2336 = vadd.f32 %v2328, %v2332
    %v2337 = vsub.f32 0.0, %v2335
    %v2338 = vmul.f32 %v2337, 1.442695
    %v2339 = vpow.pop %v2338
    %v2340 = vadd.f32 %v2339, 1.0
    %v2341 = vrcp.pop %v2340
    %v2342 = vmul.f32 %v2340, %v2341
    %v2343 = vsub.f32 1.0, %v2342
    %v2344 = vmul.f32 %v2341, %v2343
    %v2345 = vadd.f32 %v2341, %v2344
    %vm2346 = vweird.f32 %v2340
    %vm2347 = vweird.f32 %v2341
    %vm2348 = vmor %vm2346, %vm2347
    %v2349 = vsel %vm2348, %v2341, %v2345
    %v2350 = vand.u32 2147483647, %v2340
    %vm2351 = vcmp.eq.f32.partialorder %v2350, 8.507059e+37
    %v2352 = vand.u32 %v2340, 2147483648
    %v2353 = vor.u32 1.1754944e-38, %v2352
    %v2354 = vsel %vm2351, %v2353, %v2349
    %v2355 = vmul.f32 1.0, %v2354
    %v2356 = vtanh.pop %v2336
    %v2357 = vsub.f32 0.0, %v2336
    %v2358 = vmul.f32 %v2357, 1.442695
    %v2359 = vpow.pop %v2358
    %v2360 = vadd.f32 %v2359, 1.0
    %v2361 = vrcp.pop %v2360
    %v2362 = vmul.f32 %v2360, %v2361
    %v2363 = vsub.f32 1.0, %v2362
    %v2364 = vmul.f32 %v2361, %v2363
    %v2365 = vadd.f32 %v2361, %v2364
    %vm2366 = vweird.f32 %v2360
    %vm2367 = vweird.f32 %v2361
    %vm2368 = vmor %vm2366, %vm2367
    %v2369 = vsel %vm2368, %v2361, %v2365
    %v2370 = vand.u32 2147483647, %v2360
    %vm2371 = vcmp.eq.f32.partialorder %v2370, 8.507059e+37
    %v2372 = vand.u32 %v2360, 2147483648
    %v2373 = vor.u32 1.1754944e-38, %v2372
    %v2374 = vsel %vm2371, %v2373, %v2369
    %v2375 = vmul.f32 1.0, %v2374
    %2377 = vrot.lane.b32.xlu0 %v2194, 64
    %v2378 = vpop.permute.xlu0 %2377
    %v2380 = vmul.f32 %v2355, %v2378
    %v2381 = vmul.f32 %v2355, %v2356
    %2383 = vrot.lane.b32.xlu0 %v2381, 64
    %v2384 = vpop.permute.xlu0 %2383
    %v2386 = vadd.f32 %v2380, %v2384
    %v2387 = vtanh.pop %v2386
    %v2388 = vmul.f32 %v2375, %v2387
    %s2389 = scalar_lea.vmem [#allocation11], 256
    %v2390 = vld [vmem:[%s2389] sm:$0xff]
    %v2391 = vld [vmem:[%s2389 + $0x8] sm:$0xff]
    %v2392 = vld [vmem:[%s2389 + $0x10] sm:$0xff]
    %v2393 = vld [vmem:[%s2389 + $0x18] sm:$0xff]
    %v2394 = vld [vmem:[%s2389 + $0x20] sm:$0xff]
    %v2395 = vld [vmem:[%s2389 + $0x28] sm:$0xff]
    %v2396 = vld [vmem:[%s2389 + $0x30] sm:$0xff]
    %v2397 = vld [vmem:[%s2389 + $0x38] sm:$0xff]
    %s2398 = scalar_lea.vmem [#allocation13], 192
    %v2399 = vld [vmem:[%s2398] sm:$0xff]
    %v2400 = vld [vmem:[%s2398 + $0x8] sm:$0xff]
    %v2401 = vld [vmem:[%s2398 + $0x10] sm:$0xff]
    %v2402 = vld [vmem:[%s2398 + $0x18] sm:$0xff]
    %v2403 = vld [vmem:[%s2398 + $0x20] sm:$0xff]
    %v2404 = vld [vmem:[%s2398 + $0x28] sm:$0xff]
    %v2405 = vld [vmem:[%s2398 + $0x30] sm:$0xff]
    %v2406 = vld [vmem:[%s2398 + $0x38] sm:$0xff]
    %2408 = vrot.lane.b32.xlu0 %v2388, 64
    %v2409 = vpop.permute.xlu0 %2408
    %v2410 = vsel %vm291, %v2409, 0
    %2412 = vmatpush.msra.mxu0 0.0
    %2413 = vmatpush.msra.mxu0 0.0
    %2414 = vmatpush.msra.mxu0 0.0
    %2415 = vmatpush.msra.mxu0 0.0
    %2416 = vmatpush.msra.mxu0 0.0
    %2417 = vmatpush.msra.mxu0 0.0
    %2418 = vmatpush.msra.mxu0 0.0
    %2419 = vmatpush.msra.mxu0 0.0
    %2420 = vmatpush.msra.mxu0 %v2397
    %2421 = vmatpush.msra.mxu0 %v2396
    %2422 = vmatpush.msra.mxu0 %v2395
    %2423 = vmatpush.msra.mxu0 %v2394
    %2424 = vmatpush.msra.mxu0 %v2393
    %2425 = vmatpush.msra.mxu0 %v2392
    %2426 = vmatpush.msra.mxu0 %v2391
    %2427 = vmatpush.msra.mxu0 %v2390
    %2428 = vmatmul.f32.gmra.mxu0 %v2410
    %v2429 = vpop.f32.mrf.mxu0
    %v2430 = vadd.f32 0.0, %v2429
    %2431 = vdwg.mxu0
    %v2432 = vsel %vm472, %v2430, -inf
    %2433 = vmax.xlane.f32.xlu0 %v2432
    %v2434 = vpop.xlane.xlu0 %2433
    %v2435 = vsub.f32 %v2430, %v2434
    %v2436 = vmul.f32 %v2435, 1.442695
    %v2437 = vpow.pop %v2436
    %v2439 = vsel %vm291, %v2437, 0
    %2441 = vmatpush.msra.mxu0 0.0
    %2442 = vmatpush.msra.mxu0 0.0
    %2443 = vmatpush.msra.mxu0 0.0
    %2444 = vmatpush.msra.mxu0 0.0
    %2445 = vmatpush.msra.mxu0 0.0
    %2446 = vmatpush.msra.mxu0 0.0
    %2447 = vmatpush.msra.mxu0 0.0
    %2448 = vmatpush.msra.mxu0 0.0
    %2449 = vmatpush.msra.mxu0 %v2406
    %2450 = vmatpush.msra.mxu0 %v2405
    %2451 = vmatpush.msra.mxu0 %v2404
    %2452 = vmatpush.msra.mxu0 %v2403
    %2453 = vmatpush.msra.mxu0 %v2402
    %2454 = vmatpush.msra.mxu0 %v2401
    %2455 = vmatpush.msra.mxu0 %v2400
    %2456 = vmatpush.msra.mxu0 %v2399
    %2457 = vmatmul.f32.gmra.mxu0 %v2439
    %v2458 = vpop.f32.mrf.mxu0
    %v2459 = vadd.f32 0.0, %v2458
    %2460 = vdwg.mxu0
    %v2461 = vrcp.pop %v2459
    %v2462 = vmul.f32 %v2459, %v2461
    %v2463 = vsub.f32 1.0, %v2462
    %v2464 = vmul.f32 %v2461, %v2463
    %v2465 = vadd.f32 %v2461, %v2464
    %vm2466 = vweird.f32 %v2459
    %vm2467 = vweird.f32 %v2461
    %vm2468 = vmor %vm2466, %vm2467
    %v2469 = vsel %vm2468, %v2461, %v2465
    %v2470 = vand.u32 2147483647, %v2459
    %vm2471 = vcmp.eq.f32.partialorder %v2470, 8.507059e+37
    %v2472 = vand.u32 %v2459, 2147483648
    %v2473 = vor.u32 1.1754944e-38, %v2472
    %v2474 = vsel %vm2471, %v2473, %v2469
    %v2475 = vmul.f32 %v2437, %v2474
    %s2476 = scalar_lea.vmem [#allocation11], 320
    %v2477 = vld [vmem:[%s2476] sm:$0xff]
    %v2478 = vld [vmem:[%s2476 + $0x8] sm:$0xff]
    %v2479 = vld [vmem:[%s2476 + $0x10] sm:$0xff]
    %v2480 = vld [vmem:[%s2476 + $0x18] sm:$0xff]
    %v2481 = vld [vmem:[%s2476 + $0x20] sm:$0xff]
    %v2482 = vld [vmem:[%s2476 + $0x28] sm:$0xff]
    %v2483 = vld [vmem:[%s2476 + $0x30] sm:$0xff]
    %v2484 = vld [vmem:[%s2476 + $0x38] sm:$0xff]
    %2486 = vrot.lane.b32.xlu0 %v2386, 64
    %v2487 = vpop.permute.xlu0 %2486
    %v2488 = vsel %vm291, %v2487, 0
    %2490 = vmatpush.msra.mxu0 0.0
    %2491 = vmatpush.msra.mxu0 0.0
    %2492 = vmatpush.msra.mxu0 0.0
    %2493 = vmatpush.msra.mxu0 0.0
    %2494 = vmatpush.msra.mxu0 0.0
    %2495 = vmatpush.msra.mxu0 0.0
    %2496 = vmatpush.msra.mxu0 0.0
    %2497 = vmatpush.msra.mxu0 0.0
    %2498 = vmatpush.msra.mxu0 %v2484
    %2499 = vmatpush.msra.mxu0 %v2483
    %2500 = vmatpush.msra.mxu0 %v2482
    %2501 = vmatpush.msra.mxu0 %v2481
    %2502 = vmatpush.msra.mxu0 %v2480
    %2503 = vmatpush.msra.mxu0 %v2479
    %2504 = vmatpush.msra.mxu0 %v2478
    %2505 = vmatpush.msra.mxu0 %v2477
    %2506 = vmatmul.f32.gmra.mxu0 %v2488
    %v2507 = vpop.f32.mrf.mxu0
    %v2508 = vadd.f32 0.0, %v2507
    %2509 = vdwg.mxu0
    %v2510 = vsel %vm472, %v2508, -inf
    %2511 = vmax.xlane.f32.xlu0 %v2510
    %v2512 = vpop.xlane.xlu0 %2511
    %v2513 = vsub.f32 %v2508, %v2512
    %v2514 = vmul.f32 %v2513, 1.442695
    %v2515 = vpow.pop %v2514
    %v2517 = vsel %vm291, %v2515, 0
    %2519 = vmatpush.msra.mxu0 0.0
    %2520 = vmatpush.msra.mxu0 0.0
    %2521 = vmatpush.msra.mxu0 0.0
    %2522 = vmatpush.msra.mxu0 0.0
    %2523 = vmatpush.msra.mxu0 0.0
    %2524 = vmatpush.msra.mxu0 0.0
    %2525 = vmatpush.msra.mxu0 0.0
    %2526 = vmatpush.msra.mxu0 0.0
    %2527 = vmatpush.msra.mxu0 %v2406
    %2528 = vmatpush.msra.mxu0 %v2405
    %2529 = vmatpush.msra.mxu0 %v2404
    %2530 = vmatpush.msra.mxu0 %v2403
    %2531 = vmatpush.msra.mxu0 %v2402
    %2532 = vmatpush.msra.mxu0 %v2401
    %2533 = vmatpush.msra.mxu0 %v2400
    %2534 = vmatpush.msra.mxu0 %v2399
    %2535 = vmatmul.f32.gmra.mxu0 %v2517
    %v2536 = vpop.f32.mrf.mxu0
    %v2537 = vadd.f32 0.0, %v2536
    %2538 = vdwg.mxu0
    %v2539 = vrcp.pop %v2537
    %v2540 = vmul.f32 %v2537, %v2539
    %v2541 = vsub.f32 1.0, %v2540
    %v2542 = vmul.f32 %v2539, %v2541
    %v2543 = vadd.f32 %v2539, %v2542
    %vm2544 = vweird.f32 %v2537
    %vm2545 = vweird.f32 %v2539
    %vm2546 = vmor %vm2544, %vm2545
    %v2547 = vsel %vm2546, %v2539, %v2543
    %v2548 = vand.u32 2147483647, %v2537
    %vm2549 = vcmp.eq.f32.partialorder %v2548, 8.507059e+37
    %v2550 = vand.u32 %v2537, 2147483648
    %v2551 = vor.u32 1.1754944e-38, %v2550
    %v2552 = vsel %vm2549, %v2551, %v2547
    %v2553 = vmul.f32 %v2515, %v2552
    %s2554 = scalar_lea.vmem [#allocation8], 768
    %v2555 = vld [vmem:[%s2554] sm:$0xff]
    %v2556 = vld [vmem:[%s2554 + $0x8] sm:$0xff]
    %v2557 = vld [vmem:[%s2554 + $0x10] sm:$0xff]
    %v2558 = vld [vmem:[%s2554 + $0x18] sm:$0xff]
    %v2559 = vld [vmem:[%s2554 + $0x20] sm:$0xff]
    %v2560 = vld [vmem:[%s2554 + $0x28] sm:$0xff]
    %v2561 = vld [vmem:[%s2554 + $0x30] sm:$0xff]
    %v2562 = vld [vmem:[%s2554 + $0x38] sm:$0xff]
    %v2563 = vld [vmem:[%s2554 + $0x40] sm:$0xff]
    %v2564 = vld [vmem:[%s2554 + $0x48] sm:$0xff]
    %v2565 = vld [vmem:[%s2554 + $0x50] sm:$0xff]
    %v2566 = vld [vmem:[%s2554 + $0x58] sm:$0xff]
    %v2567 = vld [vmem:[%s2554 + $0x60] sm:$0xff]
    %v2568 = vld [vmem:[%s2554 + $0x68] sm:$0xff]
    %v2569 = vld [vmem:[%s2554 + $0x70] sm:$0xff]
    %v2570 = vld [vmem:[%s2554 + $0x78] sm:$0xff]
    %v2571 = vld [vmem:[%s2554 + $0x80] sm:$0xff]
    %v2572 = vld [vmem:[%s2554 + $0x88] sm:$0xff]
    %v2573 = vld [vmem:[%s2554 + $0x90] sm:$0xff]
    %v2574 = vld [vmem:[%s2554 + $0x98] sm:$0xff]
    %v2575 = vld [vmem:[%s2554 + $0xa0] sm:$0xff]
    %v2576 = vld [vmem:[%s2554 + $0xa8] sm:$0xff]
    %v2577 = vld [vmem:[%s2554 + $0xb0] sm:$0xff]
    %v2578 = vld [vmem:[%s2554 + $0xb8] sm:$0xff]
    %v2579 = vld [vmem:[%s2554 + $0xc0] sm:$0xff]
    %v2580 = vld [vmem:[%s2554 + $0xc8] sm:$0xff]
    %v2581 = vld [vmem:[%s2554 + $0xd0] sm:$0xff]
    %v2582 = vld [vmem:[%s2554 + $0xd8] sm:$0xff]
    %v2583 = vld [vmem:[%s2554 + $0xe0] sm:$0xff]
    %v2584 = vld [vmem:[%s2554 + $0xe8] sm:$0xff]
    %v2585 = vld [vmem:[%s2554 + $0xf0] sm:$0xff]
    %v2586 = vld [vmem:[%s2554 + $0xf8] sm:$0xff]
    %s2587 = scalar_lea.vmem [#allocation10], 384
    %v2588 = vld [vmem:[%s2587] sm:$0xff]
    %v2589 = vld [vmem:[%s2587 + $0x8] sm:$0xff]
    %v2590 = vld [vmem:[%s2587 + $0x10] sm:$0xff]
    %v2591 = vld [vmem:[%s2587 + $0x18] sm:$0xff]
    %v2592 = vld [vmem:[%s2587 + $0x20] sm:$0xff]
    %v2593 = vld [vmem:[%s2587 + $0x28] sm:$0xff]
    %v2594 = vld [vmem:[%s2587 + $0x30] sm:$0xff]
    %v2595 = vld [vmem:[%s2587 + $0x38] sm:$0xff]
    %v2596 = vld [vmem:[%s2587 + $0x40] sm:$0xff]
    %v2597 = vld [vmem:[%s2587 + $0x48] sm:$0xff]
    %v2598 = vld [vmem:[%s2587 + $0x50] sm:$0xff]
    %v2599 = vld [vmem:[%s2587 + $0x58] sm:$0xff]
    %v2600 = vld [vmem:[%s2587 + $0x60] sm:$0xff]
    %v2601 = vld [vmem:[%s2587 + $0x68] sm:$0xff]
    %v2602 = vld [vmem:[%s2587 + $0x70] sm:$0xff]
    %v2603 = vld [vmem:[%s2587 + $0x78] sm:$0xff]
    %s2604 = scalar_lea.vmem %s9, 3
    %v2605 = vld [vmem:[%s2604] ss:$4 sm:$0x3]
    %v2607 = vsel %vm291, %v2475, 0
    %2609 = vmatpush.msra.mxu0 0.0
    %2610 = vmatpush.msra.mxu0 0.0
    %2611 = vmatpush.msra.mxu0 0.0
    %2612 = vmatpush.msra.mxu0 0.0
    %2613 = vmatpush.msra.mxu0 0.0
    %2614 = vmatpush.msra.mxu0 0.0
    %2615 = vmatpush.msra.mxu0 0.0
    %2616 = vmatpush.msra.mxu0 0.0
    %2617 = vmatpush.msra.mxu0 %v2602
    %2618 = vmatpush.msra.mxu0 %v2600
    %2619 = vmatpush.msra.mxu0 %v2598
    %2620 = vmatpush.msra.mxu0 %v2596
    %2621 = vmatpush.msra.mxu0 %v2594
    %2622 = vmatpush.msra.mxu0 %v2592
    %2623 = vmatpush.msra.mxu0 %v2590
    %2624 = vmatpush.msra.mxu0 %v2588
    %2625 = vmatmul.f32.gmra.mxu0 %v2607
    %v2626 = vpop.f32.mrf.mxu0
    %v2627 = vadd.f32 0.0, %v2626
    %2628 = vdwg.mxu0
    %2629 = vmatpush.msra.mxu0 0.0
    %2630 = vmatpush.msra.mxu0 0.0
    %2631 = vmatpush.msra.mxu0 0.0
    %2632 = vmatpush.msra.mxu0 0.0
    %2633 = vmatpush.msra.mxu0 0.0
    %2634 = vmatpush.msra.mxu0 0.0
    %2635 = vmatpush.msra.mxu0 0.0
    %2636 = vmatpush.msra.mxu0 0.0
    %2637 = vmatpush.msra.mxu0 %v2603
    %2638 = vmatpush.msra.mxu0 %v2601
    %2639 = vmatpush.msra.mxu0 %v2599
    %2640 = vmatpush.msra.mxu0 %v2597
    %2641 = vmatpush.msra.mxu0 %v2595
    %2642 = vmatpush.msra.mxu0 %v2593
    %2643 = vmatpush.msra.mxu0 %v2591
    %2644 = vmatpush.msra.mxu0 %v2589
    %2645 = vmatmul.f32.gmra.mxu0 %v2607
    %v2646 = vpop.f32.mrf.mxu0
    %v2647 = vadd.f32 0.0, %v2646
    %2648 = vdwg.mxu0
    %2649 = vmatpush.msra.mxu0 %v2585
    %2650 = vmatpush.msra.mxu0 %v2583
    %2651 = vmatpush.msra.mxu0 %v2581
    %2652 = vmatpush.msra.mxu0 %v2579
    %2653 = vmatpush.msra.mxu0 %v2577
    %2654 = vmatpush.msra.mxu0 %v2575
    %2655 = vmatpush.msra.mxu0 %v2573
    %2656 = vmatpush.msra.mxu0 %v2571
    %2657 = vmatpush.msra.mxu0 %v2569
    %2658 = vmatpush.msra.mxu0 %v2567
    %2659 = vmatpush.msra.mxu0 %v2565
    %2660 = vmatpush.msra.mxu0 %v2563
    %2661 = vmatpush.msra.mxu0 %v2561
    %2662 = vmatpush.msra.mxu0 %v2559
    %2663 = vmatpush.msra.mxu0 %v2557
    %2664 = vmatpush.msra.mxu0 %v2555
    %2665 = vmatmul.f32.gmra.mxu0 %v240
    %v2666 = vpop.f32.mrf.mxu0
    %v2667 = vadd.f32 %v2627, %v2666
    %2668 = vdwg.mxu0
    %2669 = vmatpush.msra.mxu0 %v2586
    %2670 = vmatpush.msra.mxu0 %v2584
    %2671 = vmatpush.msra.mxu0 %v2582
    %2672 = vmatpush.msra.mxu0 %v2580
    %2673 = vmatpush.msra.mxu0 %v2578
    %2674 = vmatpush.msra.mxu0 %v2576
    %2675 = vmatpush.msra.mxu0 %v2574
    %2676 = vmatpush.msra.mxu0 %v2572
    %2677 = vmatpush.msra.mxu0 %v2570
    %2678 = vmatpush.msra.mxu0 %v2568
    %2679 = vmatpush.msra.mxu0 %v2566
    %2680 = vmatpush.msra.mxu0 %v2564
    %2681 = vmatpush.msra.mxu0 %v2562
    %2682 = vmatpush.msra.mxu0 %v2560
    %2683 = vmatpush.msra.mxu0 %v2558
    %2684 = vmatpush.msra.mxu0 %v2556
    %2685 = vmatmul.f32.gmra.mxu0 %v240
    %v2686 = vpop.f32.mrf.mxu0
    %v2687 = vadd.f32 %v2647, %v2686
    %2688 = vdwg.mxu0
    %v2690 = vperm.slane %v2605, 0
    %v2691 = vperm.slane %v2605, 1
    %v2694 = vadd.f32 %v2667, %v2690
    %v2695 = vadd.f32 %v2687, %v2691
    %v2696 = vsub.f32 0.0, %v2694
    %v2697 = vmul.f32 %v2696, 1.442695
    %v2698 = vpow.pop %v2697
    %v2699 = vadd.f32 %v2698, 1.0
    %v2700 = vrcp.pop %v2699
    %v2701 = vmul.f32 %v2699, %v2700
    %v2702 = vsub.f32 1.0, %v2701
    %v2703 = vmul.f32 %v2700, %v2702
    %v2704 = vadd.f32 %v2700, %v2703
    %vm2705 = vweird.f32 %v2699
    %vm2706 = vweird.f32 %v2700
    %vm2707 = vmor %vm2705, %vm2706
    %v2708 = vsel %vm2707, %v2700, %v2704
    %v2709 = vand.u32 2147483647, %v2699
    %vm2710 = vcmp.eq.f32.partialorder %v2709, 8.507059e+37
    %v2711 = vand.u32 %v2699, 2147483648
    %v2712 = vor.u32 1.1754944e-38, %v2711
    %v2713 = vsel %vm2710, %v2712, %v2708
    %v2714 = vmul.f32 1.0, %v2713
    %v2715 = vtanh.pop %v2695
    %2717 = vrot.lane.b32.xlu0 %v2553, 64
    %v2718 = vpop.permute.xlu0 %2717
    %v2720 = vmul.f32 %v2714, %v2718
    %v2721 = vmul.f32 %v2714, %v2715
    %2723 = vrot.lane.b32.xlu0 %v2721, 64
    %v2724 = vpop.permute.xlu0 %2723
    %v2726 = vadd.f32 %v2720, %v2724
    %v2727 = vld [vmem:[%s12] sm:$0xff]
    %v2728 = vld [vmem:[%s12 + $0x8] sm:$0xff]
    %v2730 = vrot.slane %v1505, 1
    %2732 = vset.pattern.permute.xlu0 0
    %2733 = vperm.xlu0 %2732, %v2727
    %v2734 = vpop.permute.xlu0 %2733
    %2737 = vset.pattern.permute.xlu0 0
    %2738 = vperm.xlu0 %2737, %v2728
    %v2739 = vpop.permute.xlu0 %2738
    %v2741 = vperm.slane %v1505, 0
    %v2742 = vperm.slane %v2730, 0
    %v2745 = vmul.f32 %v2734, %v2741
    %v2746 = vmul.f32 %v2739, %v2741
    %v2747 = vmul.f32 %v2734, %v2742
    %v2748 = vmul.f32 %v2739, %v2742
    %v2749 = vld [vmem:[%s13] sm:$0xff]
    %v2750 = vld [vmem:[%s13 + $0x8] sm:$0xff]
    %2752 = vset.pattern.permute.xlu0 0
    %2753 = vperm.xlu0 %2752, %v2749
    %v2754 = vpop.permute.xlu0 %2753
    %2757 = vset.pattern.permute.xlu0 0
    %2758 = vperm.xlu0 %2757, %v2750
    %v2759 = vpop.permute.xlu0 %2758
    %v2761 = vadd.f32 %v2745, %v2754
    %v2762 = vadd.f32 %v2746, %v2759
    %v2763 = vadd.f32 %v2747, %v2754
    %v2764 = vadd.f32 %v2748, %v2759
    %vm2765 = vcmask 1048064
    %v2766 = vsel %vm2765, %v2761, -inf
    %2767 = vmax.xlane.f32.xlu0 %v2766
    %v2768 = vpop.xlane.xlu0 %2767
    %v2769 = vsel %vm2765, %v2762, -inf
    %2770 = vmax.xlane.f32.xlu0 %v2769
    %v2771 = vpop.xlane.xlu0 %2770
    %v2772 = vsel %vm2765, %v2763, -inf
    %2773 = vmax.xlane.f32.xlu0 %v2772
    %v2774 = vpop.xlane.xlu0 %2773
    %v2775 = vsel %vm2765, %v2764, -inf
    %2776 = vmax.xlane.f32.xlu0 %v2775
    %v2777 = vpop.xlane.xlu0 %2776
    %v2778 = vsub.f32 %v2761, %v2768
    %v2779 = vsub.f32 %v2762, %v2771
    %v2780 = vsub.f32 %v2763, %v2774
    %v2781 = vsub.f32 %v2764, %v2777
    %v2782 = vmul.f32 %v2778, 1.442695
    %v2783 = vpow.pop %v2782
    %v2784 = vmul.f32 %v2779, 1.442695
    %v2785 = vpow.pop %v2784
    %v2786 = vmul.f32 %v2780, 1.442695
    %v2787 = vpow.pop %v2786
    %v2788 = vmul.f32 %v2781, 1.442695
    %v2789 = vpow.pop %v2788
    %2794 = vrot.lane.b32.xlu0 %v2783, 64
    %v2795 = vpop.permute.xlu0 %2794
    %2796 = vrot.lane.b32.xlu0 %v2785, 64
    %v2797 = vpop.permute.xlu0 %2796
    %2798 = vrot.lane.b32.xlu0 %v2787, 64
    %v2799 = vpop.permute.xlu0 %2798
    %2800 = vrot.lane.b32.xlu0 %v2789, 64
    %v2801 = vpop.permute.xlu0 %2800
    %v2806 = vsel %vm291, %v2795, 0.0
    %2807 = vadd.xlane.f32.xlu0 %v2806
    %v2808 = vpop.xlane.xlu0 %2807
    %v2809 = vsel %vm291, %v2797, 0.0
    %2810 = vadd.xlane.f32.xlu0 %v2809
    %v2811 = vpop.xlane.xlu0 %2810
    %v2812 = vsel %vm291, %v2799, 0.0
    %2813 = vadd.xlane.f32.xlu0 %v2812
    %v2814 = vpop.xlane.xlu0 %2813
    %v2815 = vsel %vm291, %v2801, 0.0
    %2816 = vadd.xlane.f32.xlu0 %v2815
    %v2817 = vpop.xlane.xlu0 %2816
    %v2818 = vrcp.pop %v2808
    %v2819 = vmul.f32 %v2808, %v2818
    %v2820 = vsub.f32 1.0, %v2819
    %v2821 = vmul.f32 %v2818, %v2820
    %v2822 = vadd.f32 %v2818, %v2821
    %vm2823 = vweird.f32 %v2808
    %vm2824 = vweird.f32 %v2818
    %vm2825 = vmor %vm2823, %vm2824
    %v2826 = vsel %vm2825, %v2818, %v2822
    %v2827 = vand.u32 2147483647, %v2808
    %vm2828 = vcmp.eq.f32.partialorder %v2827, 8.507059e+37
    %v2829 = vand.u32 %v2808, 2147483648
    %v2830 = vor.u32 1.1754944e-38, %v2829
    %v2831 = vsel %vm2828, %v2830, %v2826
    %v2832 = vmul.f32 %v2783, %v2831
    %v2833 = vrcp.pop %v2811
    %v2834 = vmul.f32 %v2811, %v2833
    %v2835 = vsub.f32 1.0, %v2834
    %v2836 = vmul.f32 %v2833, %v2835
    %v2837 = vadd.f32 %v2833, %v2836
    %vm2838 = vweird.f32 %v2811
    %vm2839 = vweird.f32 %v2833
    %vm2840 = vmor %vm2838, %vm2839
    %v2841 = vsel %vm2840, %v2833, %v2837
    %v2842 = vand.u32 2147483647, %v2811
    %vm2843 = vcmp.eq.f32.partialorder %v2842, 8.507059e+37
    %v2844 = vand.u32 %v2811, 2147483648
    %v2845 = vor.u32 1.1754944e-38, %v2844
    %v2846 = vsel %vm2843, %v2845, %v2841
    %v2847 = vmul.f32 %v2785, %v2846
    %v2848 = vrcp.pop %v2814
    %v2849 = vmul.f32 %v2814, %v2848
    %v2850 = vsub.f32 1.0, %v2849
    %v2851 = vmul.f32 %v2848, %v2850
    %v2852 = vadd.f32 %v2848, %v2851
    %vm2853 = vweird.f32 %v2814
    %vm2854 = vweird.f32 %v2848
    %vm2855 = vmor %vm2853, %vm2854
    %v2856 = vsel %vm2855, %v2848, %v2852
    %v2857 = vand.u32 2147483647, %v2814
    %vm2858 = vcmp.eq.f32.partialorder %v2857, 8.507059e+37
    %v2859 = vand.u32 %v2814, 2147483648
    %v2860 = vor.u32 1.1754944e-38, %v2859
    %v2861 = vsel %vm2858, %v2860, %v2856
    %v2862 = vmul.f32 %v2787, %v2861
    %v2863 = vrcp.pop %v2817
    %v2864 = vmul.f32 %v2817, %v2863
    %v2865 = vsub.f32 1.0, %v2864
    %v2866 = vmul.f32 %v2863, %v2865
    %v2867 = vadd.f32 %v2863, %v2866
    %vm2868 = vweird.f32 %v2817
    %vm2869 = vweird.f32 %v2863
    %vm2870 = vmor %vm2868, %vm2869
    %v2871 = vsel %vm2870, %v2863, %v2867
    %v2872 = vand.u32 2147483647, %v2817
    %vm2873 = vcmp.eq.f32.partialorder %v2872, 8.507059e+37
    %v2874 = vand.u32 %v2817, 2147483648
    %v2875 = vor.u32 1.1754944e-38, %v2874
    %v2876 = vsel %vm2873, %v2875, %v2871
    %v2877 = vmul.f32 %v2789, %v2876
    %v2878 = vld [vmem:[%s14] sm:$0xff]
    %v2879 = vld [vmem:[%s14 + $0x8] sm:$0xff]
    %2881 = vset.pattern.permute.xlu0 0
    %2882 = vperm.xlu0 %2881, %v2878
    %v2883 = vpop.permute.xlu0 %2882
    %2886 = vset.pattern.permute.xlu0 0
    %2887 = vperm.xlu0 %2886, %v2879
    %v2888 = vpop.permute.xlu0 %2887
    %v2890 = vmul.f32 %v2883, %v2832
    %v2891 = vmul.f32 %v2888, %v2847
    %v2892 = vmul.f32 %v2883, %v2862
    %v2893 = vmul.f32 %v2888, %v2877
    %v2894 = vsel %vm2765, %v2890, 0.0
    %v2895 = vsel %vm2765, %v2891, 0.0
    %v2896 = vadd.f32 %v2894, %v2895
    %v2897 = vrot.slane %v2896, 4
    %v2898 = vadd.f32 %v2896, %v2897
    %v2899 = vrot.slane %v2898, 2
    %v2900 = vadd.f32 %v2898, %v2899
    %v2901 = vrot.slane %v2900, 1
    %v2902 = vadd.f32 %v2900, %v2901
    %v2903 = vsel %vm2765, %v2892, 0.0
    %v2904 = vsel %vm2765, %v2893, 0.0
    %v2905 = vadd.f32 %v2903, %v2904
    %v2906 = vrot.slane %v2905, 4
    %v2907 = vadd.f32 %v2905, %v2906
    %v2908 = vrot.slane %v2907, 2
    %v2909 = vadd.f32 %v2907, %v2908
    %v2910 = vrot.slane %v2909, 1
    %v2911 = vadd.f32 %v2909, %v2910
    %vm2914 = vcmask 1041409
    %v2915 = vsel %vm2914, %v2911, %v2902
    %2916 = vrot.lane.b32.xlu0 %v2915, 64
    %v2917 = vpop.permute.xlu0 %2916
    %v2919 = vsel %vm472, %v2917, 0.0
    %2920 = vadd.xlane.f32.xlu0 %v2919
    %v2921 = vpop.xlane.xlu0 %2920
    %v2922 = vrcp.pop 64.0
    %v2923 = vmul.f32 64.0, %v2922
    %v2924 = vsub.f32 1.0, %v2923
    %v2925 = vmul.f32 %v2922, %v2924
    %v2926 = vadd.f32 %v2922, %v2925
    %vm2927 = vweird.f32 %v2922
    %v2928 = vsel %vm2927, %v2922, %v2926
    %v2929 = vmul.f32 %v2921, %v2928
    %v2931 = vrot.slane %v2929, 1
    %v2934 = vsub.f32 %v2902, %v2929
    %v2935 = vsub.f32 %v2911, %v2931
    %v2936 = vmul.f32 %v2934, %v2934
    %v2937 = vmul.f32 %v2935, %v2935
    %v2940 = vrot.slane %v2937, 7
    %v2941 = vsel %vm2914, %v2940, %v2936
    %2942 = vrot.lane.b32.xlu0 %v2941, 64
    %v2943 = vpop.permute.xlu0 %2942
    %v2945 = vsel %vm472, %v2943, 0.0
    %2946 = vadd.xlane.f32.xlu0 %v2945
    %v2947 = vpop.xlane.xlu0 %2946
    %v2948 = vmul.f32 %v2947, %v2928
    %v2949 = vadd.f32 %v2948, 1e-05
    %v2950 = vrsqrt.pop %v2949
    %v2951 = vmul.f32 %v2950, %v2949
    %v2952 = vmul.f32 %v2951, %v2950
    %v2953 = vmul.f32 0.5, %v2952
    %v2954 = vsub.f32 1.5, %v2953
    %v2955 = vmul.f32 %v2950, %v2954
    %vm2956 = vweird.f32 %v2949
    %vm2957 = vweird.f32 %v2950
    %vm2958 = vmor %vm2956, %vm2957
    %v2959 = vsel %vm2958, %v2950, %v2955
    %v2961 = vrot.slane %v2959, 1
    %v2964 = vmul.f32 %v2934, %v2959
    %v2965 = vmul.f32 %v2935, %v2961
    %v2966 = vld [vmem:[%s15] sm:$0x1]
    %v2967 = vperm.slane %v2966, 0
    %2969 = vrot.lane.b32.xlu0 %v2967, 64
    %v2970 = vpop.permute.xlu0 %2969
    %v2972 = vmul.f32 %v2964, %v2970
    %v2973 = vmul.f32 %v2965, %v2970
    %v2974 = vld [vmem:[%s15 + $0x1] sm:$0x1]
    %v2975 = vperm.slane %v2974, 0
    %2977 = vrot.lane.b32.xlu0 %v2975, 64
    %v2978 = vpop.permute.xlu0 %2977
    %v2980 = vadd.f32 %v2972, %v2978
    %v2981 = vadd.f32 %v2973, %v2978
    %v2982 = vmax.f32 %v2980, 0.0
    %v2983 = vmax.f32 %v2981, 0.0
    %v2985 = vrot.slane %v2726, 1
    %v2986 = vperm.slane %v2726, 0
    %v2987 = vperm.slane %v2985, 0
    %v2990 = vmul.f32 %v2734, %v2986
    %v2991 = vmul.f32 %v2739, %v2986
    %v2992 = vmul.f32 %v2734, %v2987
    %v2993 = vmul.f32 %v2739, %v2987
    %v2994 = vadd.f32 %v2990, %v2754
    %v2995 = vadd.f32 %v2991, %v2759
    %v2996 = vadd.f32 %v2992, %v2754
    %v2997 = vadd.f32 %v2993, %v2759
    %v2998 = vsel %vm2765, %v2994, -inf
    %2999 = vmax.xlane.f32.xlu0 %v2998
    %v3000 = vpop.xlane.xlu0 %2999
    %v3001 = vsel %vm2765, %v2995, -inf
    %3002 = vmax.xlane.f32.xlu0 %v3001
    %v3003 = vpop.xlane.xlu0 %3002
    %v3004 = vsel %vm2765, %v2996, -inf
    %3005 = vmax.xlane.f32.xlu0 %v3004
    %v3006 = vpop.xlane.xlu0 %3005
    %v3007 = vsel %vm2765, %v2997, -inf
    %3008 = vmax.xlane.f32.xlu0 %v3007
    %v3009 = vpop.xlane.xlu0 %3008
    %v3010 = vsub.f32 %v2994, %v3000
    %v3011 = vsub.f32 %v2995, %v3003
    %v3012 = vsub.f32 %v2996, %v3006
    %v3013 = vsub.f32 %v2997, %v3009
    %v3014 = vmul.f32 %v3010, 1.442695
    %v3015 = vpow.pop %v3014
    %v3016 = vmul.f32 %v3011, 1.442695
    %v3017 = vpow.pop %v3016
    %v3018 = vmul.f32 %v3012, 1.442695
    %v3019 = vpow.pop %v3018
    %v3020 = vmul.f32 %v3013, 1.442695
    %v3021 = vpow.pop %v3020
    %3026 = vrot.lane.b32.xlu0 %v3015, 64
    %v3027 = vpop.permute.xlu0 %3026
    %3028 = vrot.lane.b32.xlu0 %v3017, 64
    %v3029 = vpop.permute.xlu0 %3028
    %3030 = vrot.lane.b32.xlu0 %v3019, 64
    %v3031 = vpop.permute.xlu0 %3030
    %3032 = vrot.lane.b32.xlu0 %v3021, 64
    %v3033 = vpop.permute.xlu0 %3032
    %v3038 = vsel %vm291, %v3027, 0.0
    %3039 = vadd.xlane.f32.xlu0 %v3038
    %v3040 = vpop.xlane.xlu0 %3039
    %v3041 = vsel %vm291, %v3029, 0.0
    %3042 = vadd.xlane.f32.xlu0 %v3041
    %v3043 = vpop.xlane.xlu0 %3042
    %v3044 = vsel %vm291, %v3031, 0.0
    %3045 = vadd.xlane.f32.xlu0 %v3044
    %v3046 = vpop.xlane.xlu0 %3045
    %v3047 = vsel %vm291, %v3033, 0.0
    %3048 = vadd.xlane.f32.xlu0 %v3047
    %v3049 = vpop.xlane.xlu0 %3048
    %v3050 = vrcp.pop %v3040
    %v3051 = vmul.f32 %v3040, %v3050
    %v3052 = vsub.f32 1.0, %v3051
    %v3053 = vmul.f32 %v3050, %v3052
    %v3054 = vadd.f32 %v3050, %v3053
    %vm3055 = vweird.f32 %v3040
    %vm3056 = vweird.f32 %v3050
    %vm3057 = vmor %vm3055, %vm3056
    %v3058 = vsel %vm3057, %v3050, %v3054
    %v3059 = vand.u32 2147483647, %v3040
    %vm3060 = vcmp.eq.f32.partialorder %v3059, 8.507059e+37
    %v3061 = vand.u32 %v3040, 2147483648
    %v3062 = vor.u32 1.1754944e-38, %v3061
    %v3063 = vsel %vm3060, %v3062, %v3058
    %v3064 = vmul.f32 %v3015, %v3063
    %v3065 = vrcp.pop %v3043
    %v3066 = vmul.f32 %v3043, %v3065
    %v3067 = vsub.f32 1.0, %v3066
    %v3068 = vmul.f32 %v3065, %v3067
    %v3069 = vadd.f32 %v3065, %v3068
    %vm3070 = vweird.f32 %v3043
    %vm3071 = vweird.f32 %v3065
    %vm3072 = vmor %vm3070, %vm3071
    %v3073 = vsel %vm3072, %v3065, %v3069
    %v3074 = vand.u32 2147483647, %v3043
    %vm3075 = vcmp.eq.f32.partialorder %v3074, 8.507059e+37
    %v3076 = vand.u32 %v3043, 2147483648
    %v3077 = vor.u32 1.1754944e-38, %v3076
    %v3078 = vsel %vm3075, %v3077, %v3073
    %v3079 = vmul.f32 %v3017, %v3078
    %v3080 = vrcp.pop %v3046
    %v3081 = vmul.f32 %v3046, %v3080
    %v3082 = vsub.f32 1.0, %v3081
    %v3083 = vmul.f32 %v3080, %v3082
    %v3084 = vadd.f32 %v3080, %v3083
    %vm3085 = vweird.f32 %v3046
    %vm3086 = vweird.f32 %v3080
    %vm3087 = vmor %vm3085, %vm3086
    %v3088 = vsel %vm3087, %v3080, %v3084
    %v3089 = vand.u32 2147483647, %v3046
    %vm3090 = vcmp.eq.f32.partialorder %v3089, 8.507059e+37
    %v3091 = vand.u32 %v3046, 2147483648
    %v3092 = vor.u32 1.1754944e-38, %v3091
    %v3093 = vsel %vm3090, %v3092, %v3088
    %v3094 = vmul.f32 %v3019, %v3093
    %v3095 = vrcp.pop %v3049
    %v3096 = vmul.f32 %v3049, %v3095
    %v3097 = vsub.f32 1.0, %v3096
    %v3098 = vmul.f32 %v3095, %v3097
    %v3099 = vadd.f32 %v3095, %v3098
    %vm3100 = vweird.f32 %v3049
    %vm3101 = vweird.f32 %v3095
    %vm3102 = vmor %vm3100, %vm3101
    %v3103 = vsel %vm3102, %v3095, %v3099
    %v3104 = vand.u32 2147483647, %v3049
    %vm3105 = vcmp.eq.f32.partialorder %v3104, 8.507059e+37
    %v3106 = vand.u32 %v3049, 2147483648
    %v3107 = vor.u32 1.1754944e-38, %v3106
    %v3108 = vsel %vm3105, %v3107, %v3103
    %v3109 = vmul.f32 %v3021, %v3108
    %v3110 = vmul.f32 %v2883, %v3064
    %v3111 = vmul.f32 %v2888, %v3079
    %v3112 = vmul.f32 %v2883, %v3094
    %v3113 = vmul.f32 %v2888, %v3109
    %v3114 = vsel %vm2765, %v3110, 0.0
    %v3115 = vsel %vm2765, %v3111, 0.0
    %v3116 = vadd.f32 %v3114, %v3115
    %v3117 = vrot.slane %v3116, 4
    %v3118 = vadd.f32 %v3116, %v3117
    %v3119 = vrot.slane %v3118, 2
    %v3120 = vadd.f32 %v3118, %v3119
    %v3121 = vrot.slane %v3120, 1
    %v3122 = vadd.f32 %v3120, %v3121
    %v3123 = vsel %vm2765, %v3112, 0.0
    %v3124 = vsel %vm2765, %v3113, 0.0
    %v3125 = vadd.f32 %v3123, %v3124
    %v3126 = vrot.slane %v3125, 4
    %v3127 = vadd.f32 %v3125, %v3126
    %v3128 = vrot.slane %v3127, 2
    %v3129 = vadd.f32 %v3127, %v3128
    %v3130 = vrot.slane %v3129, 1
    %v3131 = vadd.f32 %v3129, %v3130
    %v3134 = vsel %vm2914, %v3131, %v3122
    %3135 = vrot.lane.b32.xlu0 %v3134, 64
    %v3136 = vpop.permute.xlu0 %3135
    %v3138 = vsel %vm472, %v3136, 0.0
    %3139 = vadd.xlane.f32.xlu0 %v3138
    %v3140 = vpop.xlane.xlu0 %3139
    %v3141 = vmul.f32 %v3140, %v2928
    %v3143 = vrot.slane %v3141, 1
    %v3146 = vsub.f32 %v3122, %v3141
    %v3147 = vsub.f32 %v3131, %v3143
    %v3148 = vmul.f32 %v3146, %v3146
    %v3149 = vmul.f32 %v3147, %v3147
    %v3152 = vrot.slane %v3149, 7
    %v3153 = vsel %vm2914, %v3152, %v3148
    %3154 = vrot.lane.b32.xlu0 %v3153, 64
    %v3155 = vpop.permute.xlu0 %3154
    %v3157 = vsel %vm472, %v3155, 0.0
    %3158 = vadd.xlane.f32.xlu0 %v3157
    %v3159 = vpop.xlane.xlu0 %3158
    %v3160 = vmul.f32 %v3159, %v2928
    %v3161 = vadd.f32 %v3160, 1e-05
    %v3162 = vrsqrt.pop %v3161
    %v3163 = vmul.f32 %v3162, %v3161
    %v3164 = vmul.f32 %v3163, %v3162
    %v3165 = vmul.f32 0.5, %v3164
    %v3166 = vsub.f32 1.5, %v3165
    %v3167 = vmul.f32 %v3162, %v3166
    %vm3168 = vweird.f32 %v3161
    %vm3169 = vweird.f32 %v3162
    %vm3170 = vmor %vm3168, %vm3169
    %v3171 = vsel %vm3170, %v3162, %v3167
    %v3173 = vrot.slane %v3171, 1
    %v3176 = vmul.f32 %v3146, %v3171
    %v3177 = vmul.f32 %v3147, %v3173
    %v3178 = vmul.f32 %v3176, %v2970
    %v3179 = vmul.f32 %v3177, %v2970
    %v3180 = vadd.f32 %v3178, %v2978
    %v3181 = vadd.f32 %v3179, %v2978
    %v3182 = vmax.f32 %v3180, 0.0
    %v3183 = vmax.f32 %v3181, 0.0
    %v3184 = vld [vmem:[#allocation14] sm:$0xff]
    %v3185 = vld [vmem:[#allocation14 + $0x8] sm:$0xff]
    %v3186 = vld [vmem:[#allocation14 + $0x10] sm:$0xff]
    %v3187 = vld [vmem:[#allocation14 + $0x18] sm:$0xff]
    %v3188 = vld [vmem:[#allocation14 + $0x20] sm:$0xff]
    %v3189 = vld [vmem:[#allocation14 + $0x28] sm:$0xff]
    %v3190 = vld [vmem:[#allocation14 + $0x30] sm:$0xff]
    %v3191 = vld [vmem:[#allocation14 + $0x38] sm:$0xff]
    %v3192 = vld [vmem:[#allocation14 + $0x40] sm:$0xff]
    %v3193 = vld [vmem:[#allocation14 + $0x48] sm:$0xff]
    %v3194 = vld [vmem:[#allocation14 + $0x50] sm:$0xff]
    %v3195 = vld [vmem:[#allocation14 + $0x58] sm:$0xff]
    %v3196 = vld [vmem:[#allocation14 + $0x60] sm:$0xff]
    %v3197 = vld [vmem:[#allocation14 + $0x68] sm:$0xff]
    %v3198 = vld [vmem:[#allocation14 + $0x70] sm:$0xff]
    %v3199 = vld [vmem:[#allocation14 + $0x78] sm:$0xff]
    %v3200 = vld [vmem:[#allocation14 + $0x80] sm:$0xff]
    %v3201 = vld [vmem:[#allocation14 + $0x88] sm:$0xff]
    %v3202 = vld [vmem:[#allocation14 + $0x90] sm:$0xff]
    %v3203 = vld [vmem:[#allocation14 + $0x98] sm:$0xff]
    %v3204 = vld [vmem:[#allocation14 + $0xa0] sm:$0xff]
    %v3205 = vld [vmem:[#allocation14 + $0xa8] sm:$0xff]
    %v3206 = vld [vmem:[#allocation14 + $0xb0] sm:$0xff]
    %v3207 = vld [vmem:[#allocation14 + $0xb8] sm:$0xff]
    %v3208 = vld [vmem:[#allocation14 + $0xc0] sm:$0xff]
    %v3209 = vld [vmem:[#allocation14 + $0xc8] sm:$0xff]
    %v3210 = vld [vmem:[#allocation14 + $0xd0] sm:$0xff]
    %v3211 = vld [vmem:[#allocation14 + $0xd8] sm:$0xff]
    %v3212 = vld [vmem:[#allocation14 + $0xe0] sm:$0xff]
    %v3213 = vld [vmem:[#allocation14 + $0xe8] sm:$0xff]
    %v3214 = vld [vmem:[#allocation14 + $0xf0] sm:$0xff]
    %v3215 = vld [vmem:[#allocation14 + $0xf8] sm:$0xff]
    %v3216 = vld [vmem:[#allocation16] sm:$0xff]
    %v3217 = vld [vmem:[#allocation16 + $0x8] sm:$0xff]
    %v3218 = vld [vmem:[#allocation16 + $0x10] sm:$0xff]
    %v3219 = vld [vmem:[#allocation16 + $0x18] sm:$0xff]
    %v3220 = vld [vmem:[#allocation16 + $0x20] sm:$0xff]
    %v3221 = vld [vmem:[#allocation16 + $0x28] sm:$0xff]
    %v3222 = vld [vmem:[#allocation16 + $0x30] sm:$0xff]
    %v3223 = vld [vmem:[#allocation16 + $0x38] sm:$0xff]
    %v3224 = vld [vmem:[#allocation16 + $0x40] sm:$0xff]
    %v3225 = vld [vmem:[#allocation16 + $0x48] sm:$0xff]
    %v3226 = vld [vmem:[#allocation16 + $0x50] sm:$0xff]
    %v3227 = vld [vmem:[#allocation16 + $0x58] sm:$0xff]
    %v3228 = vld [vmem:[#allocation16 + $0x60] sm:$0xff]
    %v3229 = vld [vmem:[#allocation16 + $0x68] sm:$0xff]
    %v3230 = vld [vmem:[#allocation16 + $0x70] sm:$0xff]
    %v3231 = vld [vmem:[#allocation16 + $0x78] sm:$0xff]
    %v3232 = vld [vmem:[%s18] sm:$0x3]
    %v3235 = vrot.slane %v3183, 7
    %v3236 = vsel %vm2914, %v3235, %v3182
    %3237 = vrot.lane.b32.xlu0 %v3236, 64
    %v3238 = vpop.permute.xlu0 %3237
    %v3239 = vsel %vm291, %v3238, 0
    %3241 = vmatpush.msra.mxu0 0.0
    %3242 = vmatpush.msra.mxu0 0.0
    %3243 = vmatpush.msra.mxu0 0.0
    %3244 = vmatpush.msra.mxu0 0.0
    %3245 = vmatpush.msra.mxu0 0.0
    %3246 = vmatpush.msra.mxu0 0.0
    %3247 = vmatpush.msra.mxu0 0.0
    %3248 = vmatpush.msra.mxu0 0.0
    %3249 = vmatpush.msra.mxu0 %v3230
    %3250 = vmatpush.msra.mxu0 %v3228
    %3251 = vmatpush.msra.mxu0 %v3226
    %3252 = vmatpush.msra.mxu0 %v3224
    %3253 = vmatpush.msra.mxu0 %v3222
    %3254 = vmatpush.msra.mxu0 %v3220
    %3255 = vmatpush.msra.mxu0 %v3218
    %3256 = vmatpush.msra.mxu0 %v3216
    %3257 = vmatmul.f32.gmra.mxu0 %v3239
    %v3258 = vpop.f32.mrf.mxu0
    %v3259 = vadd.f32 0.0, %v3258
    %3260 = vdwg.mxu0
    %3261 = vmatpush.msra.mxu0 0.0
    %3262 = vmatpush.msra.mxu0 0.0
    %3263 = vmatpush.msra.mxu0 0.0
    %3264 = vmatpush.msra.mxu0 0.0
    %3265 = vmatpush.msra.mxu0 0.0
    %3266 = vmatpush.msra.mxu0 0.0
    %3267 = vmatpush.msra.mxu0 0.0
    %3268 = vmatpush.msra.mxu0 0.0
    %3269 = vmatpush.msra.mxu0 %v3231
    %3270 = vmatpush.msra.mxu0 %v3229
    %3271 = vmatpush.msra.mxu0 %v3227
    %3272 = vmatpush.msra.mxu0 %v3225
    %3273 = vmatpush.msra.mxu0 %v3223
    %3274 = vmatpush.msra.mxu0 %v3221
    %3275 = vmatpush.msra.mxu0 %v3219
    %3276 = vmatpush.msra.mxu0 %v3217
    %3277 = vmatmul.f32.gmra.mxu0 %v3239
    %v3278 = vpop.f32.mrf.mxu0
    %v3279 = vadd.f32 0.0, %v3278
    %3280 = vdwg.mxu0
    %3281 = vmatpush.msra.mxu0 %v3214
    %3282 = vmatpush.msra.mxu0 %v3212
    %3283 = vmatpush.msra.mxu0 %v3210
    %3284 = vmatpush.msra.mxu0 %v3208
    %3285 = vmatpush.msra.mxu0 %v3206
    %3286 = vmatpush.msra.mxu0 %v3204
    %3287 = vmatpush.msra.mxu0 %v3202
    %3288 = vmatpush.msra.mxu0 %v3200
    %3289 = vmatpush.msra.mxu0 %v3198
    %3290 = vmatpush.msra.mxu0 %v3196
    %3291 = vmatpush.msra.mxu0 %v3194
    %3292 = vmatpush.msra.mxu0 %v3192
    %3293 = vmatpush.msra.mxu0 %v3190
    %3294 = vmatpush.msra.mxu0 %v3188
    %3295 = vmatpush.msra.mxu0 %v3186
    %3296 = vmatpush.msra.mxu0 %v3184
    %3297 = vmatmul.f32.gmra.mxu0 %v240
    %v3298 = vpop.f32.mrf.mxu0
    %v3299 = vadd.f32 %v3259, %v3298
    %3300 = vdwg.mxu0
    %3301 = vmatpush.msra.mxu0 %v3215
    %3302 = vmatpush.msra.mxu0 %v3213
    %3303 = vmatpush.msra.mxu0 %v3211
    %3304 = vmatpush.msra.mxu0 %v3209
    %3305 = vmatpush.msra.mxu0 %v3207
    %3306 = vmatpush.msra.mxu0 %v3205
    %3307 = vmatpush.msra.mxu0 %v3203
    %3308 = vmatpush.msra.mxu0 %v3201
    %3309 = vmatpush.msra.mxu0 %v3199
    %3310 = vmatpush.msra.mxu0 %v3197
    %3311 = vmatpush.msra.mxu0 %v3195
    %3312 = vmatpush.msra.mxu0 %v3193
    %3313 = vmatpush.msra.mxu0 %v3191
    %3314 = vmatpush.msra.mxu0 %v3189
    %3315 = vmatpush.msra.mxu0 %v3187
    %3316 = vmatpush.msra.mxu0 %v3185
    %3317 = vmatmul.f32.gmra.mxu0 %v240
    %v3318 = vpop.f32.mrf.mxu0
    %v3319 = vadd.f32 %v3279, %v3318
    %3320 = vdwg.mxu0
    %v3322 = vperm.slane %v3232, 0
    %v3323 = vperm.slane %v3232, 1
    %v3326 = vadd.f32 %v3299, %v3322
    %v3327 = vadd.f32 %v3319, %v3323
    %v3328 = vsub.f32 0.0, %v3326
    %v3329 = vmul.f32 %v3328, 1.442695
    %v3330 = vpow.pop %v3329
    %v3331 = vadd.f32 %v3330, 1.0
    %v3332 = vrcp.pop %v3331
    %v3333 = vmul.f32 %v3331, %v3332
    %v3334 = vsub.f32 1.0, %v3333
    %v3335 = vmul.f32 %v3332, %v3334
    %v3336 = vadd.f32 %v3332, %v3335
    %vm3337 = vweird.f32 %v3331
    %vm3338 = vweird.f32 %v3332
    %vm3339 = vmor %vm3337, %vm3338
    %v3340 = vsel %vm3339, %v3332, %v3336
    %v3341 = vand.u32 2147483647, %v3331
    %vm3342 = vcmp.eq.f32.partialorder %v3341, 8.507059e+37
    %v3343 = vand.u32 %v3331, 2147483648
    %v3344 = vor.u32 1.1754944e-38, %v3343
    %v3345 = vsel %vm3342, %v3344, %v3340
    %v3346 = vmul.f32 1.0, %v3345
    %v3347 = vtanh.pop %v3327
    %v3348 = vsub.f32 0.0, %v3327
    %v3349 = vmul.f32 %v3348, 1.442695
    %v3350 = vpow.pop %v3349
    %v3351 = vadd.f32 %v3350, 1.0
    %v3352 = vrcp.pop %v3351
    %v3353 = vmul.f32 %v3351, %v3352
    %v3354 = vsub.f32 1.0, %v3353
    %v3355 = vmul.f32 %v3352, %v3354
    %v3356 = vadd.f32 %v3352, %v3355
    %vm3357 = vweird.f32 %v3351
    %vm3358 = vweird.f32 %v3352
    %vm3359 = vmor %vm3357, %vm3358
    %v3360 = vsel %vm3359, %v3352, %v3356
    %v3361 = vand.u32 2147483647, %v3351
    %vm3362 = vcmp.eq.f32.partialorder %v3361, 8.507059e+37
    %v3363 = vand.u32 %v3351, 2147483648
    %v3364 = vor.u32 1.1754944e-38, %v3363
    %v3365 = vsel %vm3362, %v3364, %v3360
    %v3366 = vmul.f32 1.0, %v3365
    %v3369 = vrot.slane %v2983, 7
    %v3370 = vsel %vm2914, %v3369, %v2982
    %v3372 = vmul.f32 %v3346, %v3370
    %v3373 = vmul.f32 %v3346, %v3347
    %3375 = vrot.lane.b32.xlu0 %v3373, 64
    %v3376 = vpop.permute.xlu0 %3375
    %v3378 = vadd.f32 %v3372, %v3376
    %v3379 = vtanh.pop %v3378
    %v3380 = vmul.f32 %v3366, %v3379
    %v3381 = vld [vmem:[%s19] sm:$0xff]
    %v3382 = vld [vmem:[%s19 + $0x8] sm:$0xff]
    %v3383 = vld [vmem:[%s19 + $0x10] sm:$0xff]
    %v3384 = vld [vmem:[%s19 + $0x18] sm:$0xff]
    %v3385 = vld [vmem:[%s19 + $0x20] sm:$0xff]
    %v3386 = vld [vmem:[%s19 + $0x28] sm:$0xff]
    %v3387 = vld [vmem:[%s19 + $0x30] sm:$0xff]
    %v3388 = vld [vmem:[%s19 + $0x38] sm:$0xff]
    %v3389 = vld [vmem:[%s20] sm:$0x1]
    %v3391 = vperm.slane %v3389, 0
    %3394 = vrot.lane.b32.xlu0 %v3380, 64
    %v3395 = vpop.permute.xlu0 %3394
    %v3396 = vsel %vm291, %v3395, 0
    %3398 = vmatpush.msra.mxu0 0.0
    %3399 = vmatpush.msra.mxu0 0.0
    %3400 = vmatpush.msra.mxu0 0.0
    %3401 = vmatpush.msra.mxu0 0.0
    %3402 = vmatpush.msra.mxu0 0.0
    %3403 = vmatpush.msra.mxu0 0.0
    %3404 = vmatpush.msra.mxu0 0.0
    %3405 = vmatpush.msra.mxu0 0.0
    %3406 = vmatpush.msra.mxu0 %v3388
    %3407 = vmatpush.msra.mxu0 %v3387
    %3408 = vmatpush.msra.mxu0 %v3386
    %3409 = vmatpush.msra.mxu0 %v3385
    %3410 = vmatpush.msra.mxu0 %v3384
    %3411 = vmatpush.msra.mxu0 %v3383
    %3412 = vmatpush.msra.mxu0 %v3382
    %3413 = vmatpush.msra.mxu0 %v3381
    %3414 = vmatmul.f32.gmra.mxu0 %v3396
    %v3415 = vpop.f32.mrf.mxu0
    %v3416 = vadd.f32 %v3391, %v3415
    %3417 = vdwg.mxu0
    %vm3418 = vcmask 74752
    %3419 = vst.msk [vmem:[#allocation17] sm:$0x3] %vm3418, %v3416
    // Predicated region
    $region122: #{spectral_forward.1} parent=1 // pred_check
      _
    $region123: #{spectral_forward.1} parent=1 // pred_check_branch
      %3421 = sbr.rel (0) target = $region125
    $region124: #{spectral_forward.1} parent=1 // pred_region
      %3423 = vsyncadd [#allocation4], 0
      %s3425 = sshll.u32 [#allocation17], 4
      %s3426 = int_to_ptr.vmem [resolvable:$true] %s3425
      %s3427 = sshll.u32 %s21, 4
      %s3428 = int_to_ptr.hbm [resolvable:$true] %s3427
      %3430 = dma.vmem_to_hbm [thread:$0]  %s3426, 32, %s3428, [#allocation4]
    $region125: #{spectral_forward.1} parent=1 // pred_fallthru
      _
    // Predicated region
    $region126: #{spectral_forward.1} parent=1 // pred_check
      _
    $region127: #{spectral_forward.1} parent=1 // pred_check_branch
      %3432 = sbr.rel (0) target = $region129
    $region128: #{spectral_forward.1} parent=1 // pred_region
      %3434 = dma.done [#allocation4], 32
    $region129: #{spectral_forward.1} parent=1 // pred_fallthru
      _
    %3435 = vsyncpa [#allocation3], 1
    %3436 = vsyncpa [#allocation6], 1
    %3437 = vsyncpa [#allocation9], 1
    %3438 = vsyncpa [#allocation12], 1
    %3439 = vsyncpa [#allocation15], 1
    %3440 = vsyncpa [#allocation4], 1

</llo_original>
